<compile_context>
chip_gen: v7x
topology: tpu7x:2x2x1
jax: 0.10.0
libtpu: 0.0.40
codegen_flags: <defaults>
</compile_context>

<pallas_src>
import functools

import jax
import jax.numpy as jnp
from jax.experimental import pallas as pl
from jax.experimental.pallas import tpu as pltpu

B = 2                       # batch
C, H, W = 256, 7, 7         # base output feature map (from fc in_features)
K = C * H * W               # 12544
N_FEAT = 256                # feature_dim
TK = 6272                   # K tile: 12544 = 2 * 6272, 6272 % 128 == 0
TN = 128                    # N tile: lane-dense output blocks, 2 blocks
DROP_P = 0.5


def _hynet_kernel(bits_ref, x_ref, w_ref, b_ref, o_ref, *, training):
    """One (N-tile, K-tile) step of: out = dropout(x) @ W + b."""
    k = pl.program_id(1)

    @pl.when(k == 0)
    def _():
        o_ref[...] = jnp.zeros_like(o_ref)

    x = x_ref[...]
    if training:
        # Inverted dropout, p=0.5: keep with prob 0.5, scale kept values by 2.
        keep = bits_ref[...] < jnp.uint32(1 << 31)
        x = jnp.where(keep, x * 2.0, 0.0).astype(x_ref.dtype)

    # bf16 x bf16 -> f32 accumulation on the MXU, accumulated in the resident
    # f32 output block.
    o_ref[...] += jnp.dot(x, w_ref[...], preferred_element_type=jnp.float32)

    @pl.when(k == pl.num_programs(1) - 1)
    def _():
        o_ref[...] += b_ref[...]


def hynet_forward(x_nchw, w_t, bias, drop_key, *, training=True):
    """x_nchw: (B, 256, 7, 7) f32; w_t: (K, N) (cast to bf16); bias: (1, N) f32."""
    b = x_nchw.shape[0]
    x_flat = x_nchw.reshape(b, -1).astype(jnp.bfloat16)      # (B, K)
    w_bf16 = w_t.astype(jnp.bfloat16)                        # (K, N)
    bias_f32 = bias.astype(jnp.float32)                      # (1, N)

    if training:
        bits = jax.random.bits(drop_key, (b, K), dtype=jnp.uint32)
    else:
        bits = jnp.zeros((b, K), dtype=jnp.uint32)           # unused in eval

    kernel = functools.partial(_hynet_kernel, training=training)
    grid = (N_FEAT // TN, K // TK)                           # (2, 2), K last

    cost = pl.CostEstimate(
        flops=2 * b * K * N_FEAT,
        transcendentals=0,
        bytes_accessed=(K * N_FEAT * 2          # W (bf16)
                        + b * K * 2             # x (bf16)
                        + b * K * 4             # dropout bits (u32)
                        + N_FEAT * 4            # bias
                        + b * N_FEAT * 4),      # out
    )

    return pl.pallas_call(
        kernel,
        out_shape=jax.ShapeDtypeStruct((b, N_FEAT), jnp.float32),
        grid_spec=pltpu.PrefetchScalarGridSpec(
            num_scalar_prefetch=0,
            grid=grid,
            in_specs=[
                pl.BlockSpec((b, TK), lambda j, k: (0, k)),        # bits
                pl.BlockSpec((b, TK), lambda j, k: (0, k)),        # x
                pl.BlockSpec((TK, TN), lambda j, k: (k, j)),       # W
                pl.BlockSpec((1, TN), lambda j, k: (0, j)),        # bias
            ],
            out_specs=pl.BlockSpec((b, TN), lambda j, k: (0, j)),  # out (accumulator)
        ),
        compiler_params=pltpu.CompilerParams(
            dimension_semantics=("parallel", "arbitrary"),
            vmem_limit_bytes=32 * 1024 * 1024,
        ),
        cost_estimate=cost,
    )(bits, x_flat, w_bf16, bias_f32)


if __name__ == "__main__":
    key = jax.random.PRNGKey(0)
    kx, kw, kb, kdrop = jax.random.split(key, 4)

    # Deterministic synthetic parameters (shapes from nn.Linear(256*7*7, 256)).
    x = jax.random.normal(kx, (B, C, H, W), dtype=jnp.float32)
    w = jax.random.normal(kw, (N_FEAT, K), dtype=jnp.float32) * (1.0 / jnp.sqrt(K))
    bias = jax.random.normal(kb, (1, N_FEAT), dtype=jnp.float32) * 0.01
    w_t = w.T.astype(jnp.bfloat16)                            # (K, N) bf16 weights

    x_flat_bf16 = x.reshape(B, -1).astype(jnp.bfloat16)

    # Eval mode (dropout = identity): check matmul + bias against a pure-JAX ref.
    out_eval = jax.block_until_ready(
        hynet_forward(x, w_t, bias, kdrop, training=False))
    ref_eval = jnp.dot(x_flat_bf16, w_t, preferred_element_type=jnp.float32) + bias
    assert out_eval.shape == (B, N_FEAT)
    assert jnp.allclose(out_eval, ref_eval, atol=1e-2, rtol=1e-2), "eval-mode mismatch"

    # Training mode: the dropout mask is reproducible from the same key, so the
    # masked path is validated against a pure-JAX reference too.
    out_train = jax.block_until_ready(
        hynet_forward(x, w_t, bias, kdrop, training=True))
    bits_ref = jax.random.bits(kdrop, (B, K), dtype=jnp.uint32)
    keep_ref = bits_ref < jnp.uint32(1 << 31)
    x_drop = jnp.where(keep_ref, x_flat_bf16 * 2.0, 0.0).astype(jnp.bfloat16)
    ref_train = jnp.dot(x_drop, w_t, preferred_element_type=jnp.float32) + bias
    assert out_train.shape == (B, N_FEAT)
    assert jnp.allclose(out_train, ref_train, atol=1e-2, rtol=1e-2), "train-mode mismatch"

    print("KERNEL_OK")
</pallas_src>

<mosaic_0001>
module attributes {stable_mosaic.version = 11 : i64} {
  func.func @_hynet_kernel(%arg0: i32, %arg1: i32, %arg2: memref<2x6272xi32, #tpu.memory_space<vmem>>, %arg3: memref<2x6272xbf16, #tpu.memory_space<vmem>>, %arg4: memref<6272x128xbf16, #tpu.memory_space<vmem>>, %arg5: memref<1x128xf32, #tpu.memory_space<vmem>>, %arg6: memref<2x128xf32, #tpu.memory_space<vmem>>) attributes {dimension_semantics = [#tpu.dimension_semantics<parallel>, #tpu.dimension_semantics<arbitrary>], iteration_bounds = array<i64: 2, 2>, scalar_prefetch = 0 : i64, scratch_operands = 0 : i64, tpu.core_type = #tpu.core_type<tc>, window_params = [{transform_indices = @transform_0, window_bounds = array<i64: 2, 6272>}, {transform_indices = @transform_1, window_bounds = array<i64: 2, 6272>}, {transform_indices = @transform_2, window_bounds = array<i64: 6272, 128>}, {transform_indices = @transform_3, window_bounds = array<i64: 1, 128>}, {transform_indices = @transform_4, window_bounds = array<i64: 2, 128>}]} {
    %c0_i32 = arith.constant 0 : i32
    %0 = arith.cmpi eq, %arg1, %c0_i32 : i32
    %1 = arith.extui %0 : i1 to i32
    %c0_i32_0 = arith.constant 0 : i32
    %2 = arith.cmpi ne, %1, %c0_i32_0 : i32
    scf.if %2 {
      %cst_9 = arith.constant 0.000000e+00 : f32
      %12 = vector.broadcast %cst_9 : f32 to vector<2x128xf32>
      %c0_10 = arith.constant 0 : index
      %c0_11 = arith.constant 0 : index
      %13 = vector.load %arg6[%c0_10, %c0_11] : memref<2x128xf32, #tpu.memory_space<vmem>>, vector<2x128xf32>
      tpu.vector_store %arg6[%c0_10, %c0_11], %12 {strides = array<i32>} : memref<2x128xf32, #tpu.memory_space<vmem>>, vector<2x128xf32>,
    } else {
    }
    %c0 = arith.constant 0 : index
    %c0_1 = arith.constant 0 : index
    %3 = vector.load %arg3[%c0, %c0_1] : memref<2x6272xbf16, #tpu.memory_space<vmem>>, vector<2x6272xbf16>
    %c0_2 = arith.constant 0 : index
    %c0_3 = arith.constant 0 : index
    %4 = vector.load %arg6[%c0_2, %c0_3] : memref<2x128xf32, #tpu.memory_space<vmem>>, vector<2x128xf32>
    %c0_4 = arith.constant 0 : index
    %c0_5 = arith.constant 0 : index
    %5 = vector.load %arg4[%c0_4, %c0_5] : memref<6272x128xbf16, #tpu.memory_space<vmem>>, vector<6272x128xbf16>
    %cst = arith.constant dense<0.000000e+00> : vector<2x128xf32>
    %6 = tpu.matmul %3, %5, %cst {dimension_numbers = #tpu.dot_dimension_numbers<[1], [0], [0], [1], [0, 0, 1, 1], [], []>} : vector<2x6272xbf16>, vector<6272x128xbf16>, vector<2x128xf32> -> vector<2x128xf32>
    %7 = arith.addf %4, %6 : vector<2x128xf32>
    %c0_6 = arith.constant 0 : index
    %c0_7 = arith.constant 0 : index
    %8 = vector.load %arg6[%c0_6, %c0_7] : memref<2x128xf32, #tpu.memory_space<vmem>>, vector<2x128xf32>
    tpu.vector_store %arg6[%c0_6, %c0_7], %7 {strides = array<i32>} : memref<2x128xf32, #tpu.memory_space<vmem>>, vector<2x128xf32>,
    %c1_i32 = arith.constant 1 : i32
    %9 = arith.cmpi eq, %arg1, %c1_i32 : i32
    %10 = arith.extui %9 : i1 to i32
    %c0_i32_8 = arith.constant 0 : i32
    %11 = arith.cmpi ne, %10, %c0_i32_8 : i32
    scf.if %11 {
      %c0_9 = arith.constant 0 : index
      %c0_10 = arith.constant 0 : index
      %12 = vector.load %arg6[%c0_9, %c0_10] : memref<2x128xf32, #tpu.memory_space<vmem>>, vector<2x128xf32>
      %c0_11 = arith.constant 0 : index
      %c0_12 = arith.constant 0 : index
      %13 = vector.load %arg5[%c0_11, %c0_12] : memref<1x128xf32, #tpu.memory_space<vmem>>, vector<1x128xf32>
      %14 = vector.broadcast %13 : vector<1x128xf32> to vector<2x128xf32>
      %15 = arith.addf %12, %14 : vector<2x128xf32>
      %c0_13 = arith.constant 0 : index
      %c0_14 = arith.constant 0 : index
      %16 = vector.load %arg6[%c0_13, %c0_14] : memref<2x128xf32, #tpu.memory_space<vmem>>, vector<2x128xf32>
      tpu.vector_store %arg6[%c0_13, %c0_14], %15 {strides = array<i32>} : memref<2x128xf32, #tpu.memory_space<vmem>>, vector<2x128xf32>,
    } else {
    }
    return
  }
  func.func @transform_0(%arg0: i32, %arg1: i32) -> (i32, i32) {
    %c0_i32 = arith.constant 0 : i32
    %c0_i32_0 = arith.constant 0 : i32
    return %c0_i32, %arg1 : i32, i32
  }
  func.func @transform_1(%arg0: i32, %arg1: i32) -> (i32, i32) {
    %c0_i32 = arith.constant 0 : i32
    %c0_i32_0 = arith.constant 0 : i32
    return %c0_i32, %arg1 : i32, i32
  }
  func.func @transform_2(%arg0: i32, %arg1: i32) -> (i32, i32) {
    %c0_i32 = arith.constant 0 : i32
    return %arg1, %arg0 : i32, i32
  }
  func.func @transform_3(%arg0: i32, %arg1: i32) -> (i32, i32) {
    %c0_i32 = arith.constant 0 : i32
    %c0_i32_0 = arith.constant 0 : i32
    return %c0_i32, %arg0 : i32, i32
  }
  func.func @transform_4(%arg0: i32, %arg1: i32) -> (i32, i32) {
    %c0_i32 = arith.constant 0 : i32
    %c0_i32_0 = arith.constant 0 : i32
    return %c0_i32, %arg0 : i32, i32
  }
}

</mosaic_0001>

<llo_original>
// kernel: tpu_custom_call.1
$region0: #{tpu_custom_call.1}
  #allocation0 [shape = 'u32[]', space=smem, size = 0x4, offset = 0x4, fixed_abs, tag = 'smem constant byte address 0x4 - core index']
  #allocation1 [shape = 'u32[144,128]{1,0:T(1,128)}', space=vmem, size = 0x12000, scoped, tag = 'internal scratch']
  %s0 = inlined_call_operand.hbm [shape: u32[2,12544], index: 0, kind: input, shape index: {}]
  %s1 = inlined_call_operand.hbm [shape: bf16[2,12544], index: 1, kind: input, shape index: {}]
  %s2 = inlined_call_operand.hbm [shape: bf16[12544,256], index: 2, kind: input, shape index: {}]
  %s3 = inlined_call_operand.hbm [shape: f32[1,256], index: 3, kind: input, shape index: {}]
  %s4 = inlined_call_operand.hbm [shape: f32[2,256], index: 4, kind: output, shape index: {}]
  %s5 = sld [smem:[#allocation0]]
  $region73: #{tpu_custom_call.1} parent=0
    _
  %s7 = ssub.s32 1, %s5
  %s8 = scalar_select 0, %s7, %s5
  $region1: #{tpu_custom_call.1} parent=0
    #allocation2 [shape = 'u8[100352]{0}', space=vmem, size = 0x18800, scoped, tag = 'input window, operand 0']
    #allocation3 [shape = 's32[2]{0}', space=sflag, size = 0x8, scoped, tag = 'scoped memory for tpu_custom_call.1']
    #allocation4 [shape = 's32[2]{0}', space=sflag, size = 0x8, scoped, tag = 'scoped memory for tpu_custom_call.1']
    #allocation5 [shape = 'u8[50176]{0}', space=vmem, size = 0xc400, scoped, tag = 'input window, operand 1']
    #allocation6 [shape = 's32[2]{0}', space=sflag, size = 0x8, scoped, tag = 'scoped memory for tpu_custom_call.1']
    #allocation7 [shape = 'u8[3211264]{0}', space=vmem, size = 0x310000, scoped, tag = 'input window, operand 2']
    #allocation8 [shape = 'u8[1024]{0}', space=vmem, size = 0x400, scoped, tag = 'input window, operand 3']
    #allocation9 [shape = 's32[2]{0}', space=sflag, size = 0x8, scoped, tag = 'scoped memory for tpu_custom_call.1']
    #allocation10 [shape = 'u8[2048]{0}', space=vmem, size = 0x800, scoped, tag = 'output window, operand 0']
    %9 = vsyncpa [#allocation3], 0
    %s10 = scalar_lea.sflag [#allocation3], 1
    %11 = vsyncpa %s10, 0
    %12 = vsyncpa [#allocation6], 0
    %s13 = scalar_lea.sflag [#allocation6], 1
    %14 = vsyncpa %s13, 0
    %15 = vsyncpa [#allocation9], 0
    %s16 = scalar_lea.sflag [#allocation9], 1
    %17 = vsyncpa %s16, 0
    %18 = vsyncpa [#allocation4], 0
    %s19 = scalar_lea.sflag [#allocation4], 1
    %20 = vsyncpa %s19, 0
    loop: start=0, step=1, limit=6
    $region2: #{tpu_custom_call.1} parent=1 // loop_pre_header
      _
    $region3: #{tpu_custom_call.1} parent=1 // loop_header
      %s22 = sphi 0, %s26
      %p23 = scmp.ge.s32.totalorder %s22, 6
      %s29 = sphi 0, %s41
      %s30 = sphi 0, %s37
      %s31 = sphi 0, %s29
      %s32 = sphi 0, %s30
      %s33 = sphi 0, %s31
      %s34 = sphi 0, %s32
      %s44 = sphi 0, %s46
      %s47 = sphi 0, %s44
      %s48 = sphi 0, %s47
      %s64 = sphi 0, %s48
      %s70 = sphi 0, %s72
      %s73 = sphi 0, %s70
      %s74 = sphi 0, %s73
      %s90 = sphi 0, %s74
      %s98 = sphi 0, %s100
      %s101 = sphi 0, %s98
      %s102 = sphi 0, %s101
      %s118 = sphi 0, %s102
      %s124 = sphi 0, %s126
      %s127 = sphi 0, %s124
      %s128 = sphi 0, %s127
      %s144 = sphi 0, %s128
      %s150 = sphi 0, %s152
      %s153 = sphi 0, %s150
      %s154 = sphi 0, %s153
      %s170 = sphi 0, %s154
    $region4: #{tpu_custom_call.1} parent=1 // loop_header_branch
      %25 = sbr.rel (%p23) target = $region8
    $region5: #{tpu_custom_call.1} parent=1 // loop_body
      %s27 = ssub.s32 %s22, 1
      %s28 = ssub.s32 %s22, 2
      %s35 = sadd.s32 1, %s30
      %p36 = scmp.ge.s32.totalorder %s35, 2
      %s37 = scalar_select %p36, 0, %s35
      %s38 = sadd.s32 1, %s29
      %s39 = scalar_select %p36, %s38, %s29
      %p40 = scmp.ge.s32.totalorder %s39, 2
      %s41 = scalar_select %p40, 0, %s39
      %s42 = ssub.s32 %s30, %s37
      %p43 = scmp.eq.s32.totalorder %s42, 0
      %s45 = sadd.s32 %s44, 1
      %s46 = scalar_select %p43, %s44, %s45
      %p49 = pneg %p43
      %p50 = scmp.eq.s32.totalorder %s22, 3
      %p51 = por %p49, %p50
      %p52 = scmp.ne.s32.totalorder %s44, %s47
      %p53 = scmp.eq.s32.totalorder %s22, 0
      %p54 = por %p52, %p53
      %p55 = scmp.ne.s32.totalorder %s44, %s47
      %p56 = scmp.eq.s32.totalorder %s27, 3
      %p57 = por %p55, %p56
      %p58 = scmp.ne.s32.totalorder %s47, %s48
      %p59 = scmp.eq.s32.totalorder %s27, 0
      %p60 = por %p58, %p59
      %p61 = scmp.ne.s32.totalorder %s47, %s48
      %p62 = scmp.eq.s32.totalorder %s28, 3
      %p63 = por %p61, %p62
      %p65 = scmp.ne.s32.totalorder %s48, %s64
      %p66 = scmp.eq.s32.totalorder %s28, 0
      %p67 = por %p65, %p66
      %s68 = ssub.s32 %s30, %s37
      %p69 = scmp.eq.s32.totalorder %s68, 0
      %s71 = sadd.s32 %s70, 1
      %s72 = scalar_select %p69, %s70, %s71
      %p75 = pneg %p69
      %p76 = scmp.eq.s32.totalorder %s22, 3
      %p77 = por %p75, %p76
      %p78 = scmp.ne.s32.totalorder %s70, %s73
      %p79 = scmp.eq.s32.totalorder %s22, 0
      %p80 = por %p78, %p79
      %p81 = scmp.ne.s32.totalorder %s70, %s73
      %p82 = scmp.eq.s32.totalorder %s27, 3
      %p83 = por %p81, %p82
      %p84 = scmp.ne.s32.totalorder %s73, %s74
      %p85 = scmp.eq.s32.totalorder %s27, 0
      %p86 = por %p84, %p85
      %p87 = scmp.ne.s32.totalorder %s73, %s74
      %p88 = scmp.eq.s32.totalorder %s28, 3
      %p89 = por %p87, %p88
      %p91 = scmp.ne.s32.totalorder %s74, %s90
      %p92 = scmp.eq.s32.totalorder %s28, 0
      %p93 = por %p91, %p92
      %s94 = ssub.s32 %s30, %s37
      %s95 = ssub.s32 %s29, %s41
      %s96 = sor.u32 %s94, %s95
      %p97 = scmp.eq.s32.totalorder %s96, 0
      %s99 = sadd.s32 %s98, 1
      %s100 = scalar_select %p97, %s98, %s99
      %p103 = pneg %p97
      %p104 = scmp.eq.s32.totalorder %s22, 3
      %p105 = por %p103, %p104
      %p106 = scmp.ne.s32.totalorder %s98, %s101
      %p107 = scmp.eq.s32.totalorder %s22, 0
      %p108 = por %p106, %p107
      %p109 = scmp.ne.s32.totalorder %s98, %s101
      %p110 = scmp.eq.s32.totalorder %s27, 3
      %p111 = por %p109, %p110
      %p112 = scmp.ne.s32.totalorder %s101, %s102
      %p113 = scmp.eq.s32.totalorder %s27, 0
      %p114 = por %p112, %p113
      %p115 = scmp.ne.s32.totalorder %s101, %s102
      %p116 = scmp.eq.s32.totalorder %s28, 3
      %p117 = por %p115, %p116
      %p119 = scmp.ne.s32.totalorder %s102, %s118
      %p120 = scmp.eq.s32.totalorder %s28, 0
      %p121 = por %p119, %p120
      %s122 = ssub.s32 %s29, %s41
      %p123 = scmp.eq.s32.totalorder %s122, 0
      %s125 = sadd.s32 %s124, 1
      %s126 = scalar_select %p123, %s124, %s125
      %p129 = pneg %p123
      %p130 = scmp.eq.s32.totalorder %s22, 3
      %p131 = por %p129, %p130
      %p132 = scmp.ne.s32.totalorder %s124, %s127
      %p133 = scmp.eq.s32.totalorder %s22, 0
      %p134 = por %p132, %p133
      %p135 = scmp.ne.s32.totalorder %s124, %s127
      %p136 = scmp.eq.s32.totalorder %s27, 3
      %p137 = por %p135, %p136
      %p138 = scmp.ne.s32.totalorder %s127, %s128
      %p139 = scmp.eq.s32.totalorder %s27, 0
      %p140 = por %p138, %p139
      %p141 = scmp.ne.s32.totalorder %s127, %s128
      %p142 = scmp.eq.s32.totalorder %s28, 3
      %p143 = por %p141, %p142
      %p145 = scmp.ne.s32.totalorder %s128, %s144
      %p146 = scmp.eq.s32.totalorder %s28, 0
      %p147 = por %p145, %p146
      %s148 = ssub.s32 %s29, %s41
      %p149 = scmp.eq.s32.totalorder %s148, 0
      %s151 = sadd.s32 %s150, 1
      %s152 = scalar_select %p149, %s150, %s151
      %p155 = pneg %p149
      %p156 = scmp.eq.s32.totalorder %s22, 3
      %p157 = por %p155, %p156
      %p158 = scmp.ne.s32.totalorder %s150, %s153
      %p159 = scmp.eq.s32.totalorder %s22, 0
      %p160 = por %p158, %p159
      %p161 = scmp.ne.s32.totalorder %s150, %s153
      %p162 = scmp.eq.s32.totalorder %s27, 3
      %p163 = por %p161, %p162
      %p164 = scmp.ne.s32.totalorder %s153, %s154
      %p165 = scmp.eq.s32.totalorder %s27, 0
      %p166 = por %p164, %p165
      %p167 = scmp.ne.s32.totalorder %s153, %s154
      %p168 = scmp.eq.s32.totalorder %s28, 3
      %p169 = por %p167, %p168
      %p171 = scmp.ne.s32.totalorder %s154, %s170
      %p172 = scmp.eq.s32.totalorder %s28, 0
      %p173 = por %p171, %p172
      %p174 = scmp.le.s32.totalorder 1, %s22
      %p175 = scmp.lt.s32.totalorder %s22, 5
      %p176 = pnand %p174, %p175
      %p177 = pneg %p176
      // Predicated region
      $region9: #{tpu_custom_call.1} parent=5 // pred_check
        _
      $region10: #{tpu_custom_call.1} parent=5 // pred_check_branch
        %179 = sbr.rel (%p176) target = $region12
      $region11: #{tpu_custom_call.1} parent=5 // pred_region
        %s180 = ssub.s32 %s22, 1
      $region12: #{tpu_custom_call.1} parent=5 // pred_fallthru
        _
      %p181 = scmp.lt.s32.totalorder %s22, 4
      // Predicated region
      $region13: #{tpu_custom_call.1} parent=5 // pred_check
        %p182 = pneg %p181
      $region14: #{tpu_custom_call.1} parent=5 // pred_check_branch
        %184 = sbr.rel (%p182) target = $region16
      $region15: #{tpu_custom_call.1} parent=5 // pred_region
        // Predicated region
        $region17: #{tpu_custom_call.1} parent=15 // pred_check
          %p185 = pneg %p54
        $region18: #{tpu_custom_call.1} parent=15 // pred_check_branch
          %187 = sbr.rel (%p185) target = $region20
        $region19: #{tpu_custom_call.1} parent=15 // pred_region
          %s188 = sand.u32 %s44, 1
          %s189 = scalar_lea.sflag [#allocation3], %s188
          %s190 = sand.u32 %s44, 1
          %s191 = smul.addr %s190, 98
          %s192 = scalar_lea.vmem [#allocation2], %s191
          %s193 = smul.u32 49, %s30
          %s195 = ssub.s32 1568, 1568
          %196 = vsyncadd %s189, %s195
          %s197 = smul.addr %s193, 32
          %s198 = scalar_lea.hbm %s0, %s197
          %s200 = sshll.u32 %s192, 4
          %s201 = int_to_ptr.vmem [resolvable:$true] %s200
          %203 = dma.hbm_to_vmem [thread:$0]  %s198, 1568, %s201, %s189
        $region20: #{tpu_custom_call.1} parent=15 // pred_fallthru
          _
        // Predicated region
        $region21: #{tpu_custom_call.1} parent=15 // pred_check
          %p204 = pneg %p80
        $region22: #{tpu_custom_call.1} parent=15 // pred_check_branch
          %206 = sbr.rel (%p204) target = $region24
        $region23: #{tpu_custom_call.1} parent=15 // pred_region
          %s207 = sand.u32 %s22, 1
          %s208 = scalar_lea.sflag [#allocation6], %s207
          %s209 = sand.u32 %s70, 1
          %s210 = smul.addr %s209, 49
          %s211 = scalar_lea.vmem [#allocation5], %s210
          %s212 = smul.u32 49, %s30
          %s214 = ssub.s32 784, 784
          %215 = vsyncadd %s208, %s214
          %s216 = smul.addr %s212, 16
          %s217 = scalar_lea.hbm %s1, %s216
          %s219 = sshll.u32 %s211, 4
          %s220 = int_to_ptr.vmem [resolvable:$true] %s219
          %222 = dma.hbm_to_vmem [thread:$0]  %s217, 784, %s220, %s208
        $region24: #{tpu_custom_call.1} parent=15 // pred_fallthru
          _
        // Predicated region
        $region25: #{tpu_custom_call.1} parent=15 // pred_check
          %p223 = pneg %p108
        $region26: #{tpu_custom_call.1} parent=15 // pred_check_branch
          %225 = sbr.rel (%p223) target = $region28
        $region27: #{tpu_custom_call.1} parent=15 // pred_region
          %s226 = sand.u32 %s22, 1
          %s227 = scalar_lea.sflag [#allocation6], %s226
          %s228 = sand.u32 %s98, 1
          %s229 = smul.addr %s228, 3136
          %s230 = scalar_lea.vmem [#allocation7], %s229
          %s231 = smul.u32 784, %s30
          %s233 = ssub.s32 50176, 50176
          %234 = vsyncadd %s227, %s233
          %s235 = smul.addr %s231, 2
          %s236 = sadd.s32 %s29, %s235
          %s237 = smul.addr %s236, 64
          %s238 = scalar_lea.hbm %s2, %s237
          %s239 = sshll.u32 %s230, 4
          %s240 = int_to_ptr.vmem [resolvable:$true] %s239
          %245 = dma.hbm_to_vmem [thread:$0]  %s238, 50176, %s240, %s227, 128, 64, 4
        $region28: #{tpu_custom_call.1} parent=15 // pred_fallthru
          _
        // Predicated region
        $region29: #{tpu_custom_call.1} parent=15 // pred_check
          %p246 = pneg %p134
        $region30: #{tpu_custom_call.1} parent=15 // pred_check_branch
          %248 = sbr.rel (%p246) target = $region32
        $region31: #{tpu_custom_call.1} parent=15 // pred_region
          %s249 = sand.u32 %s124, 1
          %s250 = scalar_lea.sflag [#allocation9], %s249
          %s251 = sand.u32 %s124, 1
          %s252 = scalar_lea.vmem [#allocation8], %s251
          %s254 = ssub.s32 16, 16
          %255 = vsyncadd %s250, %s254
          %s256 = smul.addr %s29, 16
          %s257 = scalar_lea.hbm %s3, %s256
          %s259 = sshll.u32 %s252, 4
          %s260 = int_to_ptr.vmem [resolvable:$true] %s259
          %262 = dma.hbm_to_vmem [thread:$0]  %s257, 16, %s260, %s250
        $region32: #{tpu_custom_call.1} parent=15 // pred_fallthru
          _
      $region16: #{tpu_custom_call.1} parent=5 // pred_fallthru
        _
      %p263 = scmp.le.s32.totalorder 1, %s22
      %p264 = scmp.lt.s32.totalorder %s22, 5
      %p265 = pnand %p263, %p264
      %p266 = pneg %p265
      // Predicated region
      $region33: #{tpu_custom_call.1} parent=5 // pred_check
        _
      $region34: #{tpu_custom_call.1} parent=5 // pred_check_branch
        %268 = sbr.rel (%p265) target = $region36
      $region35: #{tpu_custom_call.1} parent=5 // pred_region
        %s269 = ssub.s32 %s22, 1
        %s270 = sand.u32 %s47, 1
        %s271 = scalar_lea.sflag [#allocation3], %s270
        %s272 = sand.u32 %s47, 1
        %s273 = smul.addr %s272, 98
        %s274 = scalar_lea.vmem [#allocation2], %s273
        // Predicated region
        $region37: #{tpu_custom_call.1} parent=35 // pred_check
          %p275 = pneg %p60
        $region38: #{tpu_custom_call.1} parent=35 // pred_check_branch
          %277 = sbr.rel (%p275) target = $region40
        $region39: #{tpu_custom_call.1} parent=35 // pred_region
          %278 = dma.done %s271, 1568
        $region40: #{tpu_custom_call.1} parent=35 // pred_fallthru
          _
        %s279 = sand.u32 %s27, 1
        %s280 = scalar_lea.sflag [#allocation6], %s279
        %s281 = sand.u32 %s73, 1
        %s282 = smul.addr %s281, 49
        %s283 = scalar_lea.vmem [#allocation5], %s282
        // Predicated region
        $region41: #{tpu_custom_call.1} parent=35 // pred_check
          %p284 = pneg %p86
        $region42: #{tpu_custom_call.1} parent=35 // pred_check_branch
          %286 = sbr.rel (%p284) target = $region44
        $region43: #{tpu_custom_call.1} parent=35 // pred_region
          %287 = dma.done %s280, 784
        $region44: #{tpu_custom_call.1} parent=35 // pred_fallthru
          _
        %s288 = sand.u32 %s27, 1
        %s289 = scalar_lea.sflag [#allocation6], %s288
        %s290 = sand.u32 %s101, 1
        %s291 = smul.addr %s290, 3136
        %s292 = scalar_lea.vmem [#allocation7], %s291
        // Predicated region
        $region45: #{tpu_custom_call.1} parent=35 // pred_check
          %p293 = pneg %p114
        $region46: #{tpu_custom_call.1} parent=35 // pred_check_branch
          %295 = sbr.rel (%p293) target = $region48
        $region47: #{tpu_custom_call.1} parent=35 // pred_region
          %296 = dma.done %s289, 50176
        $region48: #{tpu_custom_call.1} parent=35 // pred_fallthru
          _
        %s297 = sand.u32 %s127, 1
        %s298 = scalar_lea.sflag [#allocation9], %s297
        %s299 = sand.u32 %s127, 1
        %s300 = scalar_lea.vmem [#allocation8], %s299
        // Predicated region
        $region49: #{tpu_custom_call.1} parent=35 // pred_check
          %p301 = pneg %p140
        $region50: #{tpu_custom_call.1} parent=35 // pred_check_branch
          %303 = sbr.rel (%p301) target = $region52
        $region51: #{tpu_custom_call.1} parent=35 // pred_region
          %304 = dma.done %s298, 16
        $region52: #{tpu_custom_call.1} parent=35 // pred_fallthru
          _
        %s305 = sand.u32 %s47, 1
        %s306 = scalar_lea.sflag [#allocation3], %s305
        %s307 = sand.u32 %s47, 1
        %s308 = smul.addr %s307, 98
        %s309 = scalar_lea.vmem [#allocation2], %s308
        %p310 = pneg %p60
        %p311 = pneg %p57
        %s312 = sand.u32 %s27, 1
        %s313 = scalar_lea.sflag [#allocation6], %s312
        %s314 = sand.u32 %s73, 1
        %s315 = smul.addr %s314, 49
        %s316 = scalar_lea.vmem [#allocation5], %s315
        %p317 = pneg %p86
        %p318 = pneg %p83
        %s319 = sand.u32 %s27, 1
        %s320 = scalar_lea.sflag [#allocation6], %s319
        %s321 = sand.u32 %s101, 1
        %s322 = smul.addr %s321, 3136
        %s323 = scalar_lea.vmem [#allocation7], %s322
        %p324 = pneg %p114
        %p325 = pneg %p111
        %s326 = sand.u32 %s127, 1
        %s327 = scalar_lea.sflag [#allocation9], %s326
        %s328 = sand.u32 %s127, 1
        %s329 = scalar_lea.vmem [#allocation8], %s328
        %p330 = pneg %p140
        %p331 = pneg %p137
        %p332 = pneg %p166
        %p333 = pneg %p163
        %s334 = sand.u32 %s153, 1
        %s335 = scalar_lea.sflag [#allocation4], %s334
        %s336 = sand.u32 %s153, 1
        %s337 = smul.addr %s336, 2
        %s338 = scalar_lea.vmem [#allocation10], %s337
        %s339 = smul.u32 49, %s32
        %s340 = smul.u32 49, %s32
        %s341 = smul.u32 784, %s32
        %p343 = scmp.eq.s32.totalorder %s32, 0
        // Predicated region
        $region53: #{tpu_custom_call.1} parent=35 // pred_check
          %p344 = pneg %p343
        $region54: #{tpu_custom_call.1} parent=35 // pred_check_branch
          %346 = sbr.rel (%p344) target = $region56
        $region55: #{tpu_custom_call.1} parent=35 // pred_region
          %347 = vst [vmem:[%s338] sm:$0x3] 0.0
        $region56: #{tpu_custom_call.1} parent=35 // pred_fallthru
          _
        %v348 = vld [vmem:[%s283] sm:$0xff]
        %v349 = vld [vmem:[%s283 + $0x8] sm:$0xff]
        %v350 = vld [vmem:[%s283 + $0x10] sm:$0xff]
        %v351 = vld [vmem:[%s283 + $0x18] sm:$0xff]
        %v352 = vld [vmem:[%s283 + $0x20] sm:$0xff]
        %v353 = vld [vmem:[%s283 + $0x28] sm:$0xff]
        %v354 = vld [vmem:[%s283 + $0x30] sm:$0x1]
        %v355 = vld [vmem:[%s338] sm:$0x3]
        %v356 = vld [vmem:[%s292] sm:$0xf]
        %v357 = vld [vmem:[%s292 + $0x4] sm:$0xf]
        %v358 = vld [vmem:[%s292 + $0x8] sm:$0xf]
        %v359 = vld [vmem:[%s292 + $0xc] sm:$0xf]
        %v360 = vld [vmem:[%s292 + $0x10] sm:$0xf]
        %v361 = vld [vmem:[%s292 + $0x14] sm:$0xf]
        %v362 = vld [vmem:[%s292 + $0x18] sm:$0xf]
        %v363 = vld [vmem:[%s292 + $0x1c] sm:$0xf]
        %v364 = vld [vmem:[%s292 + $0x20] sm:$0xf]
        %v365 = vld [vmem:[%s292 + $0x24] sm:$0xf]
        %v366 = vld [vmem:[%s292 + $0x28] sm:$0xf]
        %v367 = vld [vmem:[%s292 + $0x2c] sm:$0xf]
        %v368 = vld [vmem:[%s292 + $0x30] sm:$0xf]
        %v369 = vld [vmem:[%s292 + $0x34] sm:$0xf]
        %v370 = vld [vmem:[%s292 + $0x38] sm:$0xf]
        %v371 = vld [vmem:[%s292 + $0x3c] sm:$0xf]
        %v372 = vld [vmem:[%s292 + $0x40] sm:$0xf]
        %v373 = vld [vmem:[%s292 + $0x44] sm:$0xf]
        %v374 = vld [vmem:[%s292 + $0x48] sm:$0xf]
        %v375 = vld [vmem:[%s292 + $0x4c] sm:$0xf]
        %v376 = vld [vmem:[%s292 + $0x50] sm:$0xf]
        %v377 = vld [vmem:[%s292 + $0x54] sm:$0xf]
        %v378 = vld [vmem:[%s292 + $0x58] sm:$0xf]
        %v379 = vld [vmem:[%s292 + $0x5c] sm:$0xf]
        %v380 = vld [vmem:[%s292 + $0x60] sm:$0xf]
        %v381 = vld [vmem:[%s292 + $0x64] sm:$0xf]
        %v382 = vld [vmem:[%s292 + $0x68] sm:$0xf]
        %v383 = vld [vmem:[%s292 + $0x6c] sm:$0xf]
        %v384 = vld [vmem:[%s292 + $0x70] sm:$0xf]
        %v385 = vld [vmem:[%s292 + $0x74] sm:$0xf]
        %v386 = vld [vmem:[%s292 + $0x78] sm:$0xf]
        %v387 = vld [vmem:[%s292 + $0x7c] sm:$0xf]
        %v388 = vld [vmem:[%s292 + $0x80] sm:$0xf]
        %v389 = vld [vmem:[%s292 + $0x84] sm:$0xf]
        %v390 = vld [vmem:[%s292 + $0x88] sm:$0xf]
        %v391 = vld [vmem:[%s292 + $0x8c] sm:$0xf]
        %v392 = vld [vmem:[%s292 + $0x90] sm:$0xf]
        %v393 = vld [vmem:[%s292 + $0x94] sm:$0xf]
        %v394 = vld [vmem:[%s292 + $0x98] sm:$0xf]
        %v395 = vld [vmem:[%s292 + $0x9c] sm:$0xf]
        %v396 = vld [vmem:[%s292 + $0xa0] sm:$0xf]
        %v397 = vld [vmem:[%s292 + $0xa4] sm:$0xf]
        %v398 = vld [vmem:[%s292 + $0xa8] sm:$0xf]
        %v399 = vld [vmem:[%s292 + $0xac] sm:$0xf]
        %v400 = vld [vmem:[%s292 + $0xb0] sm:$0xf]
        %v401 = vld [vmem:[%s292 + $0xb4] sm:$0xf]
        %v402 = vld [vmem:[%s292 + $0xb8] sm:$0xf]
        %v403 = vld [vmem:[%s292 + $0xbc] sm:$0xf]
        %v404 = vld [vmem:[%s292 + $0xc0] sm:$0xf]
        %v405 = vld [vmem:[%s292 + $0xc4] sm:$0xf]
        %v406 = vld [vmem:[%s292 + $0xc8] sm:$0xf]
        %v407 = vld [vmem:[%s292 + $0xcc] sm:$0xf]
        %v408 = vld [vmem:[%s292 + $0xd0] sm:$0xf]
        %v409 = vld [vmem:[%s292 + $0xd4] sm:$0xf]
        %v410 = vld [vmem:[%s292 + $0xd8] sm:$0xf]
        %v411 = vld [vmem:[%s292 + $0xdc] sm:$0xf]
        %v412 = vld [vmem:[%s292 + $0xe0] sm:$0xf]
        %v413 = vld [vmem:[%s292 + $0xe4] sm:$0xf]
        %v414 = vld [vmem:[%s292 + $0xe8] sm:$0xf]
        %v415 = vld [vmem:[%s292 + $0xec] sm:$0xf]
        %v416 = vld [vmem:[%s292 + $0xf0] sm:$0xf]
        %v417 = vld [vmem:[%s292 + $0xf4] sm:$0xf]
        %v418 = vld [vmem:[%s292 + $0xf8] sm:$0xf]
        %v419 = vld [vmem:[%s292 + $0xfc] sm:$0xf]
        %v420 = vld [vmem:[%s292 + $0x100] sm:$0xf]
        %v421 = vld [vmem:[%s292 + $0x104] sm:$0xf]
        %v422 = vld [vmem:[%s292 + $0x108] sm:$0xf]
        %v423 = vld [vmem:[%s292 + $0x10c] sm:$0xf]
        %v424 = vld [vmem:[%s292 + $0x110] sm:$0xf]
        %v425 = vld [vmem:[%s292 + $0x114] sm:$0xf]
        %v426 = vld [vmem:[%s292 + $0x118] sm:$0xf]
        %v427 = vld [vmem:[%s292 + $0x11c] sm:$0xf]
        %v428 = vld [vmem:[%s292 + $0x120] sm:$0xf]
        %v429 = vld [vmem:[%s292 + $0x124] sm:$0xf]
        %v430 = vld [vmem:[%s292 + $0x128] sm:$0xf]
        %v431 = vld [vmem:[%s292 + $0x12c] sm:$0xf]
        %v432 = vld [vmem:[%s292 + $0x130] sm:$0xf]
        %v433 = vld [vmem:[%s292 + $0x134] sm:$0xf]
        %v434 = vld [vmem:[%s292 + $0x138] sm:$0xf]
        %v435 = vld [vmem:[%s292 + $0x13c] sm:$0xf]
        %v436 = vld [vmem:[%s292 + $0x140] sm:$0xf]
        %v437 = vld [vmem:[%s292 + $0x144] sm:$0xf]
        %v438 = vld [vmem:[%s292 + $0x148] sm:$0xf]
        %v439 = vld [vmem:[%s292 + $0x14c] sm:$0xf]
        %v440 = vld [vmem:[%s292 + $0x150] sm:$0xf]
        %v441 = vld [vmem:[%s292 + $0x154] sm:$0xf]
        %v442 = vld [vmem:[%s292 + $0x158] sm:$0xf]
        %v443 = vld [vmem:[%s292 + $0x15c] sm:$0xf]
        %v444 = vld [vmem:[%s292 + $0x160] sm:$0xf]
        %v445 = vld [vmem:[%s292 + $0x164] sm:$0xf]
        %v446 = vld [vmem:[%s292 + $0x168] sm:$0xf]
        %v447 = vld [vmem:[%s292 + $0x16c] sm:$0xf]
        %v448 = vld [vmem:[%s292 + $0x170] sm:$0xf]
        %v449 = vld [vmem:[%s292 + $0x174] sm:$0xf]
        %v450 = vld [vmem:[%s292 + $0x178] sm:$0xf]
        %v451 = vld [vmem:[%s292 + $0x17c] sm:$0xf]
        %v452 = vld [vmem:[%s292 + $0x180] sm:$0xf]
        %v453 = vld [vmem:[%s292 + $0x184] sm:$0xf]
        %v454 = vld [vmem:[%s292 + $0x188] sm:$0xf]
        %v455 = vld [vmem:[%s292 + $0x18c] sm:$0xf]
        %v456 = vld [vmem:[%s292 + $0x190] sm:$0xf]
        %v457 = vld [vmem:[%s292 + $0x194] sm:$0xf]
        %v458 = vld [vmem:[%s292 + $0x198] sm:$0xf]
        %v459 = vld [vmem:[%s292 + $0x19c] sm:$0xf]
        %v460 = vld [vmem:[%s292 + $0x1a0] sm:$0xf]
        %v461 = vld [vmem:[%s292 + $0x1a4] sm:$0xf]
        %v462 = vld [vmem:[%s292 + $0x1a8] sm:$0xf]
        %v463 = vld [vmem:[%s292 + $0x1ac] sm:$0xf]
        %v464 = vld [vmem:[%s292 + $0x1b0] sm:$0xf]
        %v465 = vld [vmem:[%s292 + $0x1b4] sm:$0xf]
        %v466 = vld [vmem:[%s292 + $0x1b8] sm:$0xf]
        %v467 = vld [vmem:[%s292 + $0x1bc] sm:$0xf]
        %v468 = vld [vmem:[%s292 + $0x1c0] sm:$0xf]
        %v469 = vld [vmem:[%s292 + $0x1c4] sm:$0xf]
        %v470 = vld [vmem:[%s292 + $0x1c8] sm:$0xf]
        %v471 = vld [vmem:[%s292 + $0x1cc] sm:$0xf]
        %v472 = vld [vmem:[%s292 + $0x1d0] sm:$0xf]
        %v473 = vld [vmem:[%s292 + $0x1d4] sm:$0xf]
        %v474 = vld [vmem:[%s292 + $0x1d8] sm:$0xf]
        %v475 = vld [vmem:[%s292 + $0x1dc] sm:$0xf]
        %v476 = vld [vmem:[%s292 + $0x1e0] sm:$0xf]
        %v477 = vld [vmem:[%s292 + $0x1e4] sm:$0xf]
        %v478 = vld [vmem:[%s292 + $0x1e8] sm:$0xf]
        %v479 = vld [vmem:[%s292 + $0x1ec] sm:$0xf]
        %v480 = vld [vmem:[%s292 + $0x1f0] sm:$0xf]
        %v481 = vld [vmem:[%s292 + $0x1f4] sm:$0xf]
        %v482 = vld [vmem:[%s292 + $0x1f8] sm:$0xf]
        %v483 = vld [vmem:[%s292 + $0x1fc] sm:$0xf]
        %v484 = vld [vmem:[%s292 + $0x200] sm:$0xf]
        %v485 = vld [vmem:[%s292 + $0x204] sm:$0xf]
        %v486 = vld [vmem:[%s292 + $0x208] sm:$0xf]
        %v487 = vld [vmem:[%s292 + $0x20c] sm:$0xf]
        %v488 = vld [vmem:[%s292 + $0x210] sm:$0xf]
        %v489 = vld [vmem:[%s292 + $0x214] sm:$0xf]
        %v490 = vld [vmem:[%s292 + $0x218] sm:$0xf]
        %v491 = vld [vmem:[%s292 + $0x21c] sm:$0xf]
        %v492 = vld [vmem:[%s292 + $0x220] sm:$0xf]
        %v493 = vld [vmem:[%s292 + $0x224] sm:$0xf]
        %v494 = vld [vmem:[%s292 + $0x228] sm:$0xf]
        %v495 = vld [vmem:[%s292 + $0x22c] sm:$0xf]
        %v496 = vld [vmem:[%s292 + $0x230] sm:$0xf]
        %v497 = vld [vmem:[%s292 + $0x234] sm:$0xf]
        %v498 = vld [vmem:[%s292 + $0x238] sm:$0xf]
        %v499 = vld [vmem:[%s292 + $0x23c] sm:$0xf]
        %v500 = vld [vmem:[%s292 + $0x240] sm:$0xf]
        %v501 = vld [vmem:[%s292 + $0x244] sm:$0xf]
        %v502 = vld [vmem:[%s292 + $0x248] sm:$0xf]
        %v503 = vld [vmem:[%s292 + $0x24c] sm:$0xf]
        %v504 = vld [vmem:[%s292 + $0x250] sm:$0xf]
        %v505 = vld [vmem:[%s292 + $0x254] sm:$0xf]
        %v506 = vld [vmem:[%s292 + $0x258] sm:$0xf]
        %v507 = vld [vmem:[%s292 + $0x25c] sm:$0xf]
        %v508 = vld [vmem:[%s292 + $0x260] sm:$0xf]
        %v509 = vld [vmem:[%s292 + $0x264] sm:$0xf]
        %v510 = vld [vmem:[%s292 + $0x268] sm:$0xf]
        %v511 = vld [vmem:[%s292 + $0x26c] sm:$0xf]
        %v512 = vld [vmem:[%s292 + $0x270] sm:$0xf]
        %v513 = vld [vmem:[%s292 + $0x274] sm:$0xf]
        %v514 = vld [vmem:[%s292 + $0x278] sm:$0xf]
        %v515 = vld [vmem:[%s292 + $0x27c] sm:$0xf]
        %v516 = vld [vmem:[%s292 + $0x280] sm:$0xf]
        %v517 = vld [vmem:[%s292 + $0x284] sm:$0xf]
        %v518 = vld [vmem:[%s292 + $0x288] sm:$0xf]
        %v519 = vld [vmem:[%s292 + $0x28c] sm:$0xf]
        %v520 = vld [vmem:[%s292 + $0x290] sm:$0xf]
        %v521 = vld [vmem:[%s292 + $0x294] sm:$0xf]
        %v522 = vld [vmem:[%s292 + $0x298] sm:$0xf]
        %v523 = vld [vmem:[%s292 + $0x29c] sm:$0xf]
        %v524 = vld [vmem:[%s292 + $0x2a0] sm:$0xf]
        %v525 = vld [vmem:[%s292 + $0x2a4] sm:$0xf]
        %v526 = vld [vmem:[%s292 + $0x2a8] sm:$0xf]
        %v527 = vld [vmem:[%s292 + $0x2ac] sm:$0xf]
        %v528 = vld [vmem:[%s292 + $0x2b0] sm:$0xf]
        %v529 = vld [vmem:[%s292 + $0x2b4] sm:$0xf]
        %v530 = vld [vmem:[%s292 + $0x2b8] sm:$0xf]
        %v531 = vld [vmem:[%s292 + $0x2bc] sm:$0xf]
        %v532 = vld [vmem:[%s292 + $0x2c0] sm:$0xf]
        %v533 = vld [vmem:[%s292 + $0x2c4] sm:$0xf]
        %v534 = vld [vmem:[%s292 + $0x2c8] sm:$0xf]
        %v535 = vld [vmem:[%s292 + $0x2cc] sm:$0xf]
        %v536 = vld [vmem:[%s292 + $0x2d0] sm:$0xf]
        %v537 = vld [vmem:[%s292 + $0x2d4] sm:$0xf]
        %v538 = vld [vmem:[%s292 + $0x2d8] sm:$0xf]
        %v539 = vld [vmem:[%s292 + $0x2dc] sm:$0xf]
        %v540 = vld [vmem:[%s292 + $0x2e0] sm:$0xf]
        %v541 = vld [vmem:[%s292 + $0x2e4] sm:$0xf]
        %v542 = vld [vmem:[%s292 + $0x2e8] sm:$0xf]
        %v543 = vld [vmem:[%s292 + $0x2ec] sm:$0xf]
        %v544 = vld [vmem:[%s292 + $0x2f0] sm:$0xf]
        %v545 = vld [vmem:[%s292 + $0x2f4] sm:$0xf]
        %v546 = vld [vmem:[%s292 + $0x2f8] sm:$0xf]
        %v547 = vld [vmem:[%s292 + $0x2fc] sm:$0xf]
        %v548 = vld [vmem:[%s292 + $0x300] sm:$0xf]
        %v549 = vld [vmem:[%s292 + $0x304] sm:$0xf]
        %v550 = vld [vmem:[%s292 + $0x308] sm:$0xf]
        %v551 = vld [vmem:[%s292 + $0x30c] sm:$0xf]
        %v552 = vld [vmem:[%s292 + $0x310] sm:$0xf]
        %v553 = vld [vmem:[%s292 + $0x314] sm:$0xf]
        %v554 = vld [vmem:[%s292 + $0x318] sm:$0xf]
        %v555 = vld [vmem:[%s292 + $0x31c] sm:$0xf]
        %v556 = vld [vmem:[%s292 + $0x320] sm:$0xf]
        %v557 = vld [vmem:[%s292 + $0x324] sm:$0xf]
        %v558 = vld [vmem:[%s292 + $0x328] sm:$0xf]
        %v559 = vld [vmem:[%s292 + $0x32c] sm:$0xf]
        %v560 = vld [vmem:[%s292 + $0x330] sm:$0xf]
        %v561 = vld [vmem:[%s292 + $0x334] sm:$0xf]
        %v562 = vld [vmem:[%s292 + $0x338] sm:$0xf]
        %v563 = vld [vmem:[%s292 + $0x33c] sm:$0xf]
        %v564 = vld [vmem:[%s292 + $0x340] sm:$0xf]
        %v565 = vld [vmem:[%s292 + $0x344] sm:$0xf]
        %v566 = vld [vmem:[%s292 + $0x348] sm:$0xf]
        %v567 = vld [vmem:[%s292 + $0x34c] sm:$0xf]
        %v568 = vld [vmem:[%s292 + $0x350] sm:$0xf]
        %v569 = vld [vmem:[%s292 + $0x354] sm:$0xf]
        %v570 = vld [vmem:[%s292 + $0x358] sm:$0xf]
        %v571 = vld [vmem:[%s292 + $0x35c] sm:$0xf]
        %v572 = vld [vmem:[%s292 + $0x360] sm:$0xf]
        %v573 = vld [vmem:[%s292 + $0x364] sm:$0xf]
        %v574 = vld [vmem:[%s292 + $0x368] sm:$0xf]
        %v575 = vld [vmem:[%s292 + $0x36c] sm:$0xf]
        %v576 = vld [vmem:[%s292 + $0x370] sm:$0xf]
        %v577 = vld [vmem:[%s292 + $0x374] sm:$0xf]
        %v578 = vld [vmem:[%s292 + $0x378] sm:$0xf]
        %v579 = vld [vmem:[%s292 + $0x37c] sm:$0xf]
        %v580 = vld [vmem:[%s292 + $0x380] sm:$0xf]
        %v581 = vld [vmem:[%s292 + $0x384] sm:$0xf]
        %v582 = vld [vmem:[%s292 + $0x388] sm:$0xf]
        %v583 = vld [vmem:[%s292 + $0x38c] sm:$0xf]
        %v584 = vld [vmem:[%s292 + $0x390] sm:$0xf]
        %v585 = vld [vmem:[%s292 + $0x394] sm:$0xf]
        %v586 = vld [vmem:[%s292 + $0x398] sm:$0xf]
        %v587 = vld [vmem:[%s292 + $0x39c] sm:$0xf]
        %v588 = vld [vmem:[%s292 + $0x3a0] sm:$0xf]
        %v589 = vld [vmem:[%s292 + $0x3a4] sm:$0xf]
        %v590 = vld [vmem:[%s292 + $0x3a8] sm:$0xf]
        %v591 = vld [vmem:[%s292 + $0x3ac] sm:$0xf]
        %v592 = vld [vmem:[%s292 + $0x3b0] sm:$0xf]
        %v593 = vld [vmem:[%s292 + $0x3b4] sm:$0xf]
        %v594 = vld [vmem:[%s292 + $0x3b8] sm:$0xf]
        %v595 = vld [vmem:[%s292 + $0x3bc] sm:$0xf]
        %v596 = vld [vmem:[%s292 + $0x3c0] sm:$0xf]
        %v597 = vld [vmem:[%s292 + $0x3c4] sm:$0xf]
        %v598 = vld [vmem:[%s292 + $0x3c8] sm:$0xf]
        %v599 = vld [vmem:[%s292 + $0x3cc] sm:$0xf]
        %v600 = vld [vmem:[%s292 + $0x3d0] sm:$0xf]
        %v601 = vld [vmem:[%s292 + $0x3d4] sm:$0xf]
        %v602 = vld [vmem:[%s292 + $0x3d8] sm:$0xf]
        %v603 = vld [vmem:[%s292 + $0x3dc] sm:$0xf]
        %v604 = vld [vmem:[%s292 + $0x3e0] sm:$0xf]
        %v605 = vld [vmem:[%s292 + $0x3e4] sm:$0xf]
        %v606 = vld [vmem:[%s292 + $0x3e8] sm:$0xf]
        %v607 = vld [vmem:[%s292 + $0x3ec] sm:$0xf]
        %v608 = vld [vmem:[%s292 + $0x3f0] sm:$0xf]
        %v609 = vld [vmem:[%s292 + $0x3f4] sm:$0xf]
        %v610 = vld [vmem:[%s292 + $0x3f8] sm:$0xf]
        %v611 = vld [vmem:[%s292 + $0x3fc] sm:$0xf]
        %v612 = vld [vmem:[%s292 + $0x400] sm:$0xf]
        %v613 = vld [vmem:[%s292 + $0x404] sm:$0xf]
        %v614 = vld [vmem:[%s292 + $0x408] sm:$0xf]
        %v615 = vld [vmem:[%s292 + $0x40c] sm:$0xf]
        %v616 = vld [vmem:[%s292 + $0x410] sm:$0xf]
        %v617 = vld [vmem:[%s292 + $0x414] sm:$0xf]
        %v618 = vld [vmem:[%s292 + $0x418] sm:$0xf]
        %v619 = vld [vmem:[%s292 + $0x41c] sm:$0xf]
        %v620 = vld [vmem:[%s292 + $0x420] sm:$0xf]
        %v621 = vld [vmem:[%s292 + $0x424] sm:$0xf]
        %v622 = vld [vmem:[%s292 + $0x428] sm:$0xf]
        %v623 = vld [vmem:[%s292 + $0x42c] sm:$0xf]
        %v624 = vld [vmem:[%s292 + $0x430] sm:$0xf]
        %v625 = vld [vmem:[%s292 + $0x434] sm:$0xf]
        %v626 = vld [vmem:[%s292 + $0x438] sm:$0xf]
        %v627 = vld [vmem:[%s292 + $0x43c] sm:$0xf]
        %v628 = vld [vmem:[%s292 + $0x440] sm:$0xf]
        %v629 = vld [vmem:[%s292 + $0x444] sm:$0xf]
        %v630 = vld [vmem:[%s292 + $0x448] sm:$0xf]
        %v631 = vld [vmem:[%s292 + $0x44c] sm:$0xf]
        %v632 = vld [vmem:[%s292 + $0x450] sm:$0xf]
        %v633 = vld [vmem:[%s292 + $0x454] sm:$0xf]
        %v634 = vld [vmem:[%s292 + $0x458] sm:$0xf]
        %v635 = vld [vmem:[%s292 + $0x45c] sm:$0xf]
        %v636 = vld [vmem:[%s292 + $0x460] sm:$0xf]
        %v637 = vld [vmem:[%s292 + $0x464] sm:$0xf]
        %v638 = vld [vmem:[%s292 + $0x468] sm:$0xf]
        %v639 = vld [vmem:[%s292 + $0x46c] sm:$0xf]
        %v640 = vld [vmem:[%s292 + $0x470] sm:$0xf]
        %v641 = vld [vmem:[%s292 + $0x474] sm:$0xf]
        %v642 = vld [vmem:[%s292 + $0x478] sm:$0xf]
        %v643 = vld [vmem:[%s292 + $0x47c] sm:$0xf]
        %v644 = vld [vmem:[%s292 + $0x480] sm:$0xf]
        %v645 = vld [vmem:[%s292 + $0x484] sm:$0xf]
        %v646 = vld [vmem:[%s292 + $0x488] sm:$0xf]
        %v647 = vld [vmem:[%s292 + $0x48c] sm:$0xf]
        %v648 = vld [vmem:[%s292 + $0x490] sm:$0xf]
        %v649 = vld [vmem:[%s292 + $0x494] sm:$0xf]
        %v650 = vld [vmem:[%s292 + $0x498] sm:$0xf]
        %v651 = vld [vmem:[%s292 + $0x49c] sm:$0xf]
        %v652 = vld [vmem:[%s292 + $0x4a0] sm:$0xf]
        %v653 = vld [vmem:[%s292 + $0x4a4] sm:$0xf]
        %v654 = vld [vmem:[%s292 + $0x4a8] sm:$0xf]
        %v655 = vld [vmem:[%s292 + $0x4ac] sm:$0xf]
        %v656 = vld [vmem:[%s292 + $0x4b0] sm:$0xf]
        %v657 = vld [vmem:[%s292 + $0x4b4] sm:$0xf]
        %v658 = vld [vmem:[%s292 + $0x4b8] sm:$0xf]
        %v659 = vld [vmem:[%s292 + $0x4bc] sm:$0xf]
        %v660 = vld [vmem:[%s292 + $0x4c0] sm:$0xf]
        %v661 = vld [vmem:[%s292 + $0x4c4] sm:$0xf]
        %v662 = vld [vmem:[%s292 + $0x4c8] sm:$0xf]
        %v663 = vld [vmem:[%s292 + $0x4cc] sm:$0xf]
        %v664 = vld [vmem:[%s292 + $0x4d0] sm:$0xf]
        %v665 = vld [vmem:[%s292 + $0x4d4] sm:$0xf]
        %v666 = vld [vmem:[%s292 + $0x4d8] sm:$0xf]
        %v667 = vld [vmem:[%s292 + $0x4dc] sm:$0xf]
        %v668 = vld [vmem:[%s292 + $0x4e0] sm:$0xf]
        %v669 = vld [vmem:[%s292 + $0x4e4] sm:$0xf]
        %v670 = vld [vmem:[%s292 + $0x4e8] sm:$0xf]
        %v671 = vld [vmem:[%s292 + $0x4ec] sm:$0xf]
        %v672 = vld [vmem:[%s292 + $0x4f0] sm:$0xf]
        %v673 = vld [vmem:[%s292 + $0x4f4] sm:$0xf]
        %v674 = vld [vmem:[%s292 + $0x4f8] sm:$0xf]
        %v675 = vld [vmem:[%s292 + $0x4fc] sm:$0xf]
        %v676 = vld [vmem:[%s292 + $0x500] sm:$0xf]
        %v677 = vld [vmem:[%s292 + $0x504] sm:$0xf]
        %v678 = vld [vmem:[%s292 + $0x508] sm:$0xf]
        %v679 = vld [vmem:[%s292 + $0x50c] sm:$0xf]
        %v680 = vld [vmem:[%s292 + $0x510] sm:$0xf]
        %v681 = vld [vmem:[%s292 + $0x514] sm:$0xf]
        %v682 = vld [vmem:[%s292 + $0x518] sm:$0xf]
        %v683 = vld [vmem:[%s292 + $0x51c] sm:$0xf]
        %v684 = vld [vmem:[%s292 + $0x520] sm:$0xf]
        %v685 = vld [vmem:[%s292 + $0x524] sm:$0xf]
        %v686 = vld [vmem:[%s292 + $0x528] sm:$0xf]
        %v687 = vld [vmem:[%s292 + $0x52c] sm:$0xf]
        %v688 = vld [vmem:[%s292 + $0x530] sm:$0xf]
        %v689 = vld [vmem:[%s292 + $0x534] sm:$0xf]
        %v690 = vld [vmem:[%s292 + $0x538] sm:$0xf]
        %v691 = vld [vmem:[%s292 + $0x53c] sm:$0xf]
        %v692 = vld [vmem:[%s292 + $0x540] sm:$0xf]
        %v693 = vld [vmem:[%s292 + $0x544] sm:$0xf]
        %v694 = vld [vmem:[%s292 + $0x548] sm:$0xf]
        %v695 = vld [vmem:[%s292 + $0x54c] sm:$0xf]
        %v696 = vld [vmem:[%s292 + $0x550] sm:$0xf]
        %v697 = vld [vmem:[%s292 + $0x554] sm:$0xf]
        %v698 = vld [vmem:[%s292 + $0x558] sm:$0xf]
        %v699 = vld [vmem:[%s292 + $0x55c] sm:$0xf]
        %v700 = vld [vmem:[%s292 + $0x560] sm:$0xf]
        %v701 = vld [vmem:[%s292 + $0x564] sm:$0xf]
        %v702 = vld [vmem:[%s292 + $0x568] sm:$0xf]
        %v703 = vld [vmem:[%s292 + $0x56c] sm:$0xf]
        %v704 = vld [vmem:[%s292 + $0x570] sm:$0xf]
        %v705 = vld [vmem:[%s292 + $0x574] sm:$0xf]
        %v706 = vld [vmem:[%s292 + $0x578] sm:$0xf]
        %v707 = vld [vmem:[%s292 + $0x57c] sm:$0xf]
        %v708 = vld [vmem:[%s292 + $0x580] sm:$0xf]
        %v709 = vld [vmem:[%s292 + $0x584] sm:$0xf]
        %v710 = vld [vmem:[%s292 + $0x588] sm:$0xf]
        %v711 = vld [vmem:[%s292 + $0x58c] sm:$0xf]
        %v712 = vld [vmem:[%s292 + $0x590] sm:$0xf]
        %v713 = vld [vmem:[%s292 + $0x594] sm:$0xf]
        %v714 = vld [vmem:[%s292 + $0x598] sm:$0xf]
        %v715 = vld [vmem:[%s292 + $0x59c] sm:$0xf]
        %v716 = vld [vmem:[%s292 + $0x5a0] sm:$0xf]
        %v717 = vld [vmem:[%s292 + $0x5a4] sm:$0xf]
        %v718 = vld [vmem:[%s292 + $0x5a8] sm:$0xf]
        %v719 = vld [vmem:[%s292 + $0x5ac] sm:$0xf]
        %v720 = vld [vmem:[%s292 + $0x5b0] sm:$0xf]
        %v721 = vld [vmem:[%s292 + $0x5b4] sm:$0xf]
        %v722 = vld [vmem:[%s292 + $0x5b8] sm:$0xf]
        %v723 = vld [vmem:[%s292 + $0x5bc] sm:$0xf]
        %v724 = vld [vmem:[%s292 + $0x5c0] sm:$0xf]
        %v725 = vld [vmem:[%s292 + $0x5c4] sm:$0xf]
        %v726 = vld [vmem:[%s292 + $0x5c8] sm:$0xf]
        %v727 = vld [vmem:[%s292 + $0x5cc] sm:$0xf]
        %v728 = vld [vmem:[%s292 + $0x5d0] sm:$0xf]
        %v729 = vld [vmem:[%s292 + $0x5d4] sm:$0xf]
        %v730 = vld [vmem:[%s292 + $0x5d8] sm:$0xf]
        %v731 = vld [vmem:[%s292 + $0x5dc] sm:$0xf]
        %v732 = vld [vmem:[%s292 + $0x5e0] sm:$0xf]
        %v733 = vld [vmem:[%s292 + $0x5e4] sm:$0xf]
        %v734 = vld [vmem:[%s292 + $0x5e8] sm:$0xf]
        %v735 = vld [vmem:[%s292 + $0x5ec] sm:$0xf]
        %v736 = vld [vmem:[%s292 + $0x5f0] sm:$0xf]
        %v737 = vld [vmem:[%s292 + $0x5f4] sm:$0xf]
        %v738 = vld [vmem:[%s292 + $0x5f8] sm:$0xf]
        %v739 = vld [vmem:[%s292 + $0x5fc] sm:$0xf]
        %v740 = vld [vmem:[%s292 + $0x600] sm:$0xf]
        %v741 = vld [vmem:[%s292 + $0x604] sm:$0xf]
        %v742 = vld [vmem:[%s292 + $0x608] sm:$0xf]
        %v743 = vld [vmem:[%s292 + $0x60c] sm:$0xf]
        %v744 = vld [vmem:[%s292 + $0x610] sm:$0xf]
        %v745 = vld [vmem:[%s292 + $0x614] sm:$0xf]
        %v746 = vld [vmem:[%s292 + $0x618] sm:$0xf]
        %v747 = vld [vmem:[%s292 + $0x61c] sm:$0xf]
        %v748 = vld [vmem:[%s292 + $0x620] sm:$0xf]
        %v749 = vld [vmem:[%s292 + $0x624] sm:$0xf]
        %v750 = vld [vmem:[%s292 + $0x628] sm:$0xf]
        %v751 = vld [vmem:[%s292 + $0x62c] sm:$0xf]
        %v752 = vld [vmem:[%s292 + $0x630] sm:$0xf]
        %v753 = vld [vmem:[%s292 + $0x634] sm:$0xf]
        %v754 = vld [vmem:[%s292 + $0x638] sm:$0xf]
        %v755 = vld [vmem:[%s292 + $0x63c] sm:$0xf]
        %v756 = vld [vmem:[%s292 + $0x640] sm:$0xf]
        %v757 = vld [vmem:[%s292 + $0x644] sm:$0xf]
        %v758 = vld [vmem:[%s292 + $0x648] sm:$0xf]
        %v759 = vld [vmem:[%s292 + $0x64c] sm:$0xf]
        %v760 = vld [vmem:[%s292 + $0x650] sm:$0xf]
        %v761 = vld [vmem:[%s292 + $0x654] sm:$0xf]
        %v762 = vld [vmem:[%s292 + $0x658] sm:$0xf]
        %v763 = vld [vmem:[%s292 + $0x65c] sm:$0xf]
        %v764 = vld [vmem:[%s292 + $0x660] sm:$0xf]
        %v765 = vld [vmem:[%s292 + $0x664] sm:$0xf]
        %v766 = vld [vmem:[%s292 + $0x668] sm:$0xf]
        %v767 = vld [vmem:[%s292 + $0x66c] sm:$0xf]
        %v768 = vld [vmem:[%s292 + $0x670] sm:$0xf]
        %v769 = vld [vmem:[%s292 + $0x674] sm:$0xf]
        %v770 = vld [vmem:[%s292 + $0x678] sm:$0xf]
        %v771 = vld [vmem:[%s292 + $0x67c] sm:$0xf]
        %v772 = vld [vmem:[%s292 + $0x680] sm:$0xf]
        %v773 = vld [vmem:[%s292 + $0x684] sm:$0xf]
        %v774 = vld [vmem:[%s292 + $0x688] sm:$0xf]
        %v775 = vld [vmem:[%s292 + $0x68c] sm:$0xf]
        %v776 = vld [vmem:[%s292 + $0x690] sm:$0xf]
        %v777 = vld [vmem:[%s292 + $0x694] sm:$0xf]
        %v778 = vld [vmem:[%s292 + $0x698] sm:$0xf]
        %v779 = vld [vmem:[%s292 + $0x69c] sm:$0xf]
        %v780 = vld [vmem:[%s292 + $0x6a0] sm:$0xf]
        %v781 = vld [vmem:[%s292 + $0x6a4] sm:$0xf]
        %v782 = vld [vmem:[%s292 + $0x6a8] sm:$0xf]
        %v783 = vld [vmem:[%s292 + $0x6ac] sm:$0xf]
        %v784 = vld [vmem:[%s292 + $0x6b0] sm:$0xf]
        %v785 = vld [vmem:[%s292 + $0x6b4] sm:$0xf]
        %v786 = vld [vmem:[%s292 + $0x6b8] sm:$0xf]
        %v787 = vld [vmem:[%s292 + $0x6bc] sm:$0xf]
        %v788 = vld [vmem:[%s292 + $0x6c0] sm:$0xf]
        %v789 = vld [vmem:[%s292 + $0x6c4] sm:$0xf]
        %v790 = vld [vmem:[%s292 + $0x6c8] sm:$0xf]
        %v791 = vld [vmem:[%s292 + $0x6cc] sm:$0xf]
        %v792 = vld [vmem:[%s292 + $0x6d0] sm:$0xf]
        %v793 = vld [vmem:[%s292 + $0x6d4] sm:$0xf]
        %v794 = vld [vmem:[%s292 + $0x6d8] sm:$0xf]
        %v795 = vld [vmem:[%s292 + $0x6dc] sm:$0xf]
        %v796 = vld [vmem:[%s292 + $0x6e0] sm:$0xf]
        %v797 = vld [vmem:[%s292 + $0x6e4] sm:$0xf]
        %v798 = vld [vmem:[%s292 + $0x6e8] sm:$0xf]
        %v799 = vld [vmem:[%s292 + $0x6ec] sm:$0xf]
        %v800 = vld [vmem:[%s292 + $0x6f0] sm:$0xf]
        %v801 = vld [vmem:[%s292 + $0x6f4] sm:$0xf]
        %v802 = vld [vmem:[%s292 + $0x6f8] sm:$0xf]
        %v803 = vld [vmem:[%s292 + $0x6fc] sm:$0xf]
        %v804 = vld [vmem:[%s292 + $0x700] sm:$0xf]
        %v805 = vld [vmem:[%s292 + $0x704] sm:$0xf]
        %v806 = vld [vmem:[%s292 + $0x708] sm:$0xf]
        %v807 = vld [vmem:[%s292 + $0x70c] sm:$0xf]
        %v808 = vld [vmem:[%s292 + $0x710] sm:$0xf]
        %v809 = vld [vmem:[%s292 + $0x714] sm:$0xf]
        %v810 = vld [vmem:[%s292 + $0x718] sm:$0xf]
        %v811 = vld [vmem:[%s292 + $0x71c] sm:$0xf]
        %v812 = vld [vmem:[%s292 + $0x720] sm:$0xf]
        %v813 = vld [vmem:[%s292 + $0x724] sm:$0xf]
        %v814 = vld [vmem:[%s292 + $0x728] sm:$0xf]
        %v815 = vld [vmem:[%s292 + $0x72c] sm:$0xf]
        %v816 = vld [vmem:[%s292 + $0x730] sm:$0xf]
        %v817 = vld [vmem:[%s292 + $0x734] sm:$0xf]
        %v818 = vld [vmem:[%s292 + $0x738] sm:$0xf]
        %v819 = vld [vmem:[%s292 + $0x73c] sm:$0xf]
        %v820 = vld [vmem:[%s292 + $0x740] sm:$0xf]
        %v821 = vld [vmem:[%s292 + $0x744] sm:$0xf]
        %v822 = vld [vmem:[%s292 + $0x748] sm:$0xf]
        %v823 = vld [vmem:[%s292 + $0x74c] sm:$0xf]
        %v824 = vld [vmem:[%s292 + $0x750] sm:$0xf]
        %v825 = vld [vmem:[%s292 + $0x754] sm:$0xf]
        %v826 = vld [vmem:[%s292 + $0x758] sm:$0xf]
        %v827 = vld [vmem:[%s292 + $0x75c] sm:$0xf]
        %v828 = vld [vmem:[%s292 + $0x760] sm:$0xf]
        %v829 = vld [vmem:[%s292 + $0x764] sm:$0xf]
        %v830 = vld [vmem:[%s292 + $0x768] sm:$0xf]
        %v831 = vld [vmem:[%s292 + $0x76c] sm:$0xf]
        %v832 = vld [vmem:[%s292 + $0x770] sm:$0xf]
        %v833 = vld [vmem:[%s292 + $0x774] sm:$0xf]
        %v834 = vld [vmem:[%s292 + $0x778] sm:$0xf]
        %v835 = vld [vmem:[%s292 + $0x77c] sm:$0xf]
        %v836 = vld [vmem:[%s292 + $0x780] sm:$0xf]
        %v837 = vld [vmem:[%s292 + $0x784] sm:$0xf]
        %v838 = vld [vmem:[%s292 + $0x788] sm:$0xf]
        %v839 = vld [vmem:[%s292 + $0x78c] sm:$0xf]
        %v840 = vld [vmem:[%s292 + $0x790] sm:$0xf]
        %v841 = vld [vmem:[%s292 + $0x794] sm:$0xf]
        %v842 = vld [vmem:[%s292 + $0x798] sm:$0xf]
        %v843 = vld [vmem:[%s292 + $0x79c] sm:$0xf]
        %v844 = vld [vmem:[%s292 + $0x7a0] sm:$0xf]
        %v845 = vld [vmem:[%s292 + $0x7a4] sm:$0xf]
        %v846 = vld [vmem:[%s292 + $0x7a8] sm:$0xf]
        %v847 = vld [vmem:[%s292 + $0x7ac] sm:$0xf]
        %v848 = vld [vmem:[%s292 + $0x7b0] sm:$0xf]
        %v849 = vld [vmem:[%s292 + $0x7b4] sm:$0xf]
        %v850 = vld [vmem:[%s292 + $0x7b8] sm:$0xf]
        %v851 = vld [vmem:[%s292 + $0x7bc] sm:$0xf]
        %v852 = vld [vmem:[%s292 + $0x7c0] sm:$0xf]
        %v853 = vld [vmem:[%s292 + $0x7c4] sm:$0xf]
        %v854 = vld [vmem:[%s292 + $0x7c8] sm:$0xf]
        %v855 = vld [vmem:[%s292 + $0x7cc] sm:$0xf]
        %v856 = vld [vmem:[%s292 + $0x7d0] sm:$0xf]
        %v857 = vld [vmem:[%s292 + $0x7d4] sm:$0xf]
        %v858 = vld [vmem:[%s292 + $0x7d8] sm:$0xf]
        %v859 = vld [vmem:[%s292 + $0x7dc] sm:$0xf]
        %v860 = vld [vmem:[%s292 + $0x7e0] sm:$0xf]
        %v861 = vld [vmem:[%s292 + $0x7e4] sm:$0xf]
        %v862 = vld [vmem:[%s292 + $0x7e8] sm:$0xf]
        %v863 = vld [vmem:[%s292 + $0x7ec] sm:$0xf]
        %v864 = vld [vmem:[%s292 + $0x7f0] sm:$0xf]
        %v865 = vld [vmem:[%s292 + $0x7f4] sm:$0xf]
        %v866 = vld [vmem:[%s292 + $0x7f8] sm:$0xf]
        %v867 = vld [vmem:[%s292 + $0x7fc] sm:$0xf]
        %v868 = vld [vmem:[%s292 + $0x800] sm:$0xf]
        %v869 = vld [vmem:[%s292 + $0x804] sm:$0xf]
        %v870 = vld [vmem:[%s292 + $0x808] sm:$0xf]
        %v871 = vld [vmem:[%s292 + $0x80c] sm:$0xf]
        %v872 = vld [vmem:[%s292 + $0x810] sm:$0xf]
        %v873 = vld [vmem:[%s292 + $0x814] sm:$0xf]
        %v874 = vld [vmem:[%s292 + $0x818] sm:$0xf]
        %v875 = vld [vmem:[%s292 + $0x81c] sm:$0xf]
        %v876 = vld [vmem:[%s292 + $0x820] sm:$0xf]
        %v877 = vld [vmem:[%s292 + $0x824] sm:$0xf]
        %v878 = vld [vmem:[%s292 + $0x828] sm:$0xf]
        %v879 = vld [vmem:[%s292 + $0x82c] sm:$0xf]
        %v880 = vld [vmem:[%s292 + $0x830] sm:$0xf]
        %v881 = vld [vmem:[%s292 + $0x834] sm:$0xf]
        %v882 = vld [vmem:[%s292 + $0x838] sm:$0xf]
        %v883 = vld [vmem:[%s292 + $0x83c] sm:$0xf]
        %v884 = vld [vmem:[%s292 + $0x840] sm:$0xf]
        %v885 = vld [vmem:[%s292 + $0x844] sm:$0xf]
        %v886 = vld [vmem:[%s292 + $0x848] sm:$0xf]
        %v887 = vld [vmem:[%s292 + $0x84c] sm:$0xf]
        %v888 = vld [vmem:[%s292 + $0x850] sm:$0xf]
        %v889 = vld [vmem:[%s292 + $0x854] sm:$0xf]
        %v890 = vld [vmem:[%s292 + $0x858] sm:$0xf]
        %v891 = vld [vmem:[%s292 + $0x85c] sm:$0xf]
        %v892 = vld [vmem:[%s292 + $0x860] sm:$0xf]
        %v893 = vld [vmem:[%s292 + $0x864] sm:$0xf]
        %v894 = vld [vmem:[%s292 + $0x868] sm:$0xf]
        %v895 = vld [vmem:[%s292 + $0x86c] sm:$0xf]
        %v896 = vld [vmem:[%s292 + $0x870] sm:$0xf]
        %v897 = vld [vmem:[%s292 + $0x874] sm:$0xf]
        %v898 = vld [vmem:[%s292 + $0x878] sm:$0xf]
        %v899 = vld [vmem:[%s292 + $0x87c] sm:$0xf]
        %v900 = vld [vmem:[%s292 + $0x880] sm:$0xf]
        %v901 = vld [vmem:[%s292 + $0x884] sm:$0xf]
        %v902 = vld [vmem:[%s292 + $0x888] sm:$0xf]
        %v903 = vld [vmem:[%s292 + $0x88c] sm:$0xf]
        %v904 = vld [vmem:[%s292 + $0x890] sm:$0xf]
        %v905 = vld [vmem:[%s292 + $0x894] sm:$0xf]
        %v906 = vld [vmem:[%s292 + $0x898] sm:$0xf]
        %v907 = vld [vmem:[%s292 + $0x89c] sm:$0xf]
        %v908 = vld [vmem:[%s292 + $0x8a0] sm:$0xf]
        %v909 = vld [vmem:[%s292 + $0x8a4] sm:$0xf]
        %v910 = vld [vmem:[%s292 + $0x8a8] sm:$0xf]
        %v911 = vld [vmem:[%s292 + $0x8ac] sm:$0xf]
        %v912 = vld [vmem:[%s292 + $0x8b0] sm:$0xf]
        %v913 = vld [vmem:[%s292 + $0x8b4] sm:$0xf]
        %v914 = vld [vmem:[%s292 + $0x8b8] sm:$0xf]
        %v915 = vld [vmem:[%s292 + $0x8bc] sm:$0xf]
        %v916 = vld [vmem:[%s292 + $0x8c0] sm:$0xf]
        %v917 = vld [vmem:[%s292 + $0x8c4] sm:$0xf]
        %v918 = vld [vmem:[%s292 + $0x8c8] sm:$0xf]
        %v919 = vld [vmem:[%s292 + $0x8cc] sm:$0xf]
        %v920 = vld [vmem:[%s292 + $0x8d0] sm:$0xf]
        %v921 = vld [vmem:[%s292 + $0x8d4] sm:$0xf]
        %v922 = vld [vmem:[%s292 + $0x8d8] sm:$0xf]
        %v923 = vld [vmem:[%s292 + $0x8dc] sm:$0xf]
        %v924 = vld [vmem:[%s292 + $0x8e0] sm:$0xf]
        %v925 = vld [vmem:[%s292 + $0x8e4] sm:$0xf]
        %v926 = vld [vmem:[%s292 + $0x8e8] sm:$0xf]
        %v927 = vld [vmem:[%s292 + $0x8ec] sm:$0xf]
        %v928 = vld [vmem:[%s292 + $0x8f0] sm:$0xf]
        %v929 = vld [vmem:[%s292 + $0x8f4] sm:$0xf]
        %v930 = vld [vmem:[%s292 + $0x8f8] sm:$0xf]
        %v931 = vld [vmem:[%s292 + $0x8fc] sm:$0xf]
        %v932 = vld [vmem:[%s292 + $0x900] sm:$0xf]
        %v933 = vld [vmem:[%s292 + $0x904] sm:$0xf]
        %v934 = vld [vmem:[%s292 + $0x908] sm:$0xf]
        %v935 = vld [vmem:[%s292 + $0x90c] sm:$0xf]
        %v936 = vld [vmem:[%s292 + $0x910] sm:$0xf]
        %v937 = vld [vmem:[%s292 + $0x914] sm:$0xf]
        %v938 = vld [vmem:[%s292 + $0x918] sm:$0xf]
        %v939 = vld [vmem:[%s292 + $0x91c] sm:$0xf]
        %v940 = vld [vmem:[%s292 + $0x920] sm:$0xf]
        %v941 = vld [vmem:[%s292 + $0x924] sm:$0xf]
        %v942 = vld [vmem:[%s292 + $0x928] sm:$0xf]
        %v943 = vld [vmem:[%s292 + $0x92c] sm:$0xf]
        %v944 = vld [vmem:[%s292 + $0x930] sm:$0xf]
        %v945 = vld [vmem:[%s292 + $0x934] sm:$0xf]
        %v946 = vld [vmem:[%s292 + $0x938] sm:$0xf]
        %v947 = vld [vmem:[%s292 + $0x93c] sm:$0xf]
        %v948 = vld [vmem:[%s292 + $0x940] sm:$0xf]
        %v949 = vld [vmem:[%s292 + $0x944] sm:$0xf]
        %v950 = vld [vmem:[%s292 + $0x948] sm:$0xf]
        %v951 = vld [vmem:[%s292 + $0x94c] sm:$0xf]
        %v952 = vld [vmem:[%s292 + $0x950] sm:$0xf]
        %v953 = vld [vmem:[%s292 + $0x954] sm:$0xf]
        %v954 = vld [vmem:[%s292 + $0x958] sm:$0xf]
        %v955 = vld [vmem:[%s292 + $0x95c] sm:$0xf]
        %v956 = vld [vmem:[%s292 + $0x960] sm:$0xf]
        %v957 = vld [vmem:[%s292 + $0x964] sm:$0xf]
        %v958 = vld [vmem:[%s292 + $0x968] sm:$0xf]
        %v959 = vld [vmem:[%s292 + $0x96c] sm:$0xf]
        %v960 = vld [vmem:[%s292 + $0x970] sm:$0xf]
        %v961 = vld [vmem:[%s292 + $0x974] sm:$0xf]
        %v962 = vld [vmem:[%s292 + $0x978] sm:$0xf]
        %v963 = vld [vmem:[%s292 + $0x97c] sm:$0xf]
        %v964 = vld [vmem:[%s292 + $0x980] sm:$0xf]
        %v965 = vld [vmem:[%s292 + $0x984] sm:$0xf]
        %v966 = vld [vmem:[%s292 + $0x988] sm:$0xf]
        %v967 = vld [vmem:[%s292 + $0x98c] sm:$0xf]
        %v968 = vld [vmem:[%s292 + $0x990] sm:$0xf]
        %v969 = vld [vmem:[%s292 + $0x994] sm:$0xf]
        %v970 = vld [vmem:[%s292 + $0x998] sm:$0xf]
        %v971 = vld [vmem:[%s292 + $0x99c] sm:$0xf]
        %v972 = vld [vmem:[%s292 + $0x9a0] sm:$0xf]
        %v973 = vld [vmem:[%s292 + $0x9a4] sm:$0xf]
        %v974 = vld [vmem:[%s292 + $0x9a8] sm:$0xf]
        %v975 = vld [vmem:[%s292 + $0x9ac] sm:$0xf]
        %v976 = vld [vmem:[%s292 + $0x9b0] sm:$0xf]
        %v977 = vld [vmem:[%s292 + $0x9b4] sm:$0xf]
        %v978 = vld [vmem:[%s292 + $0x9b8] sm:$0xf]
        %v979 = vld [vmem:[%s292 + $0x9bc] sm:$0xf]
        %v980 = vld [vmem:[%s292 + $0x9c0] sm:$0xf]
        %v981 = vld [vmem:[%s292 + $0x9c4] sm:$0xf]
        %v982 = vld [vmem:[%s292 + $0x9c8] sm:$0xf]
        %v983 = vld [vmem:[%s292 + $0x9cc] sm:$0xf]
        %v984 = vld [vmem:[%s292 + $0x9d0] sm:$0xf]
        %v985 = vld [vmem:[%s292 + $0x9d4] sm:$0xf]
        %v986 = vld [vmem:[%s292 + $0x9d8] sm:$0xf]
        %v987 = vld [vmem:[%s292 + $0x9dc] sm:$0xf]
        %v988 = vld [vmem:[%s292 + $0x9e0] sm:$0xf]
        %v989 = vld [vmem:[%s292 + $0x9e4] sm:$0xf]
        %v990 = vld [vmem:[%s292 + $0x9e8] sm:$0xf]
        %v991 = vld [vmem:[%s292 + $0x9ec] sm:$0xf]
        %v992 = vld [vmem:[%s292 + $0x9f0] sm:$0xf]
        %v993 = vld [vmem:[%s292 + $0x9f4] sm:$0xf]
        %v994 = vld [vmem:[%s292 + $0x9f8] sm:$0xf]
        %v995 = vld [vmem:[%s292 + $0x9fc] sm:$0xf]
        %v996 = vld [vmem:[%s292 + $0xa00] sm:$0xf]
        %v997 = vld [vmem:[%s292 + $0xa04] sm:$0xf]
        %v998 = vld [vmem:[%s292 + $0xa08] sm:$0xf]
        %v999 = vld [vmem:[%s292 + $0xa0c] sm:$0xf]
        %v1000 = vld [vmem:[%s292 + $0xa10] sm:$0xf]
        %v1001 = vld [vmem:[%s292 + $0xa14] sm:$0xf]
        %v1002 = vld [vmem:[%s292 + $0xa18] sm:$0xf]
        %v1003 = vld [vmem:[%s292 + $0xa1c] sm:$0xf]
        %v1004 = vld [vmem:[%s292 + $0xa20] sm:$0xf]
        %v1005 = vld [vmem:[%s292 + $0xa24] sm:$0xf]
        %v1006 = vld [vmem:[%s292 + $0xa28] sm:$0xf]
        %v1007 = vld [vmem:[%s292 + $0xa2c] sm:$0xf]
        %v1008 = vld [vmem:[%s292 + $0xa30] sm:$0xf]
        %v1009 = vld [vmem:[%s292 + $0xa34] sm:$0xf]
        %v1010 = vld [vmem:[%s292 + $0xa38] sm:$0xf]
        %v1011 = vld [vmem:[%s292 + $0xa3c] sm:$0xf]
        %v1012 = vld [vmem:[%s292 + $0xa40] sm:$0xf]
        %v1013 = vld [vmem:[%s292 + $0xa44] sm:$0xf]
        %v1014 = vld [vmem:[%s292 + $0xa48] sm:$0xf]
        %v1015 = vld [vmem:[%s292 + $0xa4c] sm:$0xf]
        %v1016 = vld [vmem:[%s292 + $0xa50] sm:$0xf]
        %v1017 = vld [vmem:[%s292 + $0xa54] sm:$0xf]
        %v1018 = vld [vmem:[%s292 + $0xa58] sm:$0xf]
        %v1019 = vld [vmem:[%s292 + $0xa5c] sm:$0xf]
        %v1020 = vld [vmem:[%s292 + $0xa60] sm:$0xf]
        %v1021 = vld [vmem:[%s292 + $0xa64] sm:$0xf]
        %v1022 = vld [vmem:[%s292 + $0xa68] sm:$0xf]
        %v1023 = vld [vmem:[%s292 + $0xa6c] sm:$0xf]
        %v1024 = vld [vmem:[%s292 + $0xa70] sm:$0xf]
        %v1025 = vld [vmem:[%s292 + $0xa74] sm:$0xf]
        %v1026 = vld [vmem:[%s292 + $0xa78] sm:$0xf]
        %v1027 = vld [vmem:[%s292 + $0xa7c] sm:$0xf]
        %v1028 = vld [vmem:[%s292 + $0xa80] sm:$0xf]
        %v1029 = vld [vmem:[%s292 + $0xa84] sm:$0xf]
        %v1030 = vld [vmem:[%s292 + $0xa88] sm:$0xf]
        %v1031 = vld [vmem:[%s292 + $0xa8c] sm:$0xf]
        %v1032 = vld [vmem:[%s292 + $0xa90] sm:$0xf]
        %v1033 = vld [vmem:[%s292 + $0xa94] sm:$0xf]
        %v1034 = vld [vmem:[%s292 + $0xa98] sm:$0xf]
        %v1035 = vld [vmem:[%s292 + $0xa9c] sm:$0xf]
        %v1036 = vld [vmem:[%s292 + $0xaa0] sm:$0xf]
        %v1037 = vld [vmem:[%s292 + $0xaa4] sm:$0xf]
        %v1038 = vld [vmem:[%s292 + $0xaa8] sm:$0xf]
        %v1039 = vld [vmem:[%s292 + $0xaac] sm:$0xf]
        %v1040 = vld [vmem:[%s292 + $0xab0] sm:$0xf]
        %v1041 = vld [vmem:[%s292 + $0xab4] sm:$0xf]
        %v1042 = vld [vmem:[%s292 + $0xab8] sm:$0xf]
        %v1043 = vld [vmem:[%s292 + $0xabc] sm:$0xf]
        %v1044 = vld [vmem:[%s292 + $0xac0] sm:$0xf]
        %v1045 = vld [vmem:[%s292 + $0xac4] sm:$0xf]
        %v1046 = vld [vmem:[%s292 + $0xac8] sm:$0xf]
        %v1047 = vld [vmem:[%s292 + $0xacc] sm:$0xf]
        %v1048 = vld [vmem:[%s292 + $0xad0] sm:$0xf]
        %v1049 = vld [vmem:[%s292 + $0xad4] sm:$0xf]
        %v1050 = vld [vmem:[%s292 + $0xad8] sm:$0xf]
        %v1051 = vld [vmem:[%s292 + $0xadc] sm:$0xf]
        %v1052 = vld [vmem:[%s292 + $0xae0] sm:$0xf]
        %v1053 = vld [vmem:[%s292 + $0xae4] sm:$0xf]
        %v1054 = vld [vmem:[%s292 + $0xae8] sm:$0xf]
        %v1055 = vld [vmem:[%s292 + $0xaec] sm:$0xf]
        %v1056 = vld [vmem:[%s292 + $0xaf0] sm:$0xf]
        %v1057 = vld [vmem:[%s292 + $0xaf4] sm:$0xf]
        %v1058 = vld [vmem:[%s292 + $0xaf8] sm:$0xf]
        %v1059 = vld [vmem:[%s292 + $0xafc] sm:$0xf]
        %v1060 = vld [vmem:[%s292 + $0xb00] sm:$0xf]
        %v1061 = vld [vmem:[%s292 + $0xb04] sm:$0xf]
        %v1062 = vld [vmem:[%s292 + $0xb08] sm:$0xf]
        %v1063 = vld [vmem:[%s292 + $0xb0c] sm:$0xf]
        %v1064 = vld [vmem:[%s292 + $0xb10] sm:$0xf]
        %v1065 = vld [vmem:[%s292 + $0xb14] sm:$0xf]
        %v1066 = vld [vmem:[%s292 + $0xb18] sm:$0xf]
        %v1067 = vld [vmem:[%s292 + $0xb1c] sm:$0xf]
        %v1068 = vld [vmem:[%s292 + $0xb20] sm:$0xf]
        %v1069 = vld [vmem:[%s292 + $0xb24] sm:$0xf]
        %v1070 = vld [vmem:[%s292 + $0xb28] sm:$0xf]
        %v1071 = vld [vmem:[%s292 + $0xb2c] sm:$0xf]
        %v1072 = vld [vmem:[%s292 + $0xb30] sm:$0xf]
        %v1073 = vld [vmem:[%s292 + $0xb34] sm:$0xf]
        %v1074 = vld [vmem:[%s292 + $0xb38] sm:$0xf]
        %v1075 = vld [vmem:[%s292 + $0xb3c] sm:$0xf]
        %v1076 = vld [vmem:[%s292 + $0xb40] sm:$0xf]
        %v1077 = vld [vmem:[%s292 + $0xb44] sm:$0xf]
        %v1078 = vld [vmem:[%s292 + $0xb48] sm:$0xf]
        %v1079 = vld [vmem:[%s292 + $0xb4c] sm:$0xf]
        %v1080 = vld [vmem:[%s292 + $0xb50] sm:$0xf]
        %v1081 = vld [vmem:[%s292 + $0xb54] sm:$0xf]
        %v1082 = vld [vmem:[%s292 + $0xb58] sm:$0xf]
        %v1083 = vld [vmem:[%s292 + $0xb5c] sm:$0xf]
        %v1084 = vld [vmem:[%s292 + $0xb60] sm:$0xf]
        %v1085 = vld [vmem:[%s292 + $0xb64] sm:$0xf]
        %v1086 = vld [vmem:[%s292 + $0xb68] sm:$0xf]
        %v1087 = vld [vmem:[%s292 + $0xb6c] sm:$0xf]
        %v1088 = vld [vmem:[%s292 + $0xb70] sm:$0xf]
        %v1089 = vld [vmem:[%s292 + $0xb74] sm:$0xf]
        %v1090 = vld [vmem:[%s292 + $0xb78] sm:$0xf]
        %v1091 = vld [vmem:[%s292 + $0xb7c] sm:$0xf]
        %v1092 = vld [vmem:[%s292 + $0xb80] sm:$0xf]
        %v1093 = vld [vmem:[%s292 + $0xb84] sm:$0xf]
        %v1094 = vld [vmem:[%s292 + $0xb88] sm:$0xf]
        %v1095 = vld [vmem:[%s292 + $0xb8c] sm:$0xf]
        %v1096 = vld [vmem:[%s292 + $0xb90] sm:$0xf]
        %v1097 = vld [vmem:[%s292 + $0xb94] sm:$0xf]
        %v1098 = vld [vmem:[%s292 + $0xb98] sm:$0xf]
        %v1099 = vld [vmem:[%s292 + $0xb9c] sm:$0xf]
        %v1100 = vld [vmem:[%s292 + $0xba0] sm:$0xf]
        %v1101 = vld [vmem:[%s292 + $0xba4] sm:$0xf]
        %v1102 = vld [vmem:[%s292 + $0xba8] sm:$0xf]
        %v1103 = vld [vmem:[%s292 + $0xbac] sm:$0xf]
        %v1104 = vld [vmem:[%s292 + $0xbb0] sm:$0xf]
        %v1105 = vld [vmem:[%s292 + $0xbb4] sm:$0xf]
        %v1106 = vld [vmem:[%s292 + $0xbb8] sm:$0xf]
        %v1107 = vld [vmem:[%s292 + $0xbbc] sm:$0xf]
        %v1108 = vld [vmem:[%s292 + $0xbc0] sm:$0xf]
        %v1109 = vld [vmem:[%s292 + $0xbc4] sm:$0xf]
        %v1110 = vld [vmem:[%s292 + $0xbc8] sm:$0xf]
        %v1111 = vld [vmem:[%s292 + $0xbcc] sm:$0xf]
        %v1112 = vld [vmem:[%s292 + $0xbd0] sm:$0xf]
        %v1113 = vld [vmem:[%s292 + $0xbd4] sm:$0xf]
        %v1114 = vld [vmem:[%s292 + $0xbd8] sm:$0xf]
        %v1115 = vld [vmem:[%s292 + $0xbdc] sm:$0xf]
        %v1116 = vld [vmem:[%s292 + $0xbe0] sm:$0xf]
        %v1117 = vld [vmem:[%s292 + $0xbe4] sm:$0xf]
        %v1118 = vld [vmem:[%s292 + $0xbe8] sm:$0xf]
        %v1119 = vld [vmem:[%s292 + $0xbec] sm:$0xf]
        %v1120 = vld [vmem:[%s292 + $0xbf0] sm:$0xf]
        %v1121 = vld [vmem:[%s292 + $0xbf4] sm:$0xf]
        %v1122 = vld [vmem:[%s292 + $0xbf8] sm:$0xf]
        %v1123 = vld [vmem:[%s292 + $0xbfc] sm:$0xf]
        %v1124 = vld [vmem:[%s292 + $0xc00] sm:$0xf]
        %v1125 = vld [vmem:[%s292 + $0xc04] sm:$0xf]
        %v1126 = vld [vmem:[%s292 + $0xc08] sm:$0xf]
        %v1127 = vld [vmem:[%s292 + $0xc0c] sm:$0xf]
        %v1128 = vld [vmem:[%s292 + $0xc10] sm:$0xf]
        %v1129 = vld [vmem:[%s292 + $0xc14] sm:$0xf]
        %v1130 = vld [vmem:[%s292 + $0xc18] sm:$0xf]
        %v1131 = vld [vmem:[%s292 + $0xc1c] sm:$0xf]
        %v1132 = vld [vmem:[%s292 + $0xc20] sm:$0xf]
        %v1133 = vld [vmem:[%s292 + $0xc24] sm:$0xf]
        %v1134 = vld [vmem:[%s292 + $0xc28] sm:$0xf]
        %v1135 = vld [vmem:[%s292 + $0xc2c] sm:$0xf]
        %v1136 = vld [vmem:[%s292 + $0xc30] sm:$0xf]
        %v1137 = vld [vmem:[%s292 + $0xc34] sm:$0xf]
        %v1138 = vld [vmem:[%s292 + $0xc38] sm:$0xf]
        %v1139 = vld [vmem:[%s292 + $0xc3c] sm:$0xf]
        %v1147 = vcombine.high %v348, %v348
        %v1149 = vunpack.c.l.s4 1966171168
        %v1150 = vunpack.c.0.s8 %v1149
        %v1151 = vlaneseq
        %v1152 = vshrl.u32 %v1151, 7
        %v1153 = vsub.s32 %v1150, %v1152
        %v1154 = vrot.slane %v348, %v1153
        %v1156 = vunpack.c.l.s4 1966171168
        %v1157 = vunpack.c.0.s8 %v1156
        %v1158 = vlaneseq
        %v1159 = vshrl.u32 %v1158, 7
        %v1160 = vsub.s32 %v1157, %v1159
        %v1161 = vrot.slane %v1147, %v1160
        %v1162 = vcombine.high %v1154, %v1154
        %v1163 = vcombine.high %v1161, %v1161
        %v1165 = vunpack.c.l.s4 1966171168
        %v1166 = vunpack.c.0.s8 %v1165
        %v1167 = vlaneseq
        %v1168 = vshrl.u32 %v1167, 7
        %v1169 = vsub.s32 %v1166, %v1168
        %v1170 = vrot.slane %v1154, %v1169
        %v1172 = vunpack.c.l.s4 1966171168
        %v1173 = vunpack.c.0.s8 %v1172
        %v1174 = vlaneseq
        %v1175 = vshrl.u32 %v1174, 7
        %v1176 = vsub.s32 %v1173, %v1175
        %v1177 = vrot.slane %v1161, %v1176
        %v1179 = vunpack.c.l.s4 1966171168
        %v1180 = vunpack.c.0.s8 %v1179
        %v1181 = vlaneseq
        %v1182 = vshrl.u32 %v1181, 7
        %v1183 = vsub.s32 %v1180, %v1182
        %v1184 = vrot.slane %v1162, %v1183
        %v1186 = vunpack.c.l.s4 1966171168
        %v1187 = vunpack.c.0.s8 %v1186
        %v1188 = vlaneseq
        %v1189 = vshrl.u32 %v1188, 7
        %v1190 = vsub.s32 %v1187, %v1189
        %v1191 = vrot.slane %v1163, %v1190
        %v1192 = vcombine.high %v1170, %v1170
        %v1193 = vcombine.high %v1177, %v1177
        %v1194 = vcombine.high %v1184, %v1184
        %v1195 = vcombine.high %v1191, %v1191
        %v1196 = vcombine.high %v349, %v349
        %v1198 = vunpack.c.l.s4 1966171168
        %v1199 = vunpack.c.0.s8 %v1198
        %v1200 = vlaneseq
        %v1201 = vshrl.u32 %v1200, 7
        %v1202 = vsub.s32 %v1199, %v1201
        %v1203 = vrot.slane %v349, %v1202
        %v1205 = vunpack.c.l.s4 1966171168
        %v1206 = vunpack.c.0.s8 %v1205
        %v1207 = vlaneseq
        %v1208 = vshrl.u32 %v1207, 7
        %v1209 = vsub.s32 %v1206, %v1208
        %v1210 = vrot.slane %v1196, %v1209
        %v1211 = vcombine.high %v1203, %v1203
        %v1212 = vcombine.high %v1210, %v1210
        %v1214 = vunpack.c.l.s4 1966171168
        %v1215 = vunpack.c.0.s8 %v1214
        %v1216 = vlaneseq
        %v1217 = vshrl.u32 %v1216, 7
        %v1218 = vsub.s32 %v1215, %v1217
        %v1219 = vrot.slane %v1203, %v1218
        %v1221 = vunpack.c.l.s4 1966171168
        %v1222 = vunpack.c.0.s8 %v1221
        %v1223 = vlaneseq
        %v1224 = vshrl.u32 %v1223, 7
        %v1225 = vsub.s32 %v1222, %v1224
        %v1226 = vrot.slane %v1210, %v1225
        %v1228 = vunpack.c.l.s4 1966171168
        %v1229 = vunpack.c.0.s8 %v1228
        %v1230 = vlaneseq
        %v1231 = vshrl.u32 %v1230, 7
        %v1232 = vsub.s32 %v1229, %v1231
        %v1233 = vrot.slane %v1211, %v1232
        %v1235 = vunpack.c.l.s4 1966171168
        %v1236 = vunpack.c.0.s8 %v1235
        %v1237 = vlaneseq
        %v1238 = vshrl.u32 %v1237, 7
        %v1239 = vsub.s32 %v1236, %v1238
        %v1240 = vrot.slane %v1212, %v1239
        %v1241 = vcombine.high %v1219, %v1219
        %v1242 = vcombine.high %v1226, %v1226
        %v1243 = vcombine.high %v1233, %v1233
        %v1244 = vcombine.high %v1240, %v1240
        %v1245 = vcombine.high %v350, %v350
        %v1247 = vunpack.c.l.s4 1966171168
        %v1248 = vunpack.c.0.s8 %v1247
        %v1249 = vlaneseq
        %v1250 = vshrl.u32 %v1249, 7
        %v1251 = vsub.s32 %v1248, %v1250
        %v1252 = vrot.slane %v350, %v1251
        %v1254 = vunpack.c.l.s4 1966171168
        %v1255 = vunpack.c.0.s8 %v1254
        %v1256 = vlaneseq
        %v1257 = vshrl.u32 %v1256, 7
        %v1258 = vsub.s32 %v1255, %v1257
        %v1259 = vrot.slane %v1245, %v1258
        %v1260 = vcombine.high %v1252, %v1252
        %v1261 = vcombine.high %v1259, %v1259
        %v1263 = vunpack.c.l.s4 1966171168
        %v1264 = vunpack.c.0.s8 %v1263
        %v1265 = vlaneseq
        %v1266 = vshrl.u32 %v1265, 7
        %v1267 = vsub.s32 %v1264, %v1266
        %v1268 = vrot.slane %v1252, %v1267
        %v1270 = vunpack.c.l.s4 1966171168
        %v1271 = vunpack.c.0.s8 %v1270
        %v1272 = vlaneseq
        %v1273 = vshrl.u32 %v1272, 7
        %v1274 = vsub.s32 %v1271, %v1273
        %v1275 = vrot.slane %v1259, %v1274
        %v1277 = vunpack.c.l.s4 1966171168
        %v1278 = vunpack.c.0.s8 %v1277
        %v1279 = vlaneseq
        %v1280 = vshrl.u32 %v1279, 7
        %v1281 = vsub.s32 %v1278, %v1280
        %v1282 = vrot.slane %v1260, %v1281
        %v1284 = vunpack.c.l.s4 1966171168
        %v1285 = vunpack.c.0.s8 %v1284
        %v1286 = vlaneseq
        %v1287 = vshrl.u32 %v1286, 7
        %v1288 = vsub.s32 %v1285, %v1287
        %v1289 = vrot.slane %v1261, %v1288
        %v1290 = vcombine.high %v1268, %v1268
        %v1291 = vcombine.high %v1275, %v1275
        %v1292 = vcombine.high %v1282, %v1282
        %v1293 = vcombine.high %v1289, %v1289
        %v1294 = vcombine.high %v351, %v351
        %v1296 = vunpack.c.l.s4 1966171168
        %v1297 = vunpack.c.0.s8 %v1296
        %v1298 = vlaneseq
        %v1299 = vshrl.u32 %v1298, 7
        %v1300 = vsub.s32 %v1297, %v1299
        %v1301 = vrot.slane %v351, %v1300
        %v1303 = vunpack.c.l.s4 1966171168
        %v1304 = vunpack.c.0.s8 %v1303
        %v1305 = vlaneseq
        %v1306 = vshrl.u32 %v1305, 7
        %v1307 = vsub.s32 %v1304, %v1306
        %v1308 = vrot.slane %v1294, %v1307
        %v1309 = vcombine.high %v1301, %v1301
        %v1310 = vcombine.high %v1308, %v1308
        %v1312 = vunpack.c.l.s4 1966171168
        %v1313 = vunpack.c.0.s8 %v1312
        %v1314 = vlaneseq
        %v1315 = vshrl.u32 %v1314, 7
        %v1316 = vsub.s32 %v1313, %v1315
        %v1317 = vrot.slane %v1301, %v1316
        %v1319 = vunpack.c.l.s4 1966171168
        %v1320 = vunpack.c.0.s8 %v1319
        %v1321 = vlaneseq
        %v1322 = vshrl.u32 %v1321, 7
        %v1323 = vsub.s32 %v1320, %v1322
        %v1324 = vrot.slane %v1308, %v1323
        %v1326 = vunpack.c.l.s4 1966171168
        %v1327 = vunpack.c.0.s8 %v1326
        %v1328 = vlaneseq
        %v1329 = vshrl.u32 %v1328, 7
        %v1330 = vsub.s32 %v1327, %v1329
        %v1331 = vrot.slane %v1309, %v1330
        %v1333 = vunpack.c.l.s4 1966171168
        %v1334 = vunpack.c.0.s8 %v1333
        %v1335 = vlaneseq
        %v1336 = vshrl.u32 %v1335, 7
        %v1337 = vsub.s32 %v1334, %v1336
        %v1338 = vrot.slane %v1310, %v1337
        %v1339 = vcombine.high %v1317, %v1317
        %v1340 = vcombine.high %v1324, %v1324
        %v1341 = vcombine.high %v1331, %v1331
        %v1342 = vcombine.high %v1338, %v1338
        %v1343 = vcombine.high %v352, %v352
        %v1345 = vunpack.c.l.s4 1966171168
        %v1346 = vunpack.c.0.s8 %v1345
        %v1347 = vlaneseq
        %v1348 = vshrl.u32 %v1347, 7
        %v1349 = vsub.s32 %v1346, %v1348
        %v1350 = vrot.slane %v352, %v1349
        %v1352 = vunpack.c.l.s4 1966171168
        %v1353 = vunpack.c.0.s8 %v1352
        %v1354 = vlaneseq
        %v1355 = vshrl.u32 %v1354, 7
        %v1356 = vsub.s32 %v1353, %v1355
        %v1357 = vrot.slane %v1343, %v1356
        %v1358 = vcombine.high %v1350, %v1350
        %v1359 = vcombine.high %v1357, %v1357
        %v1361 = vunpack.c.l.s4 1966171168
        %v1362 = vunpack.c.0.s8 %v1361
        %v1363 = vlaneseq
        %v1364 = vshrl.u32 %v1363, 7
        %v1365 = vsub.s32 %v1362, %v1364
        %v1366 = vrot.slane %v1350, %v1365
        %v1368 = vunpack.c.l.s4 1966171168
        %v1369 = vunpack.c.0.s8 %v1368
        %v1370 = vlaneseq
        %v1371 = vshrl.u32 %v1370, 7
        %v1372 = vsub.s32 %v1369, %v1371
        %v1373 = vrot.slane %v1357, %v1372
        %v1375 = vunpack.c.l.s4 1966171168
        %v1376 = vunpack.c.0.s8 %v1375
        %v1377 = vlaneseq
        %v1378 = vshrl.u32 %v1377, 7
        %v1379 = vsub.s32 %v1376, %v1378
        %v1380 = vrot.slane %v1358, %v1379
        %v1382 = vunpack.c.l.s4 1966171168
        %v1383 = vunpack.c.0.s8 %v1382
        %v1384 = vlaneseq
        %v1385 = vshrl.u32 %v1384, 7
        %v1386 = vsub.s32 %v1383, %v1385
        %v1387 = vrot.slane %v1359, %v1386
        %v1388 = vcombine.high %v1366, %v1366
        %v1389 = vcombine.high %v1373, %v1373
        %v1390 = vcombine.high %v1380, %v1380
        %v1391 = vcombine.high %v1387, %v1387
        %v1392 = vcombine.high %v353, %v353
        %v1394 = vunpack.c.l.s4 1966171168
        %v1395 = vunpack.c.0.s8 %v1394
        %v1396 = vlaneseq
        %v1397 = vshrl.u32 %v1396, 7
        %v1398 = vsub.s32 %v1395, %v1397
        %v1399 = vrot.slane %v353, %v1398
        %v1401 = vunpack.c.l.s4 1966171168
        %v1402 = vunpack.c.0.s8 %v1401
        %v1403 = vlaneseq
        %v1404 = vshrl.u32 %v1403, 7
        %v1405 = vsub.s32 %v1402, %v1404
        %v1406 = vrot.slane %v1392, %v1405
        %v1407 = vcombine.high %v1399, %v1399
        %v1408 = vcombine.high %v1406, %v1406
        %v1410 = vunpack.c.l.s4 1966171168
        %v1411 = vunpack.c.0.s8 %v1410
        %v1412 = vlaneseq
        %v1413 = vshrl.u32 %v1412, 7
        %v1414 = vsub.s32 %v1411, %v1413
        %v1415 = vrot.slane %v1399, %v1414
        %v1417 = vunpack.c.l.s4 1966171168
        %v1418 = vunpack.c.0.s8 %v1417
        %v1419 = vlaneseq
        %v1420 = vshrl.u32 %v1419, 7
        %v1421 = vsub.s32 %v1418, %v1420
        %v1422 = vrot.slane %v1406, %v1421
        %v1424 = vunpack.c.l.s4 1966171168
        %v1425 = vunpack.c.0.s8 %v1424
        %v1426 = vlaneseq
        %v1427 = vshrl.u32 %v1426, 7
        %v1428 = vsub.s32 %v1425, %v1427
        %v1429 = vrot.slane %v1407, %v1428
        %v1431 = vunpack.c.l.s4 1966171168
        %v1432 = vunpack.c.0.s8 %v1431
        %v1433 = vlaneseq
        %v1434 = vshrl.u32 %v1433, 7
        %v1435 = vsub.s32 %v1432, %v1434
        %v1436 = vrot.slane %v1408, %v1435
        %v1437 = vcombine.high %v1415, %v1415
        %v1438 = vcombine.high %v1422, %v1422
        %v1439 = vcombine.high %v1429, %v1429
        %v1440 = vcombine.high %v1436, %v1436
        %v1442 = vunpack.c.l.s4 1966171168
        %v1443 = vunpack.c.0.s8 %v1442
        %v1444 = vlaneseq
        %v1445 = vshrl.u32 %v1444, 7
        %v1446 = vsub.s32 %v1443, %v1445
        %v1447 = vrot.slane %v354, %v1446
        %v1449 = vunpack.c.l.s4 1966171168
        %v1450 = vunpack.c.0.s8 %v1449
        %v1451 = vlaneseq
        %v1452 = vshrl.u32 %v1451, 7
        %v1453 = vsub.s32 %v1450, %v1452
        %v1454 = vrot.slane %v1447, %v1453
        %v2288 = vunpack.c.l.b16 %v356
        %v2289 = vunpack.c.l.b16 %v357
        %v2290 = vunpack.c.l.b16 %v358
        %v2291 = vunpack.c.l.b16 %v359
        %v2292 = vunpack.c.l.b16 %v360
        %v2293 = vunpack.c.l.b16 %v361
        %v2294 = vunpack.c.l.b16 %v362
        %v2295 = vunpack.c.l.b16 %v363
        %v2296 = vunpack.c.l.b16 %v364
        %v2297 = vunpack.c.l.b16 %v365
        %v2298 = vunpack.c.l.b16 %v366
        %v2299 = vunpack.c.l.b16 %v367
        %v2300 = vunpack.c.l.b16 %v368
        %v2301 = vunpack.c.l.b16 %v369
        %v2302 = vunpack.c.l.b16 %v370
        %v2303 = vunpack.c.l.b16 %v371
        %v2304 = vunpack.c.l.b16 %v372
        %v2305 = vunpack.c.l.b16 %v373
        %v2306 = vunpack.c.l.b16 %v374
        %v2307 = vunpack.c.l.b16 %v375
        %v2308 = vunpack.c.l.b16 %v376
        %v2309 = vunpack.c.l.b16 %v377
        %v2310 = vunpack.c.l.b16 %v378
        %v2311 = vunpack.c.l.b16 %v379
        %v2312 = vunpack.c.l.b16 %v380
        %v2313 = vunpack.c.l.b16 %v381
        %v2314 = vunpack.c.l.b16 %v382
        %v2315 = vunpack.c.l.b16 %v383
        %v2316 = vunpack.c.l.b16 %v384
        %v2317 = vunpack.c.l.b16 %v385
        %v2318 = vunpack.c.l.b16 %v386
        %v2319 = vunpack.c.l.b16 %v387
        %v2320 = vunpack.c.l.b16 %v388
        %v2321 = vunpack.c.l.b16 %v389
        %v2322 = vunpack.c.l.b16 %v390
        %v2323 = vunpack.c.l.b16 %v391
        %v2324 = vunpack.c.l.b16 %v392
        %v2325 = vunpack.c.l.b16 %v393
        %v2326 = vunpack.c.l.b16 %v394
        %v2327 = vunpack.c.l.b16 %v395
        %v2328 = vunpack.c.l.b16 %v396
        %v2329 = vunpack.c.l.b16 %v397
        %v2330 = vunpack.c.l.b16 %v398
        %v2331 = vunpack.c.l.b16 %v399
        %v2332 = vunpack.c.l.b16 %v400
        %v2333 = vunpack.c.l.b16 %v401
        %v2334 = vunpack.c.l.b16 %v402
        %v2335 = vunpack.c.l.b16 %v403
        %v2336 = vunpack.c.l.b16 %v404
        %v2337 = vunpack.c.l.b16 %v405
        %v2338 = vunpack.c.l.b16 %v406
        %v2339 = vunpack.c.l.b16 %v407
        %v2340 = vunpack.c.l.b16 %v408
        %v2341 = vunpack.c.l.b16 %v409
        %v2342 = vunpack.c.l.b16 %v410
        %v2343 = vunpack.c.l.b16 %v411
        %v2344 = vunpack.c.l.b16 %v412
        %v2345 = vunpack.c.l.b16 %v413
        %v2346 = vunpack.c.l.b16 %v414
        %v2347 = vunpack.c.l.b16 %v415
        %v2348 = vunpack.c.l.b16 %v416
        %v2349 = vunpack.c.l.b16 %v417
        %v2350 = vunpack.c.l.b16 %v418
        %v2351 = vunpack.c.l.b16 %v419
        %v2352 = vunpack.c.l.b16 %v420
        %v2353 = vunpack.c.l.b16 %v421
        %v2354 = vunpack.c.l.b16 %v422
        %v2355 = vunpack.c.l.b16 %v423
        %v2356 = vunpack.c.l.b16 %v424
        %v2357 = vunpack.c.l.b16 %v425
        %v2358 = vunpack.c.l.b16 %v426
        %v2359 = vunpack.c.l.b16 %v427
        %v2360 = vunpack.c.l.b16 %v428
        %v2361 = vunpack.c.l.b16 %v429
        %v2362 = vunpack.c.l.b16 %v430
        %v2363 = vunpack.c.l.b16 %v431
        %v2364 = vunpack.c.l.b16 %v432
        %v2365 = vunpack.c.l.b16 %v433
        %v2366 = vunpack.c.l.b16 %v434
        %v2367 = vunpack.c.l.b16 %v435
        %v2368 = vunpack.c.l.b16 %v436
        %v2369 = vunpack.c.l.b16 %v437
        %v2370 = vunpack.c.l.b16 %v438
        %v2371 = vunpack.c.l.b16 %v439
        %v2372 = vunpack.c.l.b16 %v440
        %v2373 = vunpack.c.l.b16 %v441
        %v2374 = vunpack.c.l.b16 %v442
        %v2375 = vunpack.c.l.b16 %v443
        %v2376 = vunpack.c.l.b16 %v444
        %v2377 = vunpack.c.l.b16 %v445
        %v2378 = vunpack.c.l.b16 %v446
        %v2379 = vunpack.c.l.b16 %v447
        %v2380 = vunpack.c.l.b16 %v448
        %v2381 = vunpack.c.l.b16 %v449
        %v2382 = vunpack.c.l.b16 %v450
        %v2383 = vunpack.c.l.b16 %v451
        %v2384 = vunpack.c.l.b16 %v452
        %v2385 = vunpack.c.l.b16 %v453
        %v2386 = vunpack.c.l.b16 %v454
        %v2387 = vunpack.c.l.b16 %v455
        %v2388 = vunpack.c.l.b16 %v456
        %v2389 = vunpack.c.l.b16 %v457
        %v2390 = vunpack.c.l.b16 %v458
        %v2391 = vunpack.c.l.b16 %v459
        %v2392 = vunpack.c.l.b16 %v460
        %v2393 = vunpack.c.l.b16 %v461
        %v2394 = vunpack.c.l.b16 %v462
        %v2395 = vunpack.c.l.b16 %v463
        %v2396 = vunpack.c.l.b16 %v464
        %v2397 = vunpack.c.l.b16 %v465
        %v2398 = vunpack.c.l.b16 %v466
        %v2399 = vunpack.c.l.b16 %v467
        %v2400 = vunpack.c.l.b16 %v468
        %v2401 = vunpack.c.l.b16 %v469
        %v2402 = vunpack.c.l.b16 %v470
        %v2403 = vunpack.c.l.b16 %v471
        %v2404 = vunpack.c.l.b16 %v472
        %v2405 = vunpack.c.l.b16 %v473
        %v2406 = vunpack.c.l.b16 %v474
        %v2407 = vunpack.c.l.b16 %v475
        %v2408 = vunpack.c.l.b16 %v476
        %v2409 = vunpack.c.l.b16 %v477
        %v2410 = vunpack.c.l.b16 %v478
        %v2411 = vunpack.c.l.b16 %v479
        %v2412 = vunpack.c.l.b16 %v480
        %v2413 = vunpack.c.l.b16 %v481
        %v2414 = vunpack.c.l.b16 %v482
        %v2415 = vunpack.c.l.b16 %v483
        %v2416 = vunpack.c.l.b16 %v484
        %v2417 = vunpack.c.l.b16 %v485
        %v2418 = vunpack.c.l.b16 %v486
        %v2419 = vunpack.c.l.b16 %v487
        %v2420 = vunpack.c.l.b16 %v488
        %v2421 = vunpack.c.l.b16 %v489
        %v2422 = vunpack.c.l.b16 %v490
        %v2423 = vunpack.c.l.b16 %v491
        %v2424 = vunpack.c.l.b16 %v492
        %v2425 = vunpack.c.l.b16 %v493
        %v2426 = vunpack.c.l.b16 %v494
        %v2427 = vunpack.c.l.b16 %v495
        %v2428 = vunpack.c.l.b16 %v496
        %v2429 = vunpack.c.l.b16 %v497
        %v2430 = vunpack.c.l.b16 %v498
        %v2431 = vunpack.c.l.b16 %v499
        %v2432 = vunpack.c.l.b16 %v500
        %v2433 = vunpack.c.l.b16 %v501
        %v2434 = vunpack.c.l.b16 %v502
        %v2435 = vunpack.c.l.b16 %v503
        %v2436 = vunpack.c.l.b16 %v504
        %v2437 = vunpack.c.l.b16 %v505
        %v2438 = vunpack.c.l.b16 %v506
        %v2439 = vunpack.c.l.b16 %v507
        %v2440 = vunpack.c.l.b16 %v508
        %v2441 = vunpack.c.l.b16 %v509
        %v2442 = vunpack.c.l.b16 %v510
        %v2443 = vunpack.c.l.b16 %v511
        %v2444 = vunpack.c.l.b16 %v512
        %v2445 = vunpack.c.l.b16 %v513
        %v2446 = vunpack.c.l.b16 %v514
        %v2447 = vunpack.c.l.b16 %v515
        %v2448 = vunpack.c.l.b16 %v516
        %v2449 = vunpack.c.l.b16 %v517
        %v2450 = vunpack.c.l.b16 %v518
        %v2451 = vunpack.c.l.b16 %v519
        %v2452 = vunpack.c.l.b16 %v520
        %v2453 = vunpack.c.l.b16 %v521
        %v2454 = vunpack.c.l.b16 %v522
        %v2455 = vunpack.c.l.b16 %v523
        %v2456 = vunpack.c.l.b16 %v524
        %v2457 = vunpack.c.l.b16 %v525
        %v2458 = vunpack.c.l.b16 %v526
        %v2459 = vunpack.c.l.b16 %v527
        %v2460 = vunpack.c.l.b16 %v528
        %v2461 = vunpack.c.l.b16 %v529
        %v2462 = vunpack.c.l.b16 %v530
        %v2463 = vunpack.c.l.b16 %v531
        %v2464 = vunpack.c.l.b16 %v532
        %v2465 = vunpack.c.l.b16 %v533
        %v2466 = vunpack.c.l.b16 %v534
        %v2467 = vunpack.c.l.b16 %v535
        %v2468 = vunpack.c.l.b16 %v536
        %v2469 = vunpack.c.l.b16 %v537
        %v2470 = vunpack.c.l.b16 %v538
        %v2471 = vunpack.c.l.b16 %v539
        %v2472 = vunpack.c.l.b16 %v540
        %v2473 = vunpack.c.l.b16 %v541
        %v2474 = vunpack.c.l.b16 %v542
        %v2475 = vunpack.c.l.b16 %v543
        %v2476 = vunpack.c.l.b16 %v544
        %v2477 = vunpack.c.l.b16 %v545
        %v2478 = vunpack.c.l.b16 %v546
        %v2479 = vunpack.c.l.b16 %v547
        %v2480 = vunpack.c.l.b16 %v548
        %v2481 = vunpack.c.l.b16 %v549
        %v2482 = vunpack.c.l.b16 %v550
        %v2483 = vunpack.c.l.b16 %v551
        %v2484 = vunpack.c.l.b16 %v552
        %v2485 = vunpack.c.l.b16 %v553
        %v2486 = vunpack.c.l.b16 %v554
        %v2487 = vunpack.c.l.b16 %v555
        %v2488 = vunpack.c.l.b16 %v556
        %v2489 = vunpack.c.l.b16 %v557
        %v2490 = vunpack.c.l.b16 %v558
        %v2491 = vunpack.c.l.b16 %v559
        %v2492 = vunpack.c.l.b16 %v560
        %v2493 = vunpack.c.l.b16 %v561
        %v2494 = vunpack.c.l.b16 %v562
        %v2495 = vunpack.c.l.b16 %v563
        %v2496 = vunpack.c.l.b16 %v564
        %v2497 = vunpack.c.l.b16 %v565
        %v2498 = vunpack.c.l.b16 %v566
        %v2499 = vunpack.c.l.b16 %v567
        %v2500 = vunpack.c.l.b16 %v568
        %v2501 = vunpack.c.l.b16 %v569
        %v2502 = vunpack.c.l.b16 %v570
        %v2503 = vunpack.c.l.b16 %v571
        %v2504 = vunpack.c.l.b16 %v572
        %v2505 = vunpack.c.l.b16 %v573
        %v2506 = vunpack.c.l.b16 %v574
        %v2507 = vunpack.c.l.b16 %v575
        %v2508 = vunpack.c.l.b16 %v576
        %v2509 = vunpack.c.l.b16 %v577
        %v2510 = vunpack.c.l.b16 %v578
        %v2511 = vunpack.c.l.b16 %v579
        %v2512 = vunpack.c.l.b16 %v580
        %v2513 = vunpack.c.l.b16 %v581
        %v2514 = vunpack.c.l.b16 %v582
        %v2515 = vunpack.c.l.b16 %v583
        %v2516 = vunpack.c.l.b16 %v584
        %v2517 = vunpack.c.l.b16 %v585
        %v2518 = vunpack.c.l.b16 %v586
        %v2519 = vunpack.c.l.b16 %v587
        %v2520 = vunpack.c.l.b16 %v588
        %v2521 = vunpack.c.l.b16 %v589
        %v2522 = vunpack.c.l.b16 %v590
        %v2523 = vunpack.c.l.b16 %v591
        %v2524 = vunpack.c.l.b16 %v592
        %v2525 = vunpack.c.l.b16 %v593
        %v2526 = vunpack.c.l.b16 %v594
        %v2527 = vunpack.c.l.b16 %v595
        %v2528 = vunpack.c.l.b16 %v596
        %v2529 = vunpack.c.l.b16 %v597
        %v2530 = vunpack.c.l.b16 %v598
        %v2531 = vunpack.c.l.b16 %v599
        %v2532 = vunpack.c.l.b16 %v600
        %v2533 = vunpack.c.l.b16 %v601
        %v2534 = vunpack.c.l.b16 %v602
        %v2535 = vunpack.c.l.b16 %v603
        %v2536 = vunpack.c.l.b16 %v604
        %v2537 = vunpack.c.l.b16 %v605
        %v2538 = vunpack.c.l.b16 %v606
        %v2539 = vunpack.c.l.b16 %v607
        %v2540 = vunpack.c.l.b16 %v608
        %v2541 = vunpack.c.l.b16 %v609
        %v2542 = vunpack.c.l.b16 %v610
        %v2543 = vunpack.c.l.b16 %v611
        %v2544 = vunpack.c.l.b16 %v612
        %v2545 = vunpack.c.l.b16 %v613
        %v2546 = vunpack.c.l.b16 %v614
        %v2547 = vunpack.c.l.b16 %v615
        %v2548 = vunpack.c.l.b16 %v616
        %v2549 = vunpack.c.l.b16 %v617
        %v2550 = vunpack.c.l.b16 %v618
        %v2551 = vunpack.c.l.b16 %v619
        %v2552 = vunpack.c.l.b16 %v620
        %v2553 = vunpack.c.l.b16 %v621
        %v2554 = vunpack.c.l.b16 %v622
        %v2555 = vunpack.c.l.b16 %v623
        %v2556 = vunpack.c.l.b16 %v624
        %v2557 = vunpack.c.l.b16 %v625
        %v2558 = vunpack.c.l.b16 %v626
        %v2559 = vunpack.c.l.b16 %v627
        %v2560 = vunpack.c.l.b16 %v628
        %v2561 = vunpack.c.l.b16 %v629
        %v2562 = vunpack.c.l.b16 %v630
        %v2563 = vunpack.c.l.b16 %v631
        %v2564 = vunpack.c.l.b16 %v632
        %v2565 = vunpack.c.l.b16 %v633
        %v2566 = vunpack.c.l.b16 %v634
        %v2567 = vunpack.c.l.b16 %v635
        %v2568 = vunpack.c.l.b16 %v636
        %v2569 = vunpack.c.l.b16 %v637
        %v2570 = vunpack.c.l.b16 %v638
        %v2571 = vunpack.c.l.b16 %v639
        %v2572 = vunpack.c.l.b16 %v640
        %v2573 = vunpack.c.l.b16 %v641
        %v2574 = vunpack.c.l.b16 %v642
        %v2575 = vunpack.c.l.b16 %v643
        %v2576 = vunpack.c.l.b16 %v644
        %v2577 = vunpack.c.l.b16 %v645
        %v2578 = vunpack.c.l.b16 %v646
        %v2579 = vunpack.c.l.b16 %v647
        %v2580 = vunpack.c.l.b16 %v648
        %v2581 = vunpack.c.l.b16 %v649
        %v2582 = vunpack.c.l.b16 %v650
        %v2583 = vunpack.c.l.b16 %v651
        %v2584 = vunpack.c.l.b16 %v652
        %v2585 = vunpack.c.l.b16 %v653
        %v2586 = vunpack.c.l.b16 %v654
        %v2587 = vunpack.c.l.b16 %v655
        %v2588 = vunpack.c.l.b16 %v656
        %v2589 = vunpack.c.l.b16 %v657
        %v2590 = vunpack.c.l.b16 %v658
        %v2591 = vunpack.c.l.b16 %v659
        %v2592 = vunpack.c.l.b16 %v660
        %v2593 = vunpack.c.l.b16 %v661
        %v2594 = vunpack.c.l.b16 %v662
        %v2595 = vunpack.c.l.b16 %v663
        %v2596 = vunpack.c.l.b16 %v664
        %v2597 = vunpack.c.l.b16 %v665
        %v2598 = vunpack.c.l.b16 %v666
        %v2599 = vunpack.c.l.b16 %v667
        %v2600 = vunpack.c.l.b16 %v668
        %v2601 = vunpack.c.l.b16 %v669
        %v2602 = vunpack.c.l.b16 %v670
        %v2603 = vunpack.c.l.b16 %v671
        %v2604 = vunpack.c.l.b16 %v672
        %v2605 = vunpack.c.l.b16 %v673
        %v2606 = vunpack.c.l.b16 %v674
        %v2607 = vunpack.c.l.b16 %v675
        %v2608 = vunpack.c.l.b16 %v676
        %v2609 = vunpack.c.l.b16 %v677
        %v2610 = vunpack.c.l.b16 %v678
        %v2611 = vunpack.c.l.b16 %v679
        %v2612 = vunpack.c.l.b16 %v680
        %v2613 = vunpack.c.l.b16 %v681
        %v2614 = vunpack.c.l.b16 %v682
        %v2615 = vunpack.c.l.b16 %v683
        %v2616 = vunpack.c.l.b16 %v684
        %v2617 = vunpack.c.l.b16 %v685
        %v2618 = vunpack.c.l.b16 %v686
        %v2619 = vunpack.c.l.b16 %v687
        %v2620 = vunpack.c.l.b16 %v688
        %v2621 = vunpack.c.l.b16 %v689
        %v2622 = vunpack.c.l.b16 %v690
        %v2623 = vunpack.c.l.b16 %v691
        %v2624 = vunpack.c.l.b16 %v692
        %v2625 = vunpack.c.l.b16 %v693
        %v2626 = vunpack.c.l.b16 %v694
        %v2627 = vunpack.c.l.b16 %v695
        %v2628 = vunpack.c.l.b16 %v696
        %v2629 = vunpack.c.l.b16 %v697
        %v2630 = vunpack.c.l.b16 %v698
        %v2631 = vunpack.c.l.b16 %v699
        %v2632 = vunpack.c.l.b16 %v700
        %v2633 = vunpack.c.l.b16 %v701
        %v2634 = vunpack.c.l.b16 %v702
        %v2635 = vunpack.c.l.b16 %v703
        %v2636 = vunpack.c.l.b16 %v704
        %v2637 = vunpack.c.l.b16 %v705
        %v2638 = vunpack.c.l.b16 %v706
        %v2639 = vunpack.c.l.b16 %v707
        %v2640 = vunpack.c.l.b16 %v708
        %v2641 = vunpack.c.l.b16 %v709
        %v2642 = vunpack.c.l.b16 %v710
        %v2643 = vunpack.c.l.b16 %v711
        %v2644 = vunpack.c.l.b16 %v712
        %v2645 = vunpack.c.l.b16 %v713
        %v2646 = vunpack.c.l.b16 %v714
        %v2647 = vunpack.c.l.b16 %v715
        %v2648 = vunpack.c.l.b16 %v716
        %v2649 = vunpack.c.l.b16 %v717
        %v2650 = vunpack.c.l.b16 %v718
        %v2651 = vunpack.c.l.b16 %v719
        %v2652 = vunpack.c.l.b16 %v720
        %v2653 = vunpack.c.l.b16 %v721
        %v2654 = vunpack.c.l.b16 %v722
        %v2655 = vunpack.c.l.b16 %v723
        %v2656 = vunpack.c.l.b16 %v724
        %v2657 = vunpack.c.l.b16 %v725
        %v2658 = vunpack.c.l.b16 %v726
        %v2659 = vunpack.c.l.b16 %v727
        %v2660 = vunpack.c.l.b16 %v728
        %v2661 = vunpack.c.l.b16 %v729
        %v2662 = vunpack.c.l.b16 %v730
        %v2663 = vunpack.c.l.b16 %v731
        %v2664 = vunpack.c.l.b16 %v732
        %v2665 = vunpack.c.l.b16 %v733
        %v2666 = vunpack.c.l.b16 %v734
        %v2667 = vunpack.c.l.b16 %v735
        %v2668 = vunpack.c.l.b16 %v736
        %v2669 = vunpack.c.l.b16 %v737
        %v2670 = vunpack.c.l.b16 %v738
        %v2671 = vunpack.c.l.b16 %v739
        %v2672 = vunpack.c.l.b16 %v740
        %v2673 = vunpack.c.l.b16 %v741
        %v2674 = vunpack.c.l.b16 %v742
        %v2675 = vunpack.c.l.b16 %v743
        %v2676 = vunpack.c.l.b16 %v744
        %v2677 = vunpack.c.l.b16 %v745
        %v2678 = vunpack.c.l.b16 %v746
        %v2679 = vunpack.c.l.b16 %v747
        %v2680 = vunpack.c.l.b16 %v748
        %v2681 = vunpack.c.l.b16 %v749
        %v2682 = vunpack.c.l.b16 %v750
        %v2683 = vunpack.c.l.b16 %v751
        %v2684 = vunpack.c.l.b16 %v752
        %v2685 = vunpack.c.l.b16 %v753
        %v2686 = vunpack.c.l.b16 %v754
        %v2687 = vunpack.c.l.b16 %v755
        %v2688 = vunpack.c.l.b16 %v756
        %v2689 = vunpack.c.l.b16 %v757
        %v2690 = vunpack.c.l.b16 %v758
        %v2691 = vunpack.c.l.b16 %v759
        %v2692 = vunpack.c.l.b16 %v760
        %v2693 = vunpack.c.l.b16 %v761
        %v2694 = vunpack.c.l.b16 %v762
        %v2695 = vunpack.c.l.b16 %v763
        %v2696 = vunpack.c.l.b16 %v764
        %v2697 = vunpack.c.l.b16 %v765
        %v2698 = vunpack.c.l.b16 %v766
        %v2699 = vunpack.c.l.b16 %v767
        %v2700 = vunpack.c.l.b16 %v768
        %v2701 = vunpack.c.l.b16 %v769
        %v2702 = vunpack.c.l.b16 %v770
        %v2703 = vunpack.c.l.b16 %v771
        %v2704 = vunpack.c.l.b16 %v772
        %v2705 = vunpack.c.l.b16 %v773
        %v2706 = vunpack.c.l.b16 %v774
        %v2707 = vunpack.c.l.b16 %v775
        %v2708 = vunpack.c.l.b16 %v776
        %v2709 = vunpack.c.l.b16 %v777
        %v2710 = vunpack.c.l.b16 %v778
        %v2711 = vunpack.c.l.b16 %v779
        %v2712 = vunpack.c.l.b16 %v780
        %v2713 = vunpack.c.l.b16 %v781
        %v2714 = vunpack.c.l.b16 %v782
        %v2715 = vunpack.c.l.b16 %v783
        %v2716 = vunpack.c.l.b16 %v784
        %v2717 = vunpack.c.l.b16 %v785
        %v2718 = vunpack.c.l.b16 %v786
        %v2719 = vunpack.c.l.b16 %v787
        %v2720 = vunpack.c.l.b16 %v788
        %v2721 = vunpack.c.l.b16 %v789
        %v2722 = vunpack.c.l.b16 %v790
        %v2723 = vunpack.c.l.b16 %v791
        %v2724 = vunpack.c.l.b16 %v792
        %v2725 = vunpack.c.l.b16 %v793
        %v2726 = vunpack.c.l.b16 %v794
        %v2727 = vunpack.c.l.b16 %v795
        %v2728 = vunpack.c.l.b16 %v796
        %v2729 = vunpack.c.l.b16 %v797
        %v2730 = vunpack.c.l.b16 %v798
        %v2731 = vunpack.c.l.b16 %v799
        %v2732 = vunpack.c.l.b16 %v800
        %v2733 = vunpack.c.l.b16 %v801
        %v2734 = vunpack.c.l.b16 %v802
        %v2735 = vunpack.c.l.b16 %v803
        %v2736 = vunpack.c.l.b16 %v804
        %v2737 = vunpack.c.l.b16 %v805
        %v2738 = vunpack.c.l.b16 %v806
        %v2739 = vunpack.c.l.b16 %v807
        %v2740 = vunpack.c.l.b16 %v808
        %v2741 = vunpack.c.l.b16 %v809
        %v2742 = vunpack.c.l.b16 %v810
        %v2743 = vunpack.c.l.b16 %v811
        %v2744 = vunpack.c.l.b16 %v812
        %v2745 = vunpack.c.l.b16 %v813
        %v2746 = vunpack.c.l.b16 %v814
        %v2747 = vunpack.c.l.b16 %v815
        %v2748 = vunpack.c.l.b16 %v816
        %v2749 = vunpack.c.l.b16 %v817
        %v2750 = vunpack.c.l.b16 %v818
        %v2751 = vunpack.c.l.b16 %v819
        %v2752 = vunpack.c.l.b16 %v820
        %v2753 = vunpack.c.l.b16 %v821
        %v2754 = vunpack.c.l.b16 %v822
        %v2755 = vunpack.c.l.b16 %v823
        %v2756 = vunpack.c.l.b16 %v824
        %v2757 = vunpack.c.l.b16 %v825
        %v2758 = vunpack.c.l.b16 %v826
        %v2759 = vunpack.c.l.b16 %v827
        %v2760 = vunpack.c.l.b16 %v828
        %v2761 = vunpack.c.l.b16 %v829
        %v2762 = vunpack.c.l.b16 %v830
        %v2763 = vunpack.c.l.b16 %v831
        %v2764 = vunpack.c.l.b16 %v832
        %v2765 = vunpack.c.l.b16 %v833
        %v2766 = vunpack.c.l.b16 %v834
        %v2767 = vunpack.c.l.b16 %v835
        %v2768 = vunpack.c.l.b16 %v836
        %v2769 = vunpack.c.l.b16 %v837
        %v2770 = vunpack.c.l.b16 %v838
        %v2771 = vunpack.c.l.b16 %v839
        %v2772 = vunpack.c.l.b16 %v840
        %v2773 = vunpack.c.l.b16 %v841
        %v2774 = vunpack.c.l.b16 %v842
        %v2775 = vunpack.c.l.b16 %v843
        %v2776 = vunpack.c.l.b16 %v844
        %v2777 = vunpack.c.l.b16 %v845
        %v2778 = vunpack.c.l.b16 %v846
        %v2779 = vunpack.c.l.b16 %v847
        %v2780 = vunpack.c.l.b16 %v848
        %v2781 = vunpack.c.l.b16 %v849
        %v2782 = vunpack.c.l.b16 %v850
        %v2783 = vunpack.c.l.b16 %v851
        %v2784 = vunpack.c.l.b16 %v852
        %v2785 = vunpack.c.l.b16 %v853
        %v2786 = vunpack.c.l.b16 %v854
        %v2787 = vunpack.c.l.b16 %v855
        %v2788 = vunpack.c.l.b16 %v856
        %v2789 = vunpack.c.l.b16 %v857
        %v2790 = vunpack.c.l.b16 %v858
        %v2791 = vunpack.c.l.b16 %v859
        %v2792 = vunpack.c.l.b16 %v860
        %v2793 = vunpack.c.l.b16 %v861
        %v2794 = vunpack.c.l.b16 %v862
        %v2795 = vunpack.c.l.b16 %v863
        %v2796 = vunpack.c.l.b16 %v864
        %v2797 = vunpack.c.l.b16 %v865
        %v2798 = vunpack.c.l.b16 %v866
        %v2799 = vunpack.c.l.b16 %v867
        %v2800 = vunpack.c.l.b16 %v868
        %v2801 = vunpack.c.l.b16 %v869
        %v2802 = vunpack.c.l.b16 %v870
        %v2803 = vunpack.c.l.b16 %v871
        %v2804 = vunpack.c.l.b16 %v872
        %v2805 = vunpack.c.l.b16 %v873
        %v2806 = vunpack.c.l.b16 %v874
        %v2807 = vunpack.c.l.b16 %v875
        %v2808 = vunpack.c.l.b16 %v876
        %v2809 = vunpack.c.l.b16 %v877
        %v2810 = vunpack.c.l.b16 %v878
        %v2811 = vunpack.c.l.b16 %v879
        %v2812 = vunpack.c.l.b16 %v880
        %v2813 = vunpack.c.l.b16 %v881
        %v2814 = vunpack.c.l.b16 %v882
        %v2815 = vunpack.c.l.b16 %v883
        %v2816 = vunpack.c.l.b16 %v884
        %v2817 = vunpack.c.l.b16 %v885
        %v2818 = vunpack.c.l.b16 %v886
        %v2819 = vunpack.c.l.b16 %v887
        %v2820 = vunpack.c.l.b16 %v888
        %v2821 = vunpack.c.l.b16 %v889
        %v2822 = vunpack.c.l.b16 %v890
        %v2823 = vunpack.c.l.b16 %v891
        %v2824 = vunpack.c.l.b16 %v892
        %v2825 = vunpack.c.l.b16 %v893
        %v2826 = vunpack.c.l.b16 %v894
        %v2827 = vunpack.c.l.b16 %v895
        %v2828 = vunpack.c.l.b16 %v896
        %v2829 = vunpack.c.l.b16 %v897
        %v2830 = vunpack.c.l.b16 %v898
        %v2831 = vunpack.c.l.b16 %v899
        %v2832 = vunpack.c.l.b16 %v900
        %v2833 = vunpack.c.l.b16 %v901
        %v2834 = vunpack.c.l.b16 %v902
        %v2835 = vunpack.c.l.b16 %v903
        %v2836 = vunpack.c.l.b16 %v904
        %v2837 = vunpack.c.l.b16 %v905
        %v2838 = vunpack.c.l.b16 %v906
        %v2839 = vunpack.c.l.b16 %v907
        %v2840 = vunpack.c.l.b16 %v908
        %v2841 = vunpack.c.l.b16 %v909
        %v2842 = vunpack.c.l.b16 %v910
        %v2843 = vunpack.c.l.b16 %v911
        %v2844 = vunpack.c.l.b16 %v912
        %v2845 = vunpack.c.l.b16 %v913
        %v2846 = vunpack.c.l.b16 %v914
        %v2847 = vunpack.c.l.b16 %v915
        %v2848 = vunpack.c.l.b16 %v916
        %v2849 = vunpack.c.l.b16 %v917
        %v2850 = vunpack.c.l.b16 %v918
        %v2851 = vunpack.c.l.b16 %v919
        %v2852 = vunpack.c.l.b16 %v920
        %v2853 = vunpack.c.l.b16 %v921
        %v2854 = vunpack.c.l.b16 %v922
        %v2855 = vunpack.c.l.b16 %v923
        %v2856 = vunpack.c.l.b16 %v924
        %v2857 = vunpack.c.l.b16 %v925
        %v2858 = vunpack.c.l.b16 %v926
        %v2859 = vunpack.c.l.b16 %v927
        %v2860 = vunpack.c.l.b16 %v928
        %v2861 = vunpack.c.l.b16 %v929
        %v2862 = vunpack.c.l.b16 %v930
        %v2863 = vunpack.c.l.b16 %v931
        %v2864 = vunpack.c.l.b16 %v932
        %v2865 = vunpack.c.l.b16 %v933
        %v2866 = vunpack.c.l.b16 %v934
        %v2867 = vunpack.c.l.b16 %v935
        %v2868 = vunpack.c.l.b16 %v936
        %v2869 = vunpack.c.l.b16 %v937
        %v2870 = vunpack.c.l.b16 %v938
        %v2871 = vunpack.c.l.b16 %v939
        %v2872 = vunpack.c.l.b16 %v940
        %v2873 = vunpack.c.l.b16 %v941
        %v2874 = vunpack.c.l.b16 %v942
        %v2875 = vunpack.c.l.b16 %v943
        %v2876 = vunpack.c.l.b16 %v944
        %v2877 = vunpack.c.l.b16 %v945
        %v2878 = vunpack.c.l.b16 %v946
        %v2879 = vunpack.c.l.b16 %v947
        %v2880 = vunpack.c.l.b16 %v948
        %v2881 = vunpack.c.l.b16 %v949
        %v2882 = vunpack.c.l.b16 %v950
        %v2883 = vunpack.c.l.b16 %v951
        %v2884 = vunpack.c.l.b16 %v952
        %v2885 = vunpack.c.l.b16 %v953
        %v2886 = vunpack.c.l.b16 %v954
        %v2887 = vunpack.c.l.b16 %v955
        %v2888 = vunpack.c.l.b16 %v956
        %v2889 = vunpack.c.l.b16 %v957
        %v2890 = vunpack.c.l.b16 %v958
        %v2891 = vunpack.c.l.b16 %v959
        %v2892 = vunpack.c.l.b16 %v960
        %v2893 = vunpack.c.l.b16 %v961
        %v2894 = vunpack.c.l.b16 %v962
        %v2895 = vunpack.c.l.b16 %v963
        %v2896 = vunpack.c.l.b16 %v964
        %v2897 = vunpack.c.l.b16 %v965
        %v2898 = vunpack.c.l.b16 %v966
        %v2899 = vunpack.c.l.b16 %v967
        %v2900 = vunpack.c.l.b16 %v968
        %v2901 = vunpack.c.l.b16 %v969
        %v2902 = vunpack.c.l.b16 %v970
        %v2903 = vunpack.c.l.b16 %v971
        %v2904 = vunpack.c.l.b16 %v972
        %v2905 = vunpack.c.l.b16 %v973
        %v2906 = vunpack.c.l.b16 %v974
        %v2907 = vunpack.c.l.b16 %v975
        %v2908 = vunpack.c.l.b16 %v976
        %v2909 = vunpack.c.l.b16 %v977
        %v2910 = vunpack.c.l.b16 %v978
        %v2911 = vunpack.c.l.b16 %v979
        %v2912 = vunpack.c.l.b16 %v980
        %v2913 = vunpack.c.l.b16 %v981
        %v2914 = vunpack.c.l.b16 %v982
        %v2915 = vunpack.c.l.b16 %v983
        %v2916 = vunpack.c.l.b16 %v984
        %v2917 = vunpack.c.l.b16 %v985
        %v2918 = vunpack.c.l.b16 %v986
        %v2919 = vunpack.c.l.b16 %v987
        %v2920 = vunpack.c.l.b16 %v988
        %v2921 = vunpack.c.l.b16 %v989
        %v2922 = vunpack.c.l.b16 %v990
        %v2923 = vunpack.c.l.b16 %v991
        %v2924 = vunpack.c.l.b16 %v992
        %v2925 = vunpack.c.l.b16 %v993
        %v2926 = vunpack.c.l.b16 %v994
        %v2927 = vunpack.c.l.b16 %v995
        %v2928 = vunpack.c.l.b16 %v996
        %v2929 = vunpack.c.l.b16 %v997
        %v2930 = vunpack.c.l.b16 %v998
        %v2931 = vunpack.c.l.b16 %v999
        %v2932 = vunpack.c.l.b16 %v1000
        %v2933 = vunpack.c.l.b16 %v1001
        %v2934 = vunpack.c.l.b16 %v1002
        %v2935 = vunpack.c.l.b16 %v1003
        %v2936 = vunpack.c.l.b16 %v1004
        %v2937 = vunpack.c.l.b16 %v1005
        %v2938 = vunpack.c.l.b16 %v1006
        %v2939 = vunpack.c.l.b16 %v1007
        %v2940 = vunpack.c.l.b16 %v1008
        %v2941 = vunpack.c.l.b16 %v1009
        %v2942 = vunpack.c.l.b16 %v1010
        %v2943 = vunpack.c.l.b16 %v1011
        %v2944 = vunpack.c.l.b16 %v1012
        %v2945 = vunpack.c.l.b16 %v1013
        %v2946 = vunpack.c.l.b16 %v1014
        %v2947 = vunpack.c.l.b16 %v1015
        %v2948 = vunpack.c.l.b16 %v1016
        %v2949 = vunpack.c.l.b16 %v1017
        %v2950 = vunpack.c.l.b16 %v1018
        %v2951 = vunpack.c.l.b16 %v1019
        %v2952 = vunpack.c.l.b16 %v1020
        %v2953 = vunpack.c.l.b16 %v1021
        %v2954 = vunpack.c.l.b16 %v1022
        %v2955 = vunpack.c.l.b16 %v1023
        %v2956 = vunpack.c.l.b16 %v1024
        %v2957 = vunpack.c.l.b16 %v1025
        %v2958 = vunpack.c.l.b16 %v1026
        %v2959 = vunpack.c.l.b16 %v1027
        %v2960 = vunpack.c.l.b16 %v1028
        %v2961 = vunpack.c.l.b16 %v1029
        %v2962 = vunpack.c.l.b16 %v1030
        %v2963 = vunpack.c.l.b16 %v1031
        %v2964 = vunpack.c.l.b16 %v1032
        %v2965 = vunpack.c.l.b16 %v1033
        %v2966 = vunpack.c.l.b16 %v1034
        %v2967 = vunpack.c.l.b16 %v1035
        %v2968 = vunpack.c.l.b16 %v1036
        %v2969 = vunpack.c.l.b16 %v1037
        %v2970 = vunpack.c.l.b16 %v1038
        %v2971 = vunpack.c.l.b16 %v1039
        %v2972 = vunpack.c.l.b16 %v1040
        %v2973 = vunpack.c.l.b16 %v1041
        %v2974 = vunpack.c.l.b16 %v1042
        %v2975 = vunpack.c.l.b16 %v1043
        %v2976 = vunpack.c.l.b16 %v1044
        %v2977 = vunpack.c.l.b16 %v1045
        %v2978 = vunpack.c.l.b16 %v1046
        %v2979 = vunpack.c.l.b16 %v1047
        %v2980 = vunpack.c.l.b16 %v1048
        %v2981 = vunpack.c.l.b16 %v1049
        %v2982 = vunpack.c.l.b16 %v1050
        %v2983 = vunpack.c.l.b16 %v1051
        %v2984 = vunpack.c.l.b16 %v1052
        %v2985 = vunpack.c.l.b16 %v1053
        %v2986 = vunpack.c.l.b16 %v1054
        %v2987 = vunpack.c.l.b16 %v1055
        %v2988 = vunpack.c.l.b16 %v1056
        %v2989 = vunpack.c.l.b16 %v1057
        %v2990 = vunpack.c.l.b16 %v1058
        %v2991 = vunpack.c.l.b16 %v1059
        %v2992 = vunpack.c.l.b16 %v1060
        %v2993 = vunpack.c.l.b16 %v1061
        %v2994 = vunpack.c.l.b16 %v1062
        %v2995 = vunpack.c.l.b16 %v1063
        %v2996 = vunpack.c.l.b16 %v1064
        %v2997 = vunpack.c.l.b16 %v1065
        %v2998 = vunpack.c.l.b16 %v1066
        %v2999 = vunpack.c.l.b16 %v1067
        %v3000 = vunpack.c.l.b16 %v1068
        %v3001 = vunpack.c.l.b16 %v1069
        %v3002 = vunpack.c.l.b16 %v1070
        %v3003 = vunpack.c.l.b16 %v1071
        %v3004 = vunpack.c.l.b16 %v1072
        %v3005 = vunpack.c.l.b16 %v1073
        %v3006 = vunpack.c.l.b16 %v1074
        %v3007 = vunpack.c.l.b16 %v1075
        %v3008 = vunpack.c.l.b16 %v1076
        %v3009 = vunpack.c.l.b16 %v1077
        %v3010 = vunpack.c.l.b16 %v1078
        %v3011 = vunpack.c.l.b16 %v1079
        %v3012 = vunpack.c.l.b16 %v1080
        %v3013 = vunpack.c.l.b16 %v1081
        %v3014 = vunpack.c.l.b16 %v1082
        %v3015 = vunpack.c.l.b16 %v1083
        %v3016 = vunpack.c.l.b16 %v1084
        %v3017 = vunpack.c.l.b16 %v1085
        %v3018 = vunpack.c.l.b16 %v1086
        %v3019 = vunpack.c.l.b16 %v1087
        %v3020 = vunpack.c.l.b16 %v1088
        %v3021 = vunpack.c.l.b16 %v1089
        %v3022 = vunpack.c.l.b16 %v1090
        %v3023 = vunpack.c.l.b16 %v1091
        %v3024 = vunpack.c.l.b16 %v1092
        %v3025 = vunpack.c.l.b16 %v1093
        %v3026 = vunpack.c.l.b16 %v1094
        %v3027 = vunpack.c.l.b16 %v1095
        %v3028 = vunpack.c.l.b16 %v1096
        %v3029 = vunpack.c.l.b16 %v1097
        %v3030 = vunpack.c.l.b16 %v1098
        %v3031 = vunpack.c.l.b16 %v1099
        %v3032 = vunpack.c.l.b16 %v1100
        %v3033 = vunpack.c.l.b16 %v1101
        %v3034 = vunpack.c.l.b16 %v1102
        %v3035 = vunpack.c.l.b16 %v1103
        %v3036 = vunpack.c.l.b16 %v1104
        %v3037 = vunpack.c.l.b16 %v1105
        %v3038 = vunpack.c.l.b16 %v1106
        %v3039 = vunpack.c.l.b16 %v1107
        %v3040 = vunpack.c.l.b16 %v1108
        %v3041 = vunpack.c.l.b16 %v1109
        %v3042 = vunpack.c.l.b16 %v1110
        %v3043 = vunpack.c.l.b16 %v1111
        %v3044 = vunpack.c.l.b16 %v1112
        %v3045 = vunpack.c.l.b16 %v1113
        %v3046 = vunpack.c.l.b16 %v1114
        %v3047 = vunpack.c.l.b16 %v1115
        %v3048 = vunpack.c.l.b16 %v1116
        %v3049 = vunpack.c.l.b16 %v1117
        %v3050 = vunpack.c.l.b16 %v1118
        %v3051 = vunpack.c.l.b16 %v1119
        %v3052 = vunpack.c.l.b16 %v1120
        %v3053 = vunpack.c.l.b16 %v1121
        %v3054 = vunpack.c.l.b16 %v1122
        %v3055 = vunpack.c.l.b16 %v1123
        %v3056 = vunpack.c.l.b16 %v1124
        %v3057 = vunpack.c.l.b16 %v1125
        %v3058 = vunpack.c.l.b16 %v1126
        %v3059 = vunpack.c.l.b16 %v1127
        %v3060 = vunpack.c.l.b16 %v1128
        %v3061 = vunpack.c.l.b16 %v1129
        %v3062 = vunpack.c.l.b16 %v1130
        %v3063 = vunpack.c.l.b16 %v1131
        %v3064 = vunpack.c.l.b16 %v1132
        %v3065 = vunpack.c.l.b16 %v1133
        %v3066 = vunpack.c.l.b16 %v1134
        %v3067 = vunpack.c.l.b16 %v1135
        %v3068 = vunpack.c.l.b16 %v1136
        %v3069 = vunpack.c.l.b16 %v1137
        %v3070 = vunpack.c.l.b16 %v1138
        %v3071 = vunpack.c.l.b16 %v1139
        %v3072 = vpack.c.b16 %v2289, %v2288
        %v3073 = vpack.c.b16 %v2291, %v2290
        %v3074 = vpack.c.b16 %v2293, %v2292
        %v3075 = vpack.c.b16 %v2295, %v2294
        %v3076 = vpack.c.b16 %v2297, %v2296
        %v3077 = vpack.c.b16 %v2299, %v2298
        %v3078 = vpack.c.b16 %v2301, %v2300
        %v3079 = vpack.c.b16 %v2303, %v2302
        %v3080 = vpack.c.b16 %v2305, %v2304
        %v3081 = vpack.c.b16 %v2307, %v2306
        %v3082 = vpack.c.b16 %v2309, %v2308
        %v3083 = vpack.c.b16 %v2311, %v2310
        %v3084 = vpack.c.b16 %v2313, %v2312
        %v3085 = vpack.c.b16 %v2315, %v2314
        %v3086 = vpack.c.b16 %v2317, %v2316
        %v3087 = vpack.c.b16 %v2319, %v2318
        %v3088 = vpack.c.b16 %v2321, %v2320
        %v3089 = vpack.c.b16 %v2323, %v2322
        %v3090 = vpack.c.b16 %v2325, %v2324
        %v3091 = vpack.c.b16 %v2327, %v2326
        %v3092 = vpack.c.b16 %v2329, %v2328
        %v3093 = vpack.c.b16 %v2331, %v2330
        %v3094 = vpack.c.b16 %v2333, %v2332
        %v3095 = vpack.c.b16 %v2335, %v2334
        %v3096 = vpack.c.b16 %v2337, %v2336
        %v3097 = vpack.c.b16 %v2339, %v2338
        %v3098 = vpack.c.b16 %v2341, %v2340
        %v3099 = vpack.c.b16 %v2343, %v2342
        %v3100 = vpack.c.b16 %v2345, %v2344
        %v3101 = vpack.c.b16 %v2347, %v2346
        %v3102 = vpack.c.b16 %v2349, %v2348
        %v3103 = vpack.c.b16 %v2351, %v2350
        %v3104 = vpack.c.b16 %v2353, %v2352
        %v3105 = vpack.c.b16 %v2355, %v2354
        %v3106 = vpack.c.b16 %v2357, %v2356
        %v3107 = vpack.c.b16 %v2359, %v2358
        %v3108 = vpack.c.b16 %v2361, %v2360
        %v3109 = vpack.c.b16 %v2363, %v2362
        %v3110 = vpack.c.b16 %v2365, %v2364
        %v3111 = vpack.c.b16 %v2367, %v2366
        %v3112 = vpack.c.b16 %v2369, %v2368
        %v3113 = vpack.c.b16 %v2371, %v2370
        %v3114 = vpack.c.b16 %v2373, %v2372
        %v3115 = vpack.c.b16 %v2375, %v2374
        %v3116 = vpack.c.b16 %v2377, %v2376
        %v3117 = vpack.c.b16 %v2379, %v2378
        %v3118 = vpack.c.b16 %v2381, %v2380
        %v3119 = vpack.c.b16 %v2383, %v2382
        %v3120 = vpack.c.b16 %v2385, %v2384
        %v3121 = vpack.c.b16 %v2387, %v2386
        %v3122 = vpack.c.b16 %v2389, %v2388
        %v3123 = vpack.c.b16 %v2391, %v2390
        %v3124 = vpack.c.b16 %v2393, %v2392
        %v3125 = vpack.c.b16 %v2395, %v2394
        %v3126 = vpack.c.b16 %v2397, %v2396
        %v3127 = vpack.c.b16 %v2399, %v2398
        %v3128 = vpack.c.b16 %v2401, %v2400
        %v3129 = vpack.c.b16 %v2403, %v2402
        %v3130 = vpack.c.b16 %v2405, %v2404
        %v3131 = vpack.c.b16 %v2407, %v2406
        %v3132 = vpack.c.b16 %v2409, %v2408
        %v3133 = vpack.c.b16 %v2411, %v2410
        %v3134 = vpack.c.b16 %v2413, %v2412
        %v3135 = vpack.c.b16 %v2415, %v2414
        %v3136 = vpack.c.b16 %v2417, %v2416
        %v3137 = vpack.c.b16 %v2419, %v2418
        %v3138 = vpack.c.b16 %v2421, %v2420
        %v3139 = vpack.c.b16 %v2423, %v2422
        %v3140 = vpack.c.b16 %v2425, %v2424
        %v3141 = vpack.c.b16 %v2427, %v2426
        %v3142 = vpack.c.b16 %v2429, %v2428
        %v3143 = vpack.c.b16 %v2431, %v2430
        %v3144 = vpack.c.b16 %v2433, %v2432
        %v3145 = vpack.c.b16 %v2435, %v2434
        %v3146 = vpack.c.b16 %v2437, %v2436
        %v3147 = vpack.c.b16 %v2439, %v2438
        %v3148 = vpack.c.b16 %v2441, %v2440
        %v3149 = vpack.c.b16 %v2443, %v2442
        %v3150 = vpack.c.b16 %v2445, %v2444
        %v3151 = vpack.c.b16 %v2447, %v2446
        %v3152 = vpack.c.b16 %v2449, %v2448
        %v3153 = vpack.c.b16 %v2451, %v2450
        %v3154 = vpack.c.b16 %v2453, %v2452
        %v3155 = vpack.c.b16 %v2455, %v2454
        %v3156 = vpack.c.b16 %v2457, %v2456
        %v3157 = vpack.c.b16 %v2459, %v2458
        %v3158 = vpack.c.b16 %v2461, %v2460
        %v3159 = vpack.c.b16 %v2463, %v2462
        %v3160 = vpack.c.b16 %v2465, %v2464
        %v3161 = vpack.c.b16 %v2467, %v2466
        %v3162 = vpack.c.b16 %v2469, %v2468
        %v3163 = vpack.c.b16 %v2471, %v2470
        %v3164 = vpack.c.b16 %v2473, %v2472
        %v3165 = vpack.c.b16 %v2475, %v2474
        %v3166 = vpack.c.b16 %v2477, %v2476
        %v3167 = vpack.c.b16 %v2479, %v2478
        %v3168 = vpack.c.b16 %v2481, %v2480
        %v3169 = vpack.c.b16 %v2483, %v2482
        %v3170 = vpack.c.b16 %v2485, %v2484
        %v3171 = vpack.c.b16 %v2487, %v2486
        %v3172 = vpack.c.b16 %v2489, %v2488
        %v3173 = vpack.c.b16 %v2491, %v2490
        %v3174 = vpack.c.b16 %v2493, %v2492
        %v3175 = vpack.c.b16 %v2495, %v2494
        %v3176 = vpack.c.b16 %v2497, %v2496
        %v3177 = vpack.c.b16 %v2499, %v2498
        %v3178 = vpack.c.b16 %v2501, %v2500
        %v3179 = vpack.c.b16 %v2503, %v2502
        %v3180 = vpack.c.b16 %v2505, %v2504
        %v3181 = vpack.c.b16 %v2507, %v2506
        %v3182 = vpack.c.b16 %v2509, %v2508
        %v3183 = vpack.c.b16 %v2511, %v2510
        %v3184 = vpack.c.b16 %v2513, %v2512
        %v3185 = vpack.c.b16 %v2515, %v2514
        %v3186 = vpack.c.b16 %v2517, %v2516
        %v3187 = vpack.c.b16 %v2519, %v2518
        %v3188 = vpack.c.b16 %v2521, %v2520
        %v3189 = vpack.c.b16 %v2523, %v2522
        %v3190 = vpack.c.b16 %v2525, %v2524
        %v3191 = vpack.c.b16 %v2527, %v2526
        %v3192 = vpack.c.b16 %v2529, %v2528
        %v3193 = vpack.c.b16 %v2531, %v2530
        %v3194 = vpack.c.b16 %v2533, %v2532
        %v3195 = vpack.c.b16 %v2535, %v2534
        %v3196 = vpack.c.b16 %v2537, %v2536
        %v3197 = vpack.c.b16 %v2539, %v2538
        %v3198 = vpack.c.b16 %v2541, %v2540
        %v3199 = vpack.c.b16 %v2543, %v2542
        %v3200 = vpack.c.b16 %v2545, %v2544
        %v3201 = vpack.c.b16 %v2547, %v2546
        %v3202 = vpack.c.b16 %v2549, %v2548
        %v3203 = vpack.c.b16 %v2551, %v2550
        %v3204 = vpack.c.b16 %v2553, %v2552
        %v3205 = vpack.c.b16 %v2555, %v2554
        %v3206 = vpack.c.b16 %v2557, %v2556
        %v3207 = vpack.c.b16 %v2559, %v2558
        %v3208 = vpack.c.b16 %v2561, %v2560
        %v3209 = vpack.c.b16 %v2563, %v2562
        %v3210 = vpack.c.b16 %v2565, %v2564
        %v3211 = vpack.c.b16 %v2567, %v2566
        %v3212 = vpack.c.b16 %v2569, %v2568
        %v3213 = vpack.c.b16 %v2571, %v2570
        %v3214 = vpack.c.b16 %v2573, %v2572
        %v3215 = vpack.c.b16 %v2575, %v2574
        %v3216 = vpack.c.b16 %v2577, %v2576
        %v3217 = vpack.c.b16 %v2579, %v2578
        %v3218 = vpack.c.b16 %v2581, %v2580
        %v3219 = vpack.c.b16 %v2583, %v2582
        %v3220 = vpack.c.b16 %v2585, %v2584
        %v3221 = vpack.c.b16 %v2587, %v2586
        %v3222 = vpack.c.b16 %v2589, %v2588
        %v3223 = vpack.c.b16 %v2591, %v2590
        %v3224 = vpack.c.b16 %v2593, %v2592
        %v3225 = vpack.c.b16 %v2595, %v2594
        %v3226 = vpack.c.b16 %v2597, %v2596
        %v3227 = vpack.c.b16 %v2599, %v2598
        %v3228 = vpack.c.b16 %v2601, %v2600
        %v3229 = vpack.c.b16 %v2603, %v2602
        %v3230 = vpack.c.b16 %v2605, %v2604
        %v3231 = vpack.c.b16 %v2607, %v2606
        %v3232 = vpack.c.b16 %v2609, %v2608
        %v3233 = vpack.c.b16 %v2611, %v2610
        %v3234 = vpack.c.b16 %v2613, %v2612
        %v3235 = vpack.c.b16 %v2615, %v2614
        %v3236 = vpack.c.b16 %v2617, %v2616
        %v3237 = vpack.c.b16 %v2619, %v2618
        %v3238 = vpack.c.b16 %v2621, %v2620
        %v3239 = vpack.c.b16 %v2623, %v2622
        %v3240 = vpack.c.b16 %v2625, %v2624
        %v3241 = vpack.c.b16 %v2627, %v2626
        %v3242 = vpack.c.b16 %v2629, %v2628
        %v3243 = vpack.c.b16 %v2631, %v2630
        %v3244 = vpack.c.b16 %v2633, %v2632
        %v3245 = vpack.c.b16 %v2635, %v2634
        %v3246 = vpack.c.b16 %v2637, %v2636
        %v3247 = vpack.c.b16 %v2639, %v2638
        %v3248 = vpack.c.b16 %v2641, %v2640
        %v3249 = vpack.c.b16 %v2643, %v2642
        %v3250 = vpack.c.b16 %v2645, %v2644
        %v3251 = vpack.c.b16 %v2647, %v2646
        %v3252 = vpack.c.b16 %v2649, %v2648
        %v3253 = vpack.c.b16 %v2651, %v2650
        %v3254 = vpack.c.b16 %v2653, %v2652
        %v3255 = vpack.c.b16 %v2655, %v2654
        %v3256 = vpack.c.b16 %v2657, %v2656
        %v3257 = vpack.c.b16 %v2659, %v2658
        %v3258 = vpack.c.b16 %v2661, %v2660
        %v3259 = vpack.c.b16 %v2663, %v2662
        %v3260 = vpack.c.b16 %v2665, %v2664
        %v3261 = vpack.c.b16 %v2667, %v2666
        %v3262 = vpack.c.b16 %v2669, %v2668
        %v3263 = vpack.c.b16 %v2671, %v2670
        %v3264 = vpack.c.b16 %v2673, %v2672
        %v3265 = vpack.c.b16 %v2675, %v2674
        %v3266 = vpack.c.b16 %v2677, %v2676
        %v3267 = vpack.c.b16 %v2679, %v2678
        %v3268 = vpack.c.b16 %v2681, %v2680
        %v3269 = vpack.c.b16 %v2683, %v2682
        %v3270 = vpack.c.b16 %v2685, %v2684
        %v3271 = vpack.c.b16 %v2687, %v2686
        %v3272 = vpack.c.b16 %v2689, %v2688
        %v3273 = vpack.c.b16 %v2691, %v2690
        %v3274 = vpack.c.b16 %v2693, %v2692
        %v3275 = vpack.c.b16 %v2695, %v2694
        %v3276 = vpack.c.b16 %v2697, %v2696
        %v3277 = vpack.c.b16 %v2699, %v2698
        %v3278 = vpack.c.b16 %v2701, %v2700
        %v3279 = vpack.c.b16 %v2703, %v2702
        %v3280 = vpack.c.b16 %v2705, %v2704
        %v3281 = vpack.c.b16 %v2707, %v2706
        %v3282 = vpack.c.b16 %v2709, %v2708
        %v3283 = vpack.c.b16 %v2711, %v2710
        %v3284 = vpack.c.b16 %v2713, %v2712
        %v3285 = vpack.c.b16 %v2715, %v2714
        %v3286 = vpack.c.b16 %v2717, %v2716
        %v3287 = vpack.c.b16 %v2719, %v2718
        %v3288 = vpack.c.b16 %v2721, %v2720
        %v3289 = vpack.c.b16 %v2723, %v2722
        %v3290 = vpack.c.b16 %v2725, %v2724
        %v3291 = vpack.c.b16 %v2727, %v2726
        %v3292 = vpack.c.b16 %v2729, %v2728
        %v3293 = vpack.c.b16 %v2731, %v2730
        %v3294 = vpack.c.b16 %v2733, %v2732
        %v3295 = vpack.c.b16 %v2735, %v2734
        %v3296 = vpack.c.b16 %v2737, %v2736
        %v3297 = vpack.c.b16 %v2739, %v2738
        %v3298 = vpack.c.b16 %v2741, %v2740
        %v3299 = vpack.c.b16 %v2743, %v2742
        %v3300 = vpack.c.b16 %v2745, %v2744
        %v3301 = vpack.c.b16 %v2747, %v2746
        %v3302 = vpack.c.b16 %v2749, %v2748
        %v3303 = vpack.c.b16 %v2751, %v2750
        %v3304 = vpack.c.b16 %v2753, %v2752
        %v3305 = vpack.c.b16 %v2755, %v2754
        %v3306 = vpack.c.b16 %v2757, %v2756
        %v3307 = vpack.c.b16 %v2759, %v2758
        %v3308 = vpack.c.b16 %v2761, %v2760
        %v3309 = vpack.c.b16 %v2763, %v2762
        %v3310 = vpack.c.b16 %v2765, %v2764
        %v3311 = vpack.c.b16 %v2767, %v2766
        %v3312 = vpack.c.b16 %v2769, %v2768
        %v3313 = vpack.c.b16 %v2771, %v2770
        %v3314 = vpack.c.b16 %v2773, %v2772
        %v3315 = vpack.c.b16 %v2775, %v2774
        %v3316 = vpack.c.b16 %v2777, %v2776
        %v3317 = vpack.c.b16 %v2779, %v2778
        %v3318 = vpack.c.b16 %v2781, %v2780
        %v3319 = vpack.c.b16 %v2783, %v2782
        %v3320 = vpack.c.b16 %v2785, %v2784
        %v3321 = vpack.c.b16 %v2787, %v2786
        %v3322 = vpack.c.b16 %v2789, %v2788
        %v3323 = vpack.c.b16 %v2791, %v2790
        %v3324 = vpack.c.b16 %v2793, %v2792
        %v3325 = vpack.c.b16 %v2795, %v2794
        %v3326 = vpack.c.b16 %v2797, %v2796
        %v3327 = vpack.c.b16 %v2799, %v2798
        %v3328 = vpack.c.b16 %v2801, %v2800
        %v3329 = vpack.c.b16 %v2803, %v2802
        %v3330 = vpack.c.b16 %v2805, %v2804
        %v3331 = vpack.c.b16 %v2807, %v2806
        %v3332 = vpack.c.b16 %v2809, %v2808
        %v3333 = vpack.c.b16 %v2811, %v2810
        %v3334 = vpack.c.b16 %v2813, %v2812
        %v3335 = vpack.c.b16 %v2815, %v2814
        %v3336 = vpack.c.b16 %v2817, %v2816
        %v3337 = vpack.c.b16 %v2819, %v2818
        %v3338 = vpack.c.b16 %v2821, %v2820
        %v3339 = vpack.c.b16 %v2823, %v2822
        %v3340 = vpack.c.b16 %v2825, %v2824
        %v3341 = vpack.c.b16 %v2827, %v2826
        %v3342 = vpack.c.b16 %v2829, %v2828
        %v3343 = vpack.c.b16 %v2831, %v2830
        %v3344 = vpack.c.b16 %v2833, %v2832
        %v3345 = vpack.c.b16 %v2835, %v2834
        %v3346 = vpack.c.b16 %v2837, %v2836
        %v3347 = vpack.c.b16 %v2839, %v2838
        %v3348 = vpack.c.b16 %v2841, %v2840
        %v3349 = vpack.c.b16 %v2843, %v2842
        %v3350 = vpack.c.b16 %v2845, %v2844
        %v3351 = vpack.c.b16 %v2847, %v2846
        %v3352 = vpack.c.b16 %v2849, %v2848
        %v3353 = vpack.c.b16 %v2851, %v2850
        %v3354 = vpack.c.b16 %v2853, %v2852
        %v3355 = vpack.c.b16 %v2855, %v2854
        %v3356 = vpack.c.b16 %v2857, %v2856
        %v3357 = vpack.c.b16 %v2859, %v2858
        %v3358 = vpack.c.b16 %v2861, %v2860
        %v3359 = vpack.c.b16 %v2863, %v2862
        %v3360 = vpack.c.b16 %v2865, %v2864
        %v3361 = vpack.c.b16 %v2867, %v2866
        %v3362 = vpack.c.b16 %v2869, %v2868
        %v3363 = vpack.c.b16 %v2871, %v2870
        %v3364 = vpack.c.b16 %v2873, %v2872
        %v3365 = vpack.c.b16 %v2875, %v2874
        %v3366 = vpack.c.b16 %v2877, %v2876
        %v3367 = vpack.c.b16 %v2879, %v2878
        %v3368 = vpack.c.b16 %v2881, %v2880
        %v3369 = vpack.c.b16 %v2883, %v2882
        %v3370 = vpack.c.b16 %v2885, %v2884
        %v3371 = vpack.c.b16 %v2887, %v2886
        %v3372 = vpack.c.b16 %v2889, %v2888
        %v3373 = vpack.c.b16 %v2891, %v2890
        %v3374 = vpack.c.b16 %v2893, %v2892
        %v3375 = vpack.c.b16 %v2895, %v2894
        %v3376 = vpack.c.b16 %v2897, %v2896
        %v3377 = vpack.c.b16 %v2899, %v2898
        %v3378 = vpack.c.b16 %v2901, %v2900
        %v3379 = vpack.c.b16 %v2903, %v2902
        %v3380 = vpack.c.b16 %v2905, %v2904
        %v3381 = vpack.c.b16 %v2907, %v2906
        %v3382 = vpack.c.b16 %v2909, %v2908
        %v3383 = vpack.c.b16 %v2911, %v2910
        %v3384 = vpack.c.b16 %v2913, %v2912
        %v3385 = vpack.c.b16 %v2915, %v2914
        %v3386 = vpack.c.b16 %v2917, %v2916
        %v3387 = vpack.c.b16 %v2919, %v2918
        %v3388 = vpack.c.b16 %v2921, %v2920
        %v3389 = vpack.c.b16 %v2923, %v2922
        %v3390 = vpack.c.b16 %v2925, %v2924
        %v3391 = vpack.c.b16 %v2927, %v2926
        %v3392 = vpack.c.b16 %v2929, %v2928
        %v3393 = vpack.c.b16 %v2931, %v2930
        %v3394 = vpack.c.b16 %v2933, %v2932
        %v3395 = vpack.c.b16 %v2935, %v2934
        %v3396 = vpack.c.b16 %v2937, %v2936
        %v3397 = vpack.c.b16 %v2939, %v2938
        %v3398 = vpack.c.b16 %v2941, %v2940
        %v3399 = vpack.c.b16 %v2943, %v2942
        %v3400 = vpack.c.b16 %v2945, %v2944
        %v3401 = vpack.c.b16 %v2947, %v2946
        %v3402 = vpack.c.b16 %v2949, %v2948
        %v3403 = vpack.c.b16 %v2951, %v2950
        %v3404 = vpack.c.b16 %v2953, %v2952
        %v3405 = vpack.c.b16 %v2955, %v2954
        %v3406 = vpack.c.b16 %v2957, %v2956
        %v3407 = vpack.c.b16 %v2959, %v2958
        %v3408 = vpack.c.b16 %v2961, %v2960
        %v3409 = vpack.c.b16 %v2963, %v2962
        %v3410 = vpack.c.b16 %v2965, %v2964
        %v3411 = vpack.c.b16 %v2967, %v2966
        %v3412 = vpack.c.b16 %v2969, %v2968
        %v3413 = vpack.c.b16 %v2971, %v2970
        %v3414 = vpack.c.b16 %v2973, %v2972
        %v3415 = vpack.c.b16 %v2975, %v2974
        %v3416 = vpack.c.b16 %v2977, %v2976
        %v3417 = vpack.c.b16 %v2979, %v2978
        %v3418 = vpack.c.b16 %v2981, %v2980
        %v3419 = vpack.c.b16 %v2983, %v2982
        %v3420 = vpack.c.b16 %v2985, %v2984
        %v3421 = vpack.c.b16 %v2987, %v2986
        %v3422 = vpack.c.b16 %v2989, %v2988
        %v3423 = vpack.c.b16 %v2991, %v2990
        %v3424 = vpack.c.b16 %v2993, %v2992
        %v3425 = vpack.c.b16 %v2995, %v2994
        %v3426 = vpack.c.b16 %v2997, %v2996
        %v3427 = vpack.c.b16 %v2999, %v2998
        %v3428 = vpack.c.b16 %v3001, %v3000
        %v3429 = vpack.c.b16 %v3003, %v3002
        %v3430 = vpack.c.b16 %v3005, %v3004
        %v3431 = vpack.c.b16 %v3007, %v3006
        %v3432 = vpack.c.b16 %v3009, %v3008
        %v3433 = vpack.c.b16 %v3011, %v3010
        %v3434 = vpack.c.b16 %v3013, %v3012
        %v3435 = vpack.c.b16 %v3015, %v3014
        %v3436 = vpack.c.b16 %v3017, %v3016
        %v3437 = vpack.c.b16 %v3019, %v3018
        %v3438 = vpack.c.b16 %v3021, %v3020
        %v3439 = vpack.c.b16 %v3023, %v3022
        %v3440 = vpack.c.b16 %v3025, %v3024
        %v3441 = vpack.c.b16 %v3027, %v3026
        %v3442 = vpack.c.b16 %v3029, %v3028
        %v3443 = vpack.c.b16 %v3031, %v3030
        %v3444 = vpack.c.b16 %v3033, %v3032
        %v3445 = vpack.c.b16 %v3035, %v3034
        %v3446 = vpack.c.b16 %v3037, %v3036
        %v3447 = vpack.c.b16 %v3039, %v3038
        %v3448 = vpack.c.b16 %v3041, %v3040
        %v3449 = vpack.c.b16 %v3043, %v3042
        %v3450 = vpack.c.b16 %v3045, %v3044
        %v3451 = vpack.c.b16 %v3047, %v3046
        %v3452 = vpack.c.b16 %v3049, %v3048
        %v3453 = vpack.c.b16 %v3051, %v3050
        %v3454 = vpack.c.b16 %v3053, %v3052
        %v3455 = vpack.c.b16 %v3055, %v3054
        %v3456 = vpack.c.b16 %v3057, %v3056
        %v3457 = vpack.c.b16 %v3059, %v3058
        %v3458 = vpack.c.b16 %v3061, %v3060
        %v3459 = vpack.c.b16 %v3063, %v3062
        %v3460 = vpack.c.b16 %v3065, %v3064
        %v3461 = vpack.c.b16 %v3067, %v3066
        %v3462 = vpack.c.b16 %v3069, %v3068
        %v3463 = vpack.c.b16 %v3071, %v3070
        %3856 = vmatprep.subr.bf16.mxu0 0
        %3857 = vmatpush1.bf16.msra.mxu0 %v3072
        %3858 = vmatprep.subr.bf16.mxu0 0
        %3859 = vmatpush1.bf16.msra.mxu0 %v3073
        %3860 = vmatprep.subr.bf16.mxu0 0
        %3861 = vmatpush1.bf16.msra.mxu0 %v3074
        %3862 = vmatprep.subr.bf16.mxu0 0
        %3863 = vmatpush1.bf16.msra.mxu0 %v3075
        %3864 = vmatprep.subr.bf16.mxu0 0
        %3865 = vmatpush1.bf16.msra.mxu0 %v3076
        %3866 = vmatprep.subr.bf16.mxu0 0
        %3867 = vmatpush1.bf16.msra.mxu0 %v3077
        %3868 = vmatprep.subr.bf16.mxu0 0
        %3869 = vmatpush1.bf16.msra.mxu0 %v3078
        %3870 = vmatprep.subr.bf16.mxu0 0
        %3871 = vmatpush1.bf16.msra.mxu0 %v3079
        %3872 = vmatprep.subr.bf16.mxu0 0
        %3873 = vmatpush1.bf16.msra.mxu0 %v3080
        %3874 = vmatprep.subr.bf16.mxu0 0
        %3875 = vmatpush1.bf16.msra.mxu0 %v3081
        %3876 = vmatprep.subr.bf16.mxu0 0
        %3877 = vmatpush1.bf16.msra.mxu0 %v3082
        %3878 = vmatprep.subr.bf16.mxu0 0
        %3879 = vmatpush1.bf16.msra.mxu0 %v3083
        %3880 = vmatprep.subr.bf16.mxu0 0
        %3881 = vmatpush1.bf16.msra.mxu0 %v3084
        %3882 = vmatprep.subr.bf16.mxu0 0
        %3883 = vmatpush1.bf16.msra.mxu0 %v3085
        %3884 = vmatprep.subr.bf16.mxu0 0
        %3885 = vmatpush1.bf16.msra.mxu0 %v3086
        %3886 = vmatprep.subr.bf16.mxu0 0
        %3887 = vmatpush1.bf16.msra.mxu0 %v3087
        %3888 = vmatprep.mubr.bf16.mxu0 %v1184
        %3889 = vmatmul.mubr.bf16.gmra.mrb[0].mxu0 %v1170
        %v3890 = vpop.f32.mrb[0].mxu0
        %v3891 = vadd.f32 0.0, %v3890
        %v3892 = vpop.f32.mrb[0].mxu0
        %v3893 = vpop.f32.mrb[0].mxu0
        %v3894 = vpop.f32.mrb[0].mxu0
        %3895 = vdwg.mxu0
        %3896 = vmatprep.subr.bf16.mxu0 0
        %3897 = vmatpush1.bf16.msra.mxu0 %v3088
        %3898 = vmatprep.subr.bf16.mxu0 0
        %3899 = vmatpush1.bf16.msra.mxu0 %v3089
        %3900 = vmatprep.subr.bf16.mxu0 0
        %3901 = vmatpush1.bf16.msra.mxu0 %v3090
        %3902 = vmatprep.subr.bf16.mxu0 0
        %3903 = vmatpush1.bf16.msra.mxu0 %v3091
        %3904 = vmatprep.subr.bf16.mxu0 0
        %3905 = vmatpush1.bf16.msra.mxu0 %v3092
        %3906 = vmatprep.subr.bf16.mxu0 0
        %3907 = vmatpush1.bf16.msra.mxu0 %v3093
        %3908 = vmatprep.subr.bf16.mxu0 0
        %3909 = vmatpush1.bf16.msra.mxu0 %v3094
        %3910 = vmatprep.subr.bf16.mxu0 0
        %3911 = vmatpush1.bf16.msra.mxu0 %v3095
        %3912 = vmatprep.subr.bf16.mxu0 0
        %3913 = vmatpush1.bf16.msra.mxu0 %v3096
        %3914 = vmatprep.subr.bf16.mxu0 0
        %3915 = vmatpush1.bf16.msra.mxu0 %v3097
        %3916 = vmatprep.subr.bf16.mxu0 0
        %3917 = vmatpush1.bf16.msra.mxu0 %v3098
        %3918 = vmatprep.subr.bf16.mxu0 0
        %3919 = vmatpush1.bf16.msra.mxu0 %v3099
        %3920 = vmatprep.subr.bf16.mxu0 0
        %3921 = vmatpush1.bf16.msra.mxu0 %v3100
        %3922 = vmatprep.subr.bf16.mxu0 0
        %3923 = vmatpush1.bf16.msra.mxu0 %v3101
        %3924 = vmatprep.subr.bf16.mxu0 0
        %3925 = vmatpush1.bf16.msra.mxu0 %v3102
        %3926 = vmatprep.subr.bf16.mxu0 0
        %3927 = vmatpush1.bf16.msra.mxu0 %v3103
        %3928 = vmatprep.mubr.bf16.mxu0 %v1194
        %3929 = vmatmul.mubr.bf16.gmra.mrb[0].mxu0 %v1192
        %v3930 = vpop.f32.mrb[0].mxu0
        %v3931 = vadd.f32 %v3891, %v3930
        %v3932 = vpop.f32.mrb[0].mxu0
        %v3933 = vpop.f32.mrb[0].mxu0
        %v3934 = vpop.f32.mrb[0].mxu0
        %3935 = vdwg.mxu0
        %3936 = vmatprep.subr.bf16.mxu0 0
        %3937 = vmatpush1.bf16.msra.mxu0 %v3104
        %3938 = vmatprep.subr.bf16.mxu0 0
        %3939 = vmatpush1.bf16.msra.mxu0 %v3105
        %3940 = vmatprep.subr.bf16.mxu0 0
        %3941 = vmatpush1.bf16.msra.mxu0 %v3106
        %3942 = vmatprep.subr.bf16.mxu0 0
        %3943 = vmatpush1.bf16.msra.mxu0 %v3107
        %3944 = vmatprep.subr.bf16.mxu0 0
        %3945 = vmatpush1.bf16.msra.mxu0 %v3108
        %3946 = vmatprep.subr.bf16.mxu0 0
        %3947 = vmatpush1.bf16.msra.mxu0 %v3109
        %3948 = vmatprep.subr.bf16.mxu0 0
        %3949 = vmatpush1.bf16.msra.mxu0 %v3110
        %3950 = vmatprep.subr.bf16.mxu0 0
        %3951 = vmatpush1.bf16.msra.mxu0 %v3111
        %3952 = vmatprep.subr.bf16.mxu0 0
        %3953 = vmatpush1.bf16.msra.mxu0 %v3112
        %3954 = vmatprep.subr.bf16.mxu0 0
        %3955 = vmatpush1.bf16.msra.mxu0 %v3113
        %3956 = vmatprep.subr.bf16.mxu0 0
        %3957 = vmatpush1.bf16.msra.mxu0 %v3114
        %3958 = vmatprep.subr.bf16.mxu0 0
        %3959 = vmatpush1.bf16.msra.mxu0 %v3115
        %3960 = vmatprep.subr.bf16.mxu0 0
        %3961 = vmatpush1.bf16.msra.mxu0 %v3116
        %3962 = vmatprep.subr.bf16.mxu0 0
        %3963 = vmatpush1.bf16.msra.mxu0 %v3117
        %3964 = vmatprep.subr.bf16.mxu0 0
        %3965 = vmatpush1.bf16.msra.mxu0 %v3118
        %3966 = vmatprep.subr.bf16.mxu0 0
        %3967 = vmatpush1.bf16.msra.mxu0 %v3119
        %3968 = vmatprep.mubr.bf16.mxu0 %v1191
        %3969 = vmatmul.mubr.bf16.gmra.mrb[0].mxu0 %v1177
        %v3970 = vpop.f32.mrb[0].mxu0
        %v3971 = vadd.f32 %v3931, %v3970
        %v3972 = vpop.f32.mrb[0].mxu0
        %v3973 = vpop.f32.mrb[0].mxu0
        %v3974 = vpop.f32.mrb[0].mxu0
        %3975 = vdwg.mxu0
        %3976 = vmatprep.subr.bf16.mxu0 0
        %3977 = vmatpush1.bf16.msra.mxu0 %v3120
        %3978 = vmatprep.subr.bf16.mxu0 0
        %3979 = vmatpush1.bf16.msra.mxu0 %v3121
        %3980 = vmatprep.subr.bf16.mxu0 0
        %3981 = vmatpush1.bf16.msra.mxu0 %v3122
        %3982 = vmatprep.subr.bf16.mxu0 0
        %3983 = vmatpush1.bf16.msra.mxu0 %v3123
        %3984 = vmatprep.subr.bf16.mxu0 0
        %3985 = vmatpush1.bf16.msra.mxu0 %v3124
        %3986 = vmatprep.subr.bf16.mxu0 0
        %3987 = vmatpush1.bf16.msra.mxu0 %v3125
        %3988 = vmatprep.subr.bf16.mxu0 0
        %3989 = vmatpush1.bf16.msra.mxu0 %v3126
        %3990 = vmatprep.subr.bf16.mxu0 0
        %3991 = vmatpush1.bf16.msra.mxu0 %v3127
        %3992 = vmatprep.subr.bf16.mxu0 0
        %3993 = vmatpush1.bf16.msra.mxu0 %v3128
        %3994 = vmatprep.subr.bf16.mxu0 0
        %3995 = vmatpush1.bf16.msra.mxu0 %v3129
        %3996 = vmatprep.subr.bf16.mxu0 0
        %3997 = vmatpush1.bf16.msra.mxu0 %v3130
        %3998 = vmatprep.subr.bf16.mxu0 0
        %3999 = vmatpush1.bf16.msra.mxu0 %v3131
        %4000 = vmatprep.subr.bf16.mxu0 0
        %4001 = vmatpush1.bf16.msra.mxu0 %v3132
        %4002 = vmatprep.subr.bf16.mxu0 0
        %4003 = vmatpush1.bf16.msra.mxu0 %v3133
        %4004 = vmatprep.subr.bf16.mxu0 0
        %4005 = vmatpush1.bf16.msra.mxu0 %v3134
        %4006 = vmatprep.subr.bf16.mxu0 0
        %4007 = vmatpush1.bf16.msra.mxu0 %v3135
        %4008 = vmatprep.mubr.bf16.mxu0 %v1195
        %4009 = vmatmul.mubr.bf16.gmra.mrb[0].mxu0 %v1193
        %v4010 = vpop.f32.mrb[0].mxu0
        %v4011 = vadd.f32 %v3971, %v4010
        %v4012 = vpop.f32.mrb[0].mxu0
        %v4013 = vpop.f32.mrb[0].mxu0
        %v4014 = vpop.f32.mrb[0].mxu0
        %4015 = vdwg.mxu0
        %4016 = vmatprep.subr.bf16.mxu0 0
        %4017 = vmatpush1.bf16.msra.mxu0 %v3136
        %4018 = vmatprep.subr.bf16.mxu0 0
        %4019 = vmatpush1.bf16.msra.mxu0 %v3137
        %4020 = vmatprep.subr.bf16.mxu0 0
        %4021 = vmatpush1.bf16.msra.mxu0 %v3138
        %4022 = vmatprep.subr.bf16.mxu0 0
        %4023 = vmatpush1.bf16.msra.mxu0 %v3139
        %4024 = vmatprep.subr.bf16.mxu0 0
        %4025 = vmatpush1.bf16.msra.mxu0 %v3140
        %4026 = vmatprep.subr.bf16.mxu0 0
        %4027 = vmatpush1.bf16.msra.mxu0 %v3141
        %4028 = vmatprep.subr.bf16.mxu0 0
        %4029 = vmatpush1.bf16.msra.mxu0 %v3142
        %4030 = vmatprep.subr.bf16.mxu0 0
        %4031 = vmatpush1.bf16.msra.mxu0 %v3143
        %4032 = vmatprep.subr.bf16.mxu0 0
        %4033 = vmatpush1.bf16.msra.mxu0 %v3144
        %4034 = vmatprep.subr.bf16.mxu0 0
        %4035 = vmatpush1.bf16.msra.mxu0 %v3145
        %4036 = vmatprep.subr.bf16.mxu0 0
        %4037 = vmatpush1.bf16.msra.mxu0 %v3146
        %4038 = vmatprep.subr.bf16.mxu0 0
        %4039 = vmatpush1.bf16.msra.mxu0 %v3147
        %4040 = vmatprep.subr.bf16.mxu0 0
        %4041 = vmatpush1.bf16.msra.mxu0 %v3148
        %4042 = vmatprep.subr.bf16.mxu0 0
        %4043 = vmatpush1.bf16.msra.mxu0 %v3149
        %4044 = vmatprep.subr.bf16.mxu0 0
        %4045 = vmatpush1.bf16.msra.mxu0 %v3150
        %4046 = vmatprep.subr.bf16.mxu0 0
        %4047 = vmatpush1.bf16.msra.mxu0 %v3151
        %4048 = vmatprep.mubr.bf16.mxu0 %v1233
        %4049 = vmatmul.mubr.bf16.gmra.mrb[0].mxu0 %v1219
        %v4050 = vpop.f32.mrb[0].mxu0
        %v4051 = vadd.f32 %v4011, %v4050
        %v4052 = vpop.f32.mrb[0].mxu0
        %v4053 = vpop.f32.mrb[0].mxu0
        %v4054 = vpop.f32.mrb[0].mxu0
        %4055 = vdwg.mxu0
        %4056 = vmatprep.subr.bf16.mxu0 0
        %4057 = vmatpush1.bf16.msra.mxu0 %v3152
        %4058 = vmatprep.subr.bf16.mxu0 0
        %4059 = vmatpush1.bf16.msra.mxu0 %v3153
        %4060 = vmatprep.subr.bf16.mxu0 0
        %4061 = vmatpush1.bf16.msra.mxu0 %v3154
        %4062 = vmatprep.subr.bf16.mxu0 0
        %4063 = vmatpush1.bf16.msra.mxu0 %v3155
        %4064 = vmatprep.subr.bf16.mxu0 0
        %4065 = vmatpush1.bf16.msra.mxu0 %v3156
        %4066 = vmatprep.subr.bf16.mxu0 0
        %4067 = vmatpush1.bf16.msra.mxu0 %v3157
        %4068 = vmatprep.subr.bf16.mxu0 0
        %4069 = vmatpush1.bf16.msra.mxu0 %v3158
        %4070 = vmatprep.subr.bf16.mxu0 0
        %4071 = vmatpush1.bf16.msra.mxu0 %v3159
        %4072 = vmatprep.subr.bf16.mxu0 0
        %4073 = vmatpush1.bf16.msra.mxu0 %v3160
        %4074 = vmatprep.subr.bf16.mxu0 0
        %4075 = vmatpush1.bf16.msra.mxu0 %v3161
        %4076 = vmatprep.subr.bf16.mxu0 0
        %4077 = vmatpush1.bf16.msra.mxu0 %v3162
        %4078 = vmatprep.subr.bf16.mxu0 0
        %4079 = vmatpush1.bf16.msra.mxu0 %v3163
        %4080 = vmatprep.subr.bf16.mxu0 0
        %4081 = vmatpush1.bf16.msra.mxu0 %v3164
        %4082 = vmatprep.subr.bf16.mxu0 0
        %4083 = vmatpush1.bf16.msra.mxu0 %v3165
        %4084 = vmatprep.subr.bf16.mxu0 0
        %4085 = vmatpush1.bf16.msra.mxu0 %v3166
        %4086 = vmatprep.subr.bf16.mxu0 0
        %4087 = vmatpush1.bf16.msra.mxu0 %v3167
        %4088 = vmatprep.mubr.bf16.mxu0 %v1243
        %4089 = vmatmul.mubr.bf16.gmra.mrb[0].mxu0 %v1241
        %v4090 = vpop.f32.mrb[0].mxu0
        %v4091 = vadd.f32 %v4051, %v4090
        %v4092 = vpop.f32.mrb[0].mxu0
        %v4093 = vpop.f32.mrb[0].mxu0
        %v4094 = vpop.f32.mrb[0].mxu0
        %4095 = vdwg.mxu0
        %4096 = vmatprep.subr.bf16.mxu0 0
        %4097 = vmatpush1.bf16.msra.mxu0 %v3168
        %4098 = vmatprep.subr.bf16.mxu0 0
        %4099 = vmatpush1.bf16.msra.mxu0 %v3169
        %4100 = vmatprep.subr.bf16.mxu0 0
        %4101 = vmatpush1.bf16.msra.mxu0 %v3170
        %4102 = vmatprep.subr.bf16.mxu0 0
        %4103 = vmatpush1.bf16.msra.mxu0 %v3171
        %4104 = vmatprep.subr.bf16.mxu0 0
        %4105 = vmatpush1.bf16.msra.mxu0 %v3172
        %4106 = vmatprep.subr.bf16.mxu0 0
        %4107 = vmatpush1.bf16.msra.mxu0 %v3173
        %4108 = vmatprep.subr.bf16.mxu0 0
        %4109 = vmatpush1.bf16.msra.mxu0 %v3174
        %4110 = vmatprep.subr.bf16.mxu0 0
        %4111 = vmatpush1.bf16.msra.mxu0 %v3175
        %4112 = vmatprep.subr.bf16.mxu0 0
        %4113 = vmatpush1.bf16.msra.mxu0 %v3176
        %4114 = vmatprep.subr.bf16.mxu0 0
        %4115 = vmatpush1.bf16.msra.mxu0 %v3177
        %4116 = vmatprep.subr.bf16.mxu0 0
        %4117 = vmatpush1.bf16.msra.mxu0 %v3178
        %4118 = vmatprep.subr.bf16.mxu0 0
        %4119 = vmatpush1.bf16.msra.mxu0 %v3179
        %4120 = vmatprep.subr.bf16.mxu0 0
        %4121 = vmatpush1.bf16.msra.mxu0 %v3180
        %4122 = vmatprep.subr.bf16.mxu0 0
        %4123 = vmatpush1.bf16.msra.mxu0 %v3181
        %4124 = vmatprep.subr.bf16.mxu0 0
        %4125 = vmatpush1.bf16.msra.mxu0 %v3182
        %4126 = vmatprep.subr.bf16.mxu0 0
        %4127 = vmatpush1.bf16.msra.mxu0 %v3183
        %4128 = vmatprep.mubr.bf16.mxu0 %v1240
        %4129 = vmatmul.mubr.bf16.gmra.mrb[0].mxu0 %v1226
        %v4130 = vpop.f32.mrb[0].mxu0
        %v4131 = vadd.f32 %v4091, %v4130
        %v4132 = vpop.f32.mrb[0].mxu0
        %v4133 = vpop.f32.mrb[0].mxu0
        %v4134 = vpop.f32.mrb[0].mxu0
        %4135 = vdwg.mxu0
        %4136 = vmatprep.subr.bf16.mxu0 0
        %4137 = vmatpush1.bf16.msra.mxu0 %v3184
        %4138 = vmatprep.subr.bf16.mxu0 0
        %4139 = vmatpush1.bf16.msra.mxu0 %v3185
        %4140 = vmatprep.subr.bf16.mxu0 0
        %4141 = vmatpush1.bf16.msra.mxu0 %v3186
        %4142 = vmatprep.subr.bf16.mxu0 0
        %4143 = vmatpush1.bf16.msra.mxu0 %v3187
        %4144 = vmatprep.subr.bf16.mxu0 0
        %4145 = vmatpush1.bf16.msra.mxu0 %v3188
        %4146 = vmatprep.subr.bf16.mxu0 0
        %4147 = vmatpush1.bf16.msra.mxu0 %v3189
        %4148 = vmatprep.subr.bf16.mxu0 0
        %4149 = vmatpush1.bf16.msra.mxu0 %v3190
        %4150 = vmatprep.subr.bf16.mxu0 0
        %4151 = vmatpush1.bf16.msra.mxu0 %v3191
        %4152 = vmatprep.subr.bf16.mxu0 0
        %4153 = vmatpush1.bf16.msra.mxu0 %v3192
        %4154 = vmatprep.subr.bf16.mxu0 0
        %4155 = vmatpush1.bf16.msra.mxu0 %v3193
        %4156 = vmatprep.subr.bf16.mxu0 0
        %4157 = vmatpush1.bf16.msra.mxu0 %v3194
        %4158 = vmatprep.subr.bf16.mxu0 0
        %4159 = vmatpush1.bf16.msra.mxu0 %v3195
        %4160 = vmatprep.subr.bf16.mxu0 0
        %4161 = vmatpush1.bf16.msra.mxu0 %v3196
        %4162 = vmatprep.subr.bf16.mxu0 0
        %4163 = vmatpush1.bf16.msra.mxu0 %v3197
        %4164 = vmatprep.subr.bf16.mxu0 0
        %4165 = vmatpush1.bf16.msra.mxu0 %v3198
        %4166 = vmatprep.subr.bf16.mxu0 0
        %4167 = vmatpush1.bf16.msra.mxu0 %v3199
        %4168 = vmatprep.mubr.bf16.mxu0 %v1244
        %4169 = vmatmul.mubr.bf16.gmra.mrb[0].mxu0 %v1242
        %v4170 = vpop.f32.mrb[0].mxu0
        %v4171 = vadd.f32 %v4131, %v4170
        %v4172 = vpop.f32.mrb[0].mxu0
        %v4173 = vpop.f32.mrb[0].mxu0
        %v4174 = vpop.f32.mrb[0].mxu0
        %4175 = vdwg.mxu0
        %4176 = vmatprep.subr.bf16.mxu0 0
        %4177 = vmatpush1.bf16.msra.mxu0 %v3200
        %4178 = vmatprep.subr.bf16.mxu0 0
        %4179 = vmatpush1.bf16.msra.mxu0 %v3201
        %4180 = vmatprep.subr.bf16.mxu0 0
        %4181 = vmatpush1.bf16.msra.mxu0 %v3202
        %4182 = vmatprep.subr.bf16.mxu0 0
        %4183 = vmatpush1.bf16.msra.mxu0 %v3203
        %4184 = vmatprep.subr.bf16.mxu0 0
        %4185 = vmatpush1.bf16.msra.mxu0 %v3204
        %4186 = vmatprep.subr.bf16.mxu0 0
        %4187 = vmatpush1.bf16.msra.mxu0 %v3205
        %4188 = vmatprep.subr.bf16.mxu0 0
        %4189 = vmatpush1.bf16.msra.mxu0 %v3206
        %4190 = vmatprep.subr.bf16.mxu0 0
        %4191 = vmatpush1.bf16.msra.mxu0 %v3207
        %4192 = vmatprep.subr.bf16.mxu0 0
        %4193 = vmatpush1.bf16.msra.mxu0 %v3208
        %4194 = vmatprep.subr.bf16.mxu0 0
        %4195 = vmatpush1.bf16.msra.mxu0 %v3209
        %4196 = vmatprep.subr.bf16.mxu0 0
        %4197 = vmatpush1.bf16.msra.mxu0 %v3210
        %4198 = vmatprep.subr.bf16.mxu0 0
        %4199 = vmatpush1.bf16.msra.mxu0 %v3211
        %4200 = vmatprep.subr.bf16.mxu0 0
        %4201 = vmatpush1.bf16.msra.mxu0 %v3212
        %4202 = vmatprep.subr.bf16.mxu0 0
        %4203 = vmatpush1.bf16.msra.mxu0 %v3213
        %4204 = vmatprep.subr.bf16.mxu0 0
        %4205 = vmatpush1.bf16.msra.mxu0 %v3214
        %4206 = vmatprep.subr.bf16.mxu0 0
        %4207 = vmatpush1.bf16.msra.mxu0 %v3215
        %4208 = vmatprep.mubr.bf16.mxu0 %v1282
        %4209 = vmatmul.mubr.bf16.gmra.mrb[0].mxu0 %v1268
        %v4210 = vpop.f32.mrb[0].mxu0
        %v4211 = vadd.f32 %v4171, %v4210
        %v4212 = vpop.f32.mrb[0].mxu0
        %v4213 = vpop.f32.mrb[0].mxu0
        %v4214 = vpop.f32.mrb[0].mxu0
        %4215 = vdwg.mxu0
        %4216 = vmatprep.subr.bf16.mxu0 0
        %4217 = vmatpush1.bf16.msra.mxu0 %v3216
        %4218 = vmatprep.subr.bf16.mxu0 0
        %4219 = vmatpush1.bf16.msra.mxu0 %v3217
        %4220 = vmatprep.subr.bf16.mxu0 0
        %4221 = vmatpush1.bf16.msra.mxu0 %v3218
        %4222 = vmatprep.subr.bf16.mxu0 0
        %4223 = vmatpush1.bf16.msra.mxu0 %v3219
        %4224 = vmatprep.subr.bf16.mxu0 0
        %4225 = vmatpush1.bf16.msra.mxu0 %v3220
        %4226 = vmatprep.subr.bf16.mxu0 0
        %4227 = vmatpush1.bf16.msra.mxu0 %v3221
        %4228 = vmatprep.subr.bf16.mxu0 0
        %4229 = vmatpush1.bf16.msra.mxu0 %v3222
        %4230 = vmatprep.subr.bf16.mxu0 0
        %4231 = vmatpush1.bf16.msra.mxu0 %v3223
        %4232 = vmatprep.subr.bf16.mxu0 0
        %4233 = vmatpush1.bf16.msra.mxu0 %v3224
        %4234 = vmatprep.subr.bf16.mxu0 0
        %4235 = vmatpush1.bf16.msra.mxu0 %v3225
        %4236 = vmatprep.subr.bf16.mxu0 0
        %4237 = vmatpush1.bf16.msra.mxu0 %v3226
        %4238 = vmatprep.subr.bf16.mxu0 0
        %4239 = vmatpush1.bf16.msra.mxu0 %v3227
        %4240 = vmatprep.subr.bf16.mxu0 0
        %4241 = vmatpush1.bf16.msra.mxu0 %v3228
        %4242 = vmatprep.subr.bf16.mxu0 0
        %4243 = vmatpush1.bf16.msra.mxu0 %v3229
        %4244 = vmatprep.subr.bf16.mxu0 0
        %4245 = vmatpush1.bf16.msra.mxu0 %v3230
        %4246 = vmatprep.subr.bf16.mxu0 0
        %4247 = vmatpush1.bf16.msra.mxu0 %v3231
        %4248 = vmatprep.mubr.bf16.mxu0 %v1292
        %4249 = vmatmul.mubr.bf16.gmra.mrb[0].mxu0 %v1290
        %v4250 = vpop.f32.mrb[0].mxu0
        %v4251 = vadd.f32 %v4211, %v4250
        %v4252 = vpop.f32.mrb[0].mxu0
        %v4253 = vpop.f32.mrb[0].mxu0
        %v4254 = vpop.f32.mrb[0].mxu0
        %4255 = vdwg.mxu0
        %4256 = vmatprep.subr.bf16.mxu0 0
        %4257 = vmatpush1.bf16.msra.mxu0 %v3232
        %4258 = vmatprep.subr.bf16.mxu0 0
        %4259 = vmatpush1.bf16.msra.mxu0 %v3233
        %4260 = vmatprep.subr.bf16.mxu0 0
        %4261 = vmatpush1.bf16.msra.mxu0 %v3234
        %4262 = vmatprep.subr.bf16.mxu0 0
        %4263 = vmatpush1.bf16.msra.mxu0 %v3235
        %4264 = vmatprep.subr.bf16.mxu0 0
        %4265 = vmatpush1.bf16.msra.mxu0 %v3236
        %4266 = vmatprep.subr.bf16.mxu0 0
        %4267 = vmatpush1.bf16.msra.mxu0 %v3237
        %4268 = vmatprep.subr.bf16.mxu0 0
        %4269 = vmatpush1.bf16.msra.mxu0 %v3238
        %4270 = vmatprep.subr.bf16.mxu0 0
        %4271 = vmatpush1.bf16.msra.mxu0 %v3239
        %4272 = vmatprep.subr.bf16.mxu0 0
        %4273 = vmatpush1.bf16.msra.mxu0 %v3240
        %4274 = vmatprep.subr.bf16.mxu0 0
        %4275 = vmatpush1.bf16.msra.mxu0 %v3241
        %4276 = vmatprep.subr.bf16.mxu0 0
        %4277 = vmatpush1.bf16.msra.mxu0 %v3242
        %4278 = vmatprep.subr.bf16.mxu0 0
        %4279 = vmatpush1.bf16.msra.mxu0 %v3243
        %4280 = vmatprep.subr.bf16.mxu0 0
        %4281 = vmatpush1.bf16.msra.mxu0 %v3244
        %4282 = vmatprep.subr.bf16.mxu0 0
        %4283 = vmatpush1.bf16.msra.mxu0 %v3245
        %4284 = vmatprep.subr.bf16.mxu0 0
        %4285 = vmatpush1.bf16.msra.mxu0 %v3246
        %4286 = vmatprep.subr.bf16.mxu0 0
        %4287 = vmatpush1.bf16.msra.mxu0 %v3247
        %4288 = vmatprep.mubr.bf16.mxu0 %v1289
        %4289 = vmatmul.mubr.bf16.gmra.mrb[0].mxu0 %v1275
        %v4290 = vpop.f32.mrb[0].mxu0
        %v4291 = vadd.f32 %v4251, %v4290
        %v4292 = vpop.f32.mrb[0].mxu0
        %v4293 = vpop.f32.mrb[0].mxu0
        %v4294 = vpop.f32.mrb[0].mxu0
        %4295 = vdwg.mxu0
        %4296 = vmatprep.subr.bf16.mxu0 0
        %4297 = vmatpush1.bf16.msra.mxu0 %v3248
        %4298 = vmatprep.subr.bf16.mxu0 0
        %4299 = vmatpush1.bf16.msra.mxu0 %v3249
        %4300 = vmatprep.subr.bf16.mxu0 0
        %4301 = vmatpush1.bf16.msra.mxu0 %v3250
        %4302 = vmatprep.subr.bf16.mxu0 0
        %4303 = vmatpush1.bf16.msra.mxu0 %v3251
        %4304 = vmatprep.subr.bf16.mxu0 0
        %4305 = vmatpush1.bf16.msra.mxu0 %v3252
        %4306 = vmatprep.subr.bf16.mxu0 0
        %4307 = vmatpush1.bf16.msra.mxu0 %v3253
        %4308 = vmatprep.subr.bf16.mxu0 0
        %4309 = vmatpush1.bf16.msra.mxu0 %v3254
        %4310 = vmatprep.subr.bf16.mxu0 0
        %4311 = vmatpush1.bf16.msra.mxu0 %v3255
        %4312 = vmatprep.subr.bf16.mxu0 0
        %4313 = vmatpush1.bf16.msra.mxu0 %v3256
        %4314 = vmatprep.subr.bf16.mxu0 0
        %4315 = vmatpush1.bf16.msra.mxu0 %v3257
        %4316 = vmatprep.subr.bf16.mxu0 0
        %4317 = vmatpush1.bf16.msra.mxu0 %v3258
        %4318 = vmatprep.subr.bf16.mxu0 0
        %4319 = vmatpush1.bf16.msra.mxu0 %v3259
        %4320 = vmatprep.subr.bf16.mxu0 0
        %4321 = vmatpush1.bf16.msra.mxu0 %v3260
        %4322 = vmatprep.subr.bf16.mxu0 0
        %4323 = vmatpush1.bf16.msra.mxu0 %v3261
        %4324 = vmatprep.subr.bf16.mxu0 0
        %4325 = vmatpush1.bf16.msra.mxu0 %v3262
        %4326 = vmatprep.subr.bf16.mxu0 0
        %4327 = vmatpush1.bf16.msra.mxu0 %v3263
        %4328 = vmatprep.mubr.bf16.mxu0 %v1293
        %4329 = vmatmul.mubr.bf16.gmra.mrb[0].mxu0 %v1291
        %v4330 = vpop.f32.mrb[0].mxu0
        %v4331 = vadd.f32 %v4291, %v4330
        %v4332 = vpop.f32.mrb[0].mxu0
        %v4333 = vpop.f32.mrb[0].mxu0
        %v4334 = vpop.f32.mrb[0].mxu0
        %4335 = vdwg.mxu0
        %4336 = vmatprep.subr.bf16.mxu0 0
        %4337 = vmatpush1.bf16.msra.mxu0 %v3264
        %4338 = vmatprep.subr.bf16.mxu0 0
        %4339 = vmatpush1.bf16.msra.mxu0 %v3265
        %4340 = vmatprep.subr.bf16.mxu0 0
        %4341 = vmatpush1.bf16.msra.mxu0 %v3266
        %4342 = vmatprep.subr.bf16.mxu0 0
        %4343 = vmatpush1.bf16.msra.mxu0 %v3267
        %4344 = vmatprep.subr.bf16.mxu0 0
        %4345 = vmatpush1.bf16.msra.mxu0 %v3268
        %4346 = vmatprep.subr.bf16.mxu0 0
        %4347 = vmatpush1.bf16.msra.mxu0 %v3269
        %4348 = vmatprep.subr.bf16.mxu0 0
        %4349 = vmatpush1.bf16.msra.mxu0 %v3270
        %4350 = vmatprep.subr.bf16.mxu0 0
        %4351 = vmatpush1.bf16.msra.mxu0 %v3271
        %4352 = vmatprep.subr.bf16.mxu0 0
        %4353 = vmatpush1.bf16.msra.mxu0 %v3272
        %4354 = vmatprep.subr.bf16.mxu0 0
        %4355 = vmatpush1.bf16.msra.mxu0 %v3273
        %4356 = vmatprep.subr.bf16.mxu0 0
        %4357 = vmatpush1.bf16.msra.mxu0 %v3274
        %4358 = vmatprep.subr.bf16.mxu0 0
        %4359 = vmatpush1.bf16.msra.mxu0 %v3275
        %4360 = vmatprep.subr.bf16.mxu0 0
        %4361 = vmatpush1.bf16.msra.mxu0 %v3276
        %4362 = vmatprep.subr.bf16.mxu0 0
        %4363 = vmatpush1.bf16.msra.mxu0 %v3277
        %4364 = vmatprep.subr.bf16.mxu0 0
        %4365 = vmatpush1.bf16.msra.mxu0 %v3278
        %4366 = vmatprep.subr.bf16.mxu0 0
        %4367 = vmatpush1.bf16.msra.mxu0 %v3279
        %4368 = vmatprep.mubr.bf16.mxu0 %v1331
        %4369 = vmatmul.mubr.bf16.gmra.mrb[0].mxu0 %v1317
        %v4370 = vpop.f32.mrb[0].mxu0
        %v4371 = vadd.f32 %v4331, %v4370
        %v4372 = vpop.f32.mrb[0].mxu0
        %v4373 = vpop.f32.mrb[0].mxu0
        %v4374 = vpop.f32.mrb[0].mxu0
        %4375 = vdwg.mxu0
        %4376 = vmatprep.subr.bf16.mxu0 0
        %4377 = vmatpush1.bf16.msra.mxu0 %v3280
        %4378 = vmatprep.subr.bf16.mxu0 0
        %4379 = vmatpush1.bf16.msra.mxu0 %v3281
        %4380 = vmatprep.subr.bf16.mxu0 0
        %4381 = vmatpush1.bf16.msra.mxu0 %v3282
        %4382 = vmatprep.subr.bf16.mxu0 0
        %4383 = vmatpush1.bf16.msra.mxu0 %v3283
        %4384 = vmatprep.subr.bf16.mxu0 0
        %4385 = vmatpush1.bf16.msra.mxu0 %v3284
        %4386 = vmatprep.subr.bf16.mxu0 0
        %4387 = vmatpush1.bf16.msra.mxu0 %v3285
        %4388 = vmatprep.subr.bf16.mxu0 0
        %4389 = vmatpush1.bf16.msra.mxu0 %v3286
        %4390 = vmatprep.subr.bf16.mxu0 0
        %4391 = vmatpush1.bf16.msra.mxu0 %v3287
        %4392 = vmatprep.subr.bf16.mxu0 0
        %4393 = vmatpush1.bf16.msra.mxu0 %v3288
        %4394 = vmatprep.subr.bf16.mxu0 0
        %4395 = vmatpush1.bf16.msra.mxu0 %v3289
        %4396 = vmatprep.subr.bf16.mxu0 0
        %4397 = vmatpush1.bf16.msra.mxu0 %v3290
        %4398 = vmatprep.subr.bf16.mxu0 0
        %4399 = vmatpush1.bf16.msra.mxu0 %v3291
        %4400 = vmatprep.subr.bf16.mxu0 0
        %4401 = vmatpush1.bf16.msra.mxu0 %v3292
        %4402 = vmatprep.subr.bf16.mxu0 0
        %4403 = vmatpush1.bf16.msra.mxu0 %v3293
        %4404 = vmatprep.subr.bf16.mxu0 0
        %4405 = vmatpush1.bf16.msra.mxu0 %v3294
        %4406 = vmatprep.subr.bf16.mxu0 0
        %4407 = vmatpush1.bf16.msra.mxu0 %v3295
        %4408 = vmatprep.mubr.bf16.mxu0 %v1341
        %4409 = vmatmul.mubr.bf16.gmra.mrb[0].mxu0 %v1339
        %v4410 = vpop.f32.mrb[0].mxu0
        %v4411 = vadd.f32 %v4371, %v4410
        %v4412 = vpop.f32.mrb[0].mxu0
        %v4413 = vpop.f32.mrb[0].mxu0
        %v4414 = vpop.f32.mrb[0].mxu0
        %4415 = vdwg.mxu0
        %4416 = vmatprep.subr.bf16.mxu0 0
        %4417 = vmatpush1.bf16.msra.mxu0 %v3296
        %4418 = vmatprep.subr.bf16.mxu0 0
        %4419 = vmatpush1.bf16.msra.mxu0 %v3297
        %4420 = vmatprep.subr.bf16.mxu0 0
        %4421 = vmatpush1.bf16.msra.mxu0 %v3298
        %4422 = vmatprep.subr.bf16.mxu0 0
        %4423 = vmatpush1.bf16.msra.mxu0 %v3299
        %4424 = vmatprep.subr.bf16.mxu0 0
        %4425 = vmatpush1.bf16.msra.mxu0 %v3300
        %4426 = vmatprep.subr.bf16.mxu0 0
        %4427 = vmatpush1.bf16.msra.mxu0 %v3301
        %4428 = vmatprep.subr.bf16.mxu0 0
        %4429 = vmatpush1.bf16.msra.mxu0 %v3302
        %4430 = vmatprep.subr.bf16.mxu0 0
        %4431 = vmatpush1.bf16.msra.mxu0 %v3303
        %4432 = vmatprep.subr.bf16.mxu0 0
        %4433 = vmatpush1.bf16.msra.mxu0 %v3304
        %4434 = vmatprep.subr.bf16.mxu0 0
        %4435 = vmatpush1.bf16.msra.mxu0 %v3305
        %4436 = vmatprep.subr.bf16.mxu0 0
        %4437 = vmatpush1.bf16.msra.mxu0 %v3306
        %4438 = vmatprep.subr.bf16.mxu0 0
        %4439 = vmatpush1.bf16.msra.mxu0 %v3307
        %4440 = vmatprep.subr.bf16.mxu0 0
        %4441 = vmatpush1.bf16.msra.mxu0 %v3308
        %4442 = vmatprep.subr.bf16.mxu0 0
        %4443 = vmatpush1.bf16.msra.mxu0 %v3309
        %4444 = vmatprep.subr.bf16.mxu0 0
        %4445 = vmatpush1.bf16.msra.mxu0 %v3310
        %4446 = vmatprep.subr.bf16.mxu0 0
        %4447 = vmatpush1.bf16.msra.mxu0 %v3311
        %4448 = vmatprep.mubr.bf16.mxu0 %v1338
        %4449 = vmatmul.mubr.bf16.gmra.mrb[0].mxu0 %v1324
        %v4450 = vpop.f32.mrb[0].mxu0
        %v4451 = vadd.f32 %v4411, %v4450
        %v4452 = vpop.f32.mrb[0].mxu0
        %v4453 = vpop.f32.mrb[0].mxu0
        %v4454 = vpop.f32.mrb[0].mxu0
        %4455 = vdwg.mxu0
        %4456 = vmatprep.subr.bf16.mxu0 0
        %4457 = vmatpush1.bf16.msra.mxu0 %v3312
        %4458 = vmatprep.subr.bf16.mxu0 0
        %4459 = vmatpush1.bf16.msra.mxu0 %v3313
        %4460 = vmatprep.subr.bf16.mxu0 0
        %4461 = vmatpush1.bf16.msra.mxu0 %v3314
        %4462 = vmatprep.subr.bf16.mxu0 0
        %4463 = vmatpush1.bf16.msra.mxu0 %v3315
        %4464 = vmatprep.subr.bf16.mxu0 0
        %4465 = vmatpush1.bf16.msra.mxu0 %v3316
        %4466 = vmatprep.subr.bf16.mxu0 0
        %4467 = vmatpush1.bf16.msra.mxu0 %v3317
        %4468 = vmatprep.subr.bf16.mxu0 0
        %4469 = vmatpush1.bf16.msra.mxu0 %v3318
        %4470 = vmatprep.subr.bf16.mxu0 0
        %4471 = vmatpush1.bf16.msra.mxu0 %v3319
        %4472 = vmatprep.subr.bf16.mxu0 0
        %4473 = vmatpush1.bf16.msra.mxu0 %v3320
        %4474 = vmatprep.subr.bf16.mxu0 0
        %4475 = vmatpush1.bf16.msra.mxu0 %v3321
        %4476 = vmatprep.subr.bf16.mxu0 0
        %4477 = vmatpush1.bf16.msra.mxu0 %v3322
        %4478 = vmatprep.subr.bf16.mxu0 0
        %4479 = vmatpush1.bf16.msra.mxu0 %v3323
        %4480 = vmatprep.subr.bf16.mxu0 0
        %4481 = vmatpush1.bf16.msra.mxu0 %v3324
        %4482 = vmatprep.subr.bf16.mxu0 0
        %4483 = vmatpush1.bf16.msra.mxu0 %v3325
        %4484 = vmatprep.subr.bf16.mxu0 0
        %4485 = vmatpush1.bf16.msra.mxu0 %v3326
        %4486 = vmatprep.subr.bf16.mxu0 0
        %4487 = vmatpush1.bf16.msra.mxu0 %v3327
        %4488 = vmatprep.mubr.bf16.mxu0 %v1342
        %4489 = vmatmul.mubr.bf16.gmra.mrb[0].mxu0 %v1340
        %v4490 = vpop.f32.mrb[0].mxu0
        %v4491 = vadd.f32 %v4451, %v4490
        %v4492 = vpop.f32.mrb[0].mxu0
        %v4493 = vpop.f32.mrb[0].mxu0
        %v4494 = vpop.f32.mrb[0].mxu0
        %4495 = vdwg.mxu0
        %4496 = vmatprep.subr.bf16.mxu0 0
        %4497 = vmatpush1.bf16.msra.mxu0 %v3328
        %4498 = vmatprep.subr.bf16.mxu0 0
        %4499 = vmatpush1.bf16.msra.mxu0 %v3329
        %4500 = vmatprep.subr.bf16.mxu0 0
        %4501 = vmatpush1.bf16.msra.mxu0 %v3330
        %4502 = vmatprep.subr.bf16.mxu0 0
        %4503 = vmatpush1.bf16.msra.mxu0 %v3331
        %4504 = vmatprep.subr.bf16.mxu0 0
        %4505 = vmatpush1.bf16.msra.mxu0 %v3332
        %4506 = vmatprep.subr.bf16.mxu0 0
        %4507 = vmatpush1.bf16.msra.mxu0 %v3333
        %4508 = vmatprep.subr.bf16.mxu0 0
        %4509 = vmatpush1.bf16.msra.mxu0 %v3334
        %4510 = vmatprep.subr.bf16.mxu0 0
        %4511 = vmatpush1.bf16.msra.mxu0 %v3335
        %4512 = vmatprep.subr.bf16.mxu0 0
        %4513 = vmatpush1.bf16.msra.mxu0 %v3336
        %4514 = vmatprep.subr.bf16.mxu0 0
        %4515 = vmatpush1.bf16.msra.mxu0 %v3337
        %4516 = vmatprep.subr.bf16.mxu0 0
        %4517 = vmatpush1.bf16.msra.mxu0 %v3338
        %4518 = vmatprep.subr.bf16.mxu0 0
        %4519 = vmatpush1.bf16.msra.mxu0 %v3339
        %4520 = vmatprep.subr.bf16.mxu0 0
        %4521 = vmatpush1.bf16.msra.mxu0 %v3340
        %4522 = vmatprep.subr.bf16.mxu0 0
        %4523 = vmatpush1.bf16.msra.mxu0 %v3341
        %4524 = vmatprep.subr.bf16.mxu0 0
        %4525 = vmatpush1.bf16.msra.mxu0 %v3342
        %4526 = vmatprep.subr.bf16.mxu0 0
        %4527 = vmatpush1.bf16.msra.mxu0 %v3343
        %4528 = vmatprep.mubr.bf16.mxu0 %v1380
        %4529 = vmatmul.mubr.bf16.gmra.mrb[0].mxu0 %v1366
        %v4530 = vpop.f32.mrb[0].mxu0
        %v4531 = vadd.f32 %v4491, %v4530
        %v4532 = vpop.f32.mrb[0].mxu0
        %v4533 = vpop.f32.mrb[0].mxu0
        %v4534 = vpop.f32.mrb[0].mxu0
        %4535 = vdwg.mxu0
        %4536 = vmatprep.subr.bf16.mxu0 0
        %4537 = vmatpush1.bf16.msra.mxu0 %v3344
        %4538 = vmatprep.subr.bf16.mxu0 0
        %4539 = vmatpush1.bf16.msra.mxu0 %v3345
        %4540 = vmatprep.subr.bf16.mxu0 0
        %4541 = vmatpush1.bf16.msra.mxu0 %v3346
        %4542 = vmatprep.subr.bf16.mxu0 0
        %4543 = vmatpush1.bf16.msra.mxu0 %v3347
        %4544 = vmatprep.subr.bf16.mxu0 0
        %4545 = vmatpush1.bf16.msra.mxu0 %v3348
        %4546 = vmatprep.subr.bf16.mxu0 0
        %4547 = vmatpush1.bf16.msra.mxu0 %v3349
        %4548 = vmatprep.subr.bf16.mxu0 0
        %4549 = vmatpush1.bf16.msra.mxu0 %v3350
        %4550 = vmatprep.subr.bf16.mxu0 0
        %4551 = vmatpush1.bf16.msra.mxu0 %v3351
        %4552 = vmatprep.subr.bf16.mxu0 0
        %4553 = vmatpush1.bf16.msra.mxu0 %v3352
        %4554 = vmatprep.subr.bf16.mxu0 0
        %4555 = vmatpush1.bf16.msra.mxu0 %v3353
        %4556 = vmatprep.subr.bf16.mxu0 0
        %4557 = vmatpush1.bf16.msra.mxu0 %v3354
        %4558 = vmatprep.subr.bf16.mxu0 0
        %4559 = vmatpush1.bf16.msra.mxu0 %v3355
        %4560 = vmatprep.subr.bf16.mxu0 0
        %4561 = vmatpush1.bf16.msra.mxu0 %v3356
        %4562 = vmatprep.subr.bf16.mxu0 0
        %4563 = vmatpush1.bf16.msra.mxu0 %v3357
        %4564 = vmatprep.subr.bf16.mxu0 0
        %4565 = vmatpush1.bf16.msra.mxu0 %v3358
        %4566 = vmatprep.subr.bf16.mxu0 0
        %4567 = vmatpush1.bf16.msra.mxu0 %v3359
        %4568 = vmatprep.mubr.bf16.mxu0 %v1390
        %4569 = vmatmul.mubr.bf16.gmra.mrb[0].mxu0 %v1388
        %v4570 = vpop.f32.mrb[0].mxu0
        %v4571 = vadd.f32 %v4531, %v4570
        %v4572 = vpop.f32.mrb[0].mxu0
        %v4573 = vpop.f32.mrb[0].mxu0
        %v4574 = vpop.f32.mrb[0].mxu0
        %4575 = vdwg.mxu0
        %4576 = vmatprep.subr.bf16.mxu0 0
        %4577 = vmatpush1.bf16.msra.mxu0 %v3360
        %4578 = vmatprep.subr.bf16.mxu0 0
        %4579 = vmatpush1.bf16.msra.mxu0 %v3361
        %4580 = vmatprep.subr.bf16.mxu0 0
        %4581 = vmatpush1.bf16.msra.mxu0 %v3362
        %4582 = vmatprep.subr.bf16.mxu0 0
        %4583 = vmatpush1.bf16.msra.mxu0 %v3363
        %4584 = vmatprep.subr.bf16.mxu0 0
        %4585 = vmatpush1.bf16.msra.mxu0 %v3364
        %4586 = vmatprep.subr.bf16.mxu0 0
        %4587 = vmatpush1.bf16.msra.mxu0 %v3365
        %4588 = vmatprep.subr.bf16.mxu0 0
        %4589 = vmatpush1.bf16.msra.mxu0 %v3366
        %4590 = vmatprep.subr.bf16.mxu0 0
        %4591 = vmatpush1.bf16.msra.mxu0 %v3367
        %4592 = vmatprep.subr.bf16.mxu0 0
        %4593 = vmatpush1.bf16.msra.mxu0 %v3368
        %4594 = vmatprep.subr.bf16.mxu0 0
        %4595 = vmatpush1.bf16.msra.mxu0 %v3369
        %4596 = vmatprep.subr.bf16.mxu0 0
        %4597 = vmatpush1.bf16.msra.mxu0 %v3370
        %4598 = vmatprep.subr.bf16.mxu0 0
        %4599 = vmatpush1.bf16.msra.mxu0 %v3371
        %4600 = vmatprep.subr.bf16.mxu0 0
        %4601 = vmatpush1.bf16.msra.mxu0 %v3372
        %4602 = vmatprep.subr.bf16.mxu0 0
        %4603 = vmatpush1.bf16.msra.mxu0 %v3373
        %4604 = vmatprep.subr.bf16.mxu0 0
        %4605 = vmatpush1.bf16.msra.mxu0 %v3374
        %4606 = vmatprep.subr.bf16.mxu0 0
        %4607 = vmatpush1.bf16.msra.mxu0 %v3375
        %4608 = vmatprep.mubr.bf16.mxu0 %v1387
        %4609 = vmatmul.mubr.bf16.gmra.mrb[0].mxu0 %v1373
        %v4610 = vpop.f32.mrb[0].mxu0
        %v4611 = vadd.f32 %v4571, %v4610
        %v4612 = vpop.f32.mrb[0].mxu0
        %v4613 = vpop.f32.mrb[0].mxu0
        %v4614 = vpop.f32.mrb[0].mxu0
        %4615 = vdwg.mxu0
        %4616 = vmatprep.subr.bf16.mxu0 0
        %4617 = vmatpush1.bf16.msra.mxu0 %v3376
        %4618 = vmatprep.subr.bf16.mxu0 0
        %4619 = vmatpush1.bf16.msra.mxu0 %v3377
        %4620 = vmatprep.subr.bf16.mxu0 0
        %4621 = vmatpush1.bf16.msra.mxu0 %v3378
        %4622 = vmatprep.subr.bf16.mxu0 0
        %4623 = vmatpush1.bf16.msra.mxu0 %v3379
        %4624 = vmatprep.subr.bf16.mxu0 0
        %4625 = vmatpush1.bf16.msra.mxu0 %v3380
        %4626 = vmatprep.subr.bf16.mxu0 0
        %4627 = vmatpush1.bf16.msra.mxu0 %v3381
        %4628 = vmatprep.subr.bf16.mxu0 0
        %4629 = vmatpush1.bf16.msra.mxu0 %v3382
        %4630 = vmatprep.subr.bf16.mxu0 0
        %4631 = vmatpush1.bf16.msra.mxu0 %v3383
        %4632 = vmatprep.subr.bf16.mxu0 0
        %4633 = vmatpush1.bf16.msra.mxu0 %v3384
        %4634 = vmatprep.subr.bf16.mxu0 0
        %4635 = vmatpush1.bf16.msra.mxu0 %v3385
        %4636 = vmatprep.subr.bf16.mxu0 0
        %4637 = vmatpush1.bf16.msra.mxu0 %v3386
        %4638 = vmatprep.subr.bf16.mxu0 0
        %4639 = vmatpush1.bf16.msra.mxu0 %v3387
        %4640 = vmatprep.subr.bf16.mxu0 0
        %4641 = vmatpush1.bf16.msra.mxu0 %v3388
        %4642 = vmatprep.subr.bf16.mxu0 0
        %4643 = vmatpush1.bf16.msra.mxu0 %v3389
        %4644 = vmatprep.subr.bf16.mxu0 0
        %4645 = vmatpush1.bf16.msra.mxu0 %v3390
        %4646 = vmatprep.subr.bf16.mxu0 0
        %4647 = vmatpush1.bf16.msra.mxu0 %v3391
        %4648 = vmatprep.mubr.bf16.mxu0 %v1391
        %4649 = vmatmul.mubr.bf16.gmra.mrb[0].mxu0 %v1389
        %v4650 = vpop.f32.mrb[0].mxu0
        %v4651 = vadd.f32 %v4611, %v4650
        %v4652 = vpop.f32.mrb[0].mxu0
        %v4653 = vpop.f32.mrb[0].mxu0
        %v4654 = vpop.f32.mrb[0].mxu0
        %4655 = vdwg.mxu0
        %4656 = vmatprep.subr.bf16.mxu0 0
        %4657 = vmatpush1.bf16.msra.mxu0 %v3392
        %4658 = vmatprep.subr.bf16.mxu0 0
        %4659 = vmatpush1.bf16.msra.mxu0 %v3393
        %4660 = vmatprep.subr.bf16.mxu0 0
        %4661 = vmatpush1.bf16.msra.mxu0 %v3394
        %4662 = vmatprep.subr.bf16.mxu0 0
        %4663 = vmatpush1.bf16.msra.mxu0 %v3395
        %4664 = vmatprep.subr.bf16.mxu0 0
        %4665 = vmatpush1.bf16.msra.mxu0 %v3396
        %4666 = vmatprep.subr.bf16.mxu0 0
        %4667 = vmatpush1.bf16.msra.mxu0 %v3397
        %4668 = vmatprep.subr.bf16.mxu0 0
        %4669 = vmatpush1.bf16.msra.mxu0 %v3398
        %4670 = vmatprep.subr.bf16.mxu0 0
        %4671 = vmatpush1.bf16.msra.mxu0 %v3399
        %4672 = vmatprep.subr.bf16.mxu0 0
        %4673 = vmatpush1.bf16.msra.mxu0 %v3400
        %4674 = vmatprep.subr.bf16.mxu0 0
        %4675 = vmatpush1.bf16.msra.mxu0 %v3401
        %4676 = vmatprep.subr.bf16.mxu0 0
        %4677 = vmatpush1.bf16.msra.mxu0 %v3402
        %4678 = vmatprep.subr.bf16.mxu0 0
        %4679 = vmatpush1.bf16.msra.mxu0 %v3403
        %4680 = vmatprep.subr.bf16.mxu0 0
        %4681 = vmatpush1.bf16.msra.mxu0 %v3404
        %4682 = vmatprep.subr.bf16.mxu0 0
        %4683 = vmatpush1.bf16.msra.mxu0 %v3405
        %4684 = vmatprep.subr.bf16.mxu0 0
        %4685 = vmatpush1.bf16.msra.mxu0 %v3406
        %4686 = vmatprep.subr.bf16.mxu0 0
        %4687 = vmatpush1.bf16.msra.mxu0 %v3407
        %4688 = vmatprep.mubr.bf16.mxu0 %v1429
        %4689 = vmatmul.mubr.bf16.gmra.mrb[0].mxu0 %v1415
        %v4690 = vpop.f32.mrb[0].mxu0
        %v4691 = vadd.f32 %v4651, %v4690
        %v4692 = vpop.f32.mrb[0].mxu0
        %v4693 = vpop.f32.mrb[0].mxu0
        %v4694 = vpop.f32.mrb[0].mxu0
        %4695 = vdwg.mxu0
        %4696 = vmatprep.subr.bf16.mxu0 0
        %4697 = vmatpush1.bf16.msra.mxu0 %v3408
        %4698 = vmatprep.subr.bf16.mxu0 0
        %4699 = vmatpush1.bf16.msra.mxu0 %v3409
        %4700 = vmatprep.subr.bf16.mxu0 0
        %4701 = vmatpush1.bf16.msra.mxu0 %v3410
        %4702 = vmatprep.subr.bf16.mxu0 0
        %4703 = vmatpush1.bf16.msra.mxu0 %v3411
        %4704 = vmatprep.subr.bf16.mxu0 0
        %4705 = vmatpush1.bf16.msra.mxu0 %v3412
        %4706 = vmatprep.subr.bf16.mxu0 0
        %4707 = vmatpush1.bf16.msra.mxu0 %v3413
        %4708 = vmatprep.subr.bf16.mxu0 0
        %4709 = vmatpush1.bf16.msra.mxu0 %v3414
        %4710 = vmatprep.subr.bf16.mxu0 0
        %4711 = vmatpush1.bf16.msra.mxu0 %v3415
        %4712 = vmatprep.subr.bf16.mxu0 0
        %4713 = vmatpush1.bf16.msra.mxu0 %v3416
        %4714 = vmatprep.subr.bf16.mxu0 0
        %4715 = vmatpush1.bf16.msra.mxu0 %v3417
        %4716 = vmatprep.subr.bf16.mxu0 0
        %4717 = vmatpush1.bf16.msra.mxu0 %v3418
        %4718 = vmatprep.subr.bf16.mxu0 0
        %4719 = vmatpush1.bf16.msra.mxu0 %v3419
        %4720 = vmatprep.subr.bf16.mxu0 0
        %4721 = vmatpush1.bf16.msra.mxu0 %v3420
        %4722 = vmatprep.subr.bf16.mxu0 0
        %4723 = vmatpush1.bf16.msra.mxu0 %v3421
        %4724 = vmatprep.subr.bf16.mxu0 0
        %4725 = vmatpush1.bf16.msra.mxu0 %v3422
        %4726 = vmatprep.subr.bf16.mxu0 0
        %4727 = vmatpush1.bf16.msra.mxu0 %v3423
        %4728 = vmatprep.mubr.bf16.mxu0 %v1439
        %4729 = vmatmul.mubr.bf16.gmra.mrb[0].mxu0 %v1437
        %v4730 = vpop.f32.mrb[0].mxu0
        %v4731 = vadd.f32 %v4691, %v4730
        %v4732 = vpop.f32.mrb[0].mxu0
        %v4733 = vpop.f32.mrb[0].mxu0
        %v4734 = vpop.f32.mrb[0].mxu0
        %4735 = vdwg.mxu0
        %4736 = vmatprep.subr.bf16.mxu0 0
        %4737 = vmatpush1.bf16.msra.mxu0 %v3424
        %4738 = vmatprep.subr.bf16.mxu0 0
        %4739 = vmatpush1.bf16.msra.mxu0 %v3425
        %4740 = vmatprep.subr.bf16.mxu0 0
        %4741 = vmatpush1.bf16.msra.mxu0 %v3426
        %4742 = vmatprep.subr.bf16.mxu0 0
        %4743 = vmatpush1.bf16.msra.mxu0 %v3427
        %4744 = vmatprep.subr.bf16.mxu0 0
        %4745 = vmatpush1.bf16.msra.mxu0 %v3428
        %4746 = vmatprep.subr.bf16.mxu0 0
        %4747 = vmatpush1.bf16.msra.mxu0 %v3429
        %4748 = vmatprep.subr.bf16.mxu0 0
        %4749 = vmatpush1.bf16.msra.mxu0 %v3430
        %4750 = vmatprep.subr.bf16.mxu0 0
        %4751 = vmatpush1.bf16.msra.mxu0 %v3431
        %4752 = vmatprep.subr.bf16.mxu0 0
        %4753 = vmatpush1.bf16.msra.mxu0 %v3432
        %4754 = vmatprep.subr.bf16.mxu0 0
        %4755 = vmatpush1.bf16.msra.mxu0 %v3433
        %4756 = vmatprep.subr.bf16.mxu0 0
        %4757 = vmatpush1.bf16.msra.mxu0 %v3434
        %4758 = vmatprep.subr.bf16.mxu0 0
        %4759 = vmatpush1.bf16.msra.mxu0 %v3435
        %4760 = vmatprep.subr.bf16.mxu0 0
        %4761 = vmatpush1.bf16.msra.mxu0 %v3436
        %4762 = vmatprep.subr.bf16.mxu0 0
        %4763 = vmatpush1.bf16.msra.mxu0 %v3437
        %4764 = vmatprep.subr.bf16.mxu0 0
        %4765 = vmatpush1.bf16.msra.mxu0 %v3438
        %4766 = vmatprep.subr.bf16.mxu0 0
        %4767 = vmatpush1.bf16.msra.mxu0 %v3439
        %4768 = vmatprep.mubr.bf16.mxu0 %v1436
        %4769 = vmatmul.mubr.bf16.gmra.mrb[0].mxu0 %v1422
        %v4770 = vpop.f32.mrb[0].mxu0
        %v4771 = vadd.f32 %v4731, %v4770
        %v4772 = vpop.f32.mrb[0].mxu0
        %v4773 = vpop.f32.mrb[0].mxu0
        %v4774 = vpop.f32.mrb[0].mxu0
        %4775 = vdwg.mxu0
        %4776 = vmatprep.subr.bf16.mxu0 0
        %4777 = vmatpush1.bf16.msra.mxu0 %v3440
        %4778 = vmatprep.subr.bf16.mxu0 0
        %4779 = vmatpush1.bf16.msra.mxu0 %v3441
        %4780 = vmatprep.subr.bf16.mxu0 0
        %4781 = vmatpush1.bf16.msra.mxu0 %v3442
        %4782 = vmatprep.subr.bf16.mxu0 0
        %4783 = vmatpush1.bf16.msra.mxu0 %v3443
        %4784 = vmatprep.subr.bf16.mxu0 0
        %4785 = vmatpush1.bf16.msra.mxu0 %v3444
        %4786 = vmatprep.subr.bf16.mxu0 0
        %4787 = vmatpush1.bf16.msra.mxu0 %v3445
        %4788 = vmatprep.subr.bf16.mxu0 0
        %4789 = vmatpush1.bf16.msra.mxu0 %v3446
        %4790 = vmatprep.subr.bf16.mxu0 0
        %4791 = vmatpush1.bf16.msra.mxu0 %v3447
        %4792 = vmatprep.subr.bf16.mxu0 0
        %4793 = vmatpush1.bf16.msra.mxu0 %v3448
        %4794 = vmatprep.subr.bf16.mxu0 0
        %4795 = vmatpush1.bf16.msra.mxu0 %v3449
        %4796 = vmatprep.subr.bf16.mxu0 0
        %4797 = vmatpush1.bf16.msra.mxu0 %v3450
        %4798 = vmatprep.subr.bf16.mxu0 0
        %4799 = vmatpush1.bf16.msra.mxu0 %v3451
        %4800 = vmatprep.subr.bf16.mxu0 0
        %4801 = vmatpush1.bf16.msra.mxu0 %v3452
        %4802 = vmatprep.subr.bf16.mxu0 0
        %4803 = vmatpush1.bf16.msra.mxu0 %v3453
        %4804 = vmatprep.subr.bf16.mxu0 0
        %4805 = vmatpush1.bf16.msra.mxu0 %v3454
        %4806 = vmatprep.subr.bf16.mxu0 0
        %4807 = vmatpush1.bf16.msra.mxu0 %v3455
        %4808 = vmatprep.mubr.bf16.mxu0 %v1440
        %4809 = vmatmul.mubr.bf16.gmra.mrb[0].mxu0 %v1438
        %v4810 = vpop.f32.mrb[0].mxu0
        %v4811 = vadd.f32 %v4771, %v4810
        %v4812 = vpop.f32.mrb[0].mxu0
        %v4813 = vpop.f32.mrb[0].mxu0
        %v4814 = vpop.f32.mrb[0].mxu0
        %4815 = vdwg.mxu0
        %4816 = vmatprep.subr.bf16.mxu0 0
        %4817 = vmatpush1.bf16.msra.mxu0 %v3456
        %4818 = vmatprep.subr.bf16.mxu0 0
        %4819 = vmatpush1.bf16.msra.mxu0 %v3457
        %4820 = vmatprep.subr.bf16.mxu0 0
        %4821 = vmatpush1.bf16.msra.mxu0 %v3458
        %4822 = vmatprep.subr.bf16.mxu0 0
        %4823 = vmatpush1.bf16.msra.mxu0 %v3459
        %4824 = vmatprep.subr.bf16.mxu0 0
        %4825 = vmatpush1.bf16.msra.mxu0 %v3460
        %4826 = vmatprep.subr.bf16.mxu0 0
        %4827 = vmatpush1.bf16.msra.mxu0 %v3461
        %4828 = vmatprep.subr.bf16.mxu0 0
        %4829 = vmatpush1.bf16.msra.mxu0 %v3462
        %4830 = vmatprep.subr.bf16.mxu0 0
        %4831 = vmatpush1.bf16.msra.mxu0 %v3463
        %4832 = vmatprep.subr.bf16.mxu0 0
        %4833 = vmatpush1.bf16.msra.mxu0 0
        %4834 = vmatprep.subr.bf16.mxu0 0
        %4835 = vmatpush1.bf16.msra.mxu0 0
        %4836 = vmatprep.subr.bf16.mxu0 0
        %4837 = vmatpush1.bf16.msra.mxu0 0
        %4838 = vmatprep.subr.bf16.mxu0 0
        %4839 = vmatpush1.bf16.msra.mxu0 0
        %4840 = vmatprep.subr.bf16.mxu0 0
        %4841 = vmatpush1.bf16.msra.mxu0 0
        %4842 = vmatprep.subr.bf16.mxu0 0
        %4843 = vmatpush1.bf16.msra.mxu0 0
        %4844 = vmatprep.subr.bf16.mxu0 0
        %4845 = vmatpush1.bf16.msra.mxu0 0
        %4846 = vmatprep.subr.bf16.mxu0 0
        %4847 = vmatpush1.bf16.msra.mxu0 0
        %4848 = vmatprep.mubr.bf16.mxu0 0
        %4849 = vmatmul.mubr.bf16.gmra.mrb[0].mxu0 %v1454
        %v4850 = vpop.f32.mrb[0].mxu0
        %v4851 = vadd.f32 %v4811, %v4850
        %v4852 = vpop.f32.mrb[0].mxu0
        %v4853 = vpop.f32.mrb[0].mxu0
        %v4854 = vpop.f32.mrb[0].mxu0
        %4855 = vdwg.mxu0
        %v4856 = vadd.f32 %v355, %v4851
        %4857 = vst [vmem:[%s338] sm:$0x3] %v4856
        %p4858 = scmp.eq.s32.totalorder %s32, 1
        // Predicated region
        $region57: #{tpu_custom_call.1} parent=35 // pred_check
          %p4859 = pneg %p4858
        $region58: #{tpu_custom_call.1} parent=35 // pred_check_branch
          %4861 = sbr.rel (%p4859) target = $region60
        $region59: #{tpu_custom_call.1} parent=35 // pred_region
          %v4862 = vld [vmem:[%s338] sm:$0x3]
          %v4863 = vld [vmem:[%s300] sm:$0x1]
          %v4865 = vlaneseq
          %v4866 = vshrl.u32 %v4865, 7
          %v4867 = vsub.s32 0, %v4866
          %v4868 = vrot.slane %v4863, %v4867
          %v4870 = vadd.f32 %v4862, %v4868
          %4871 = vst [vmem:[%s338] sm:$0x3] %v4870
        $region60: #{tpu_custom_call.1} parent=35 // pred_fallthru
          _
        %s4872 = sand.u32 %s153, 1
        %s4873 = scalar_lea.sflag [#allocation4], %s4872
        %s4874 = sand.u32 %s153, 1
        %s4875 = smul.addr %s4874, 2
        %s4876 = scalar_lea.vmem [#allocation10], %s4875
        // Predicated region
        $region61: #{tpu_custom_call.1} parent=35 // pred_check
          %p4877 = pneg %p163
        $region62: #{tpu_custom_call.1} parent=35 // pred_check_branch
          %4879 = sbr.rel (%p4877) target = $region64
        $region63: #{tpu_custom_call.1} parent=35 // pred_region
          %s4881 = ssub.s32 32, 32
          %4882 = vsyncadd %s4873, %s4881
          %s4883 = smul.addr %s31, 32
          %s4884 = scalar_lea.hbm %s4, %s4883
          %s4886 = sshll.u32 %s4876, 4
          %s4887 = int_to_ptr.vmem [resolvable:$true] %s4886
          %4889 = dma.vmem_to_hbm [thread:$0]  %s4887, 32, %s4884, %s4873
        $region64: #{tpu_custom_call.1} parent=35 // pred_fallthru
          _
      $region36: #{tpu_custom_call.1} parent=5 // pred_fallthru
        _
      %p4890 = scmp.le.s32.totalorder 2, %s22
      // Predicated region
      $region65: #{tpu_custom_call.1} parent=5 // pred_check
        %p4891 = pneg %p4890
      $region66: #{tpu_custom_call.1} parent=5 // pred_check_branch
        %4893 = sbr.rel (%p4891) target = $region68
      $region67: #{tpu_custom_call.1} parent=5 // pred_region
        %s4894 = ssub.s32 %s22, 2
        // Predicated region
        $region69: #{tpu_custom_call.1} parent=67 // pred_check
          %p4895 = pneg %p169
        $region70: #{tpu_custom_call.1} parent=67 // pred_check_branch
          %4897 = sbr.rel (%p4895) target = $region72
        $region71: #{tpu_custom_call.1} parent=67 // pred_region
          %s4898 = sand.u32 %s154, 1
          %s4899 = scalar_lea.sflag [#allocation4], %s4898
          %s4900 = sand.u32 %s154, 1
          %s4901 = smul.addr %s4900, 2
          %s4902 = scalar_lea.vmem [#allocation10], %s4901
          %4903 = dma.done %s4899, 32
        $region72: #{tpu_custom_call.1} parent=67 // pred_fallthru
          _
      $region68: #{tpu_custom_call.1} parent=5 // pred_fallthru
        _
    $region6: #{tpu_custom_call.1} parent=1 // loop_footer
      %s26 = sadd.s32 1, %s22
    $region7: #{tpu_custom_call.1} parent=1 // loop_footer_branch
      %21 = sbr.rel target = $region3
    $region8: #{tpu_custom_call.1} parent=1 // loop_exit
      _
    %4904 = vsyncpa [#allocation3], 1
    %s4905 = scalar_lea.sflag [#allocation3], 1
    %4906 = vsyncpa %s4905, 1
    %4907 = vsyncpa [#allocation6], 1
    %s4908 = scalar_lea.sflag [#allocation6], 1
    %4909 = vsyncpa %s4908, 1
    %4910 = vsyncpa [#allocation9], 1
    %s4911 = scalar_lea.sflag [#allocation9], 1
    %4912 = vsyncpa %s4911, 1
    %4913 = vsyncpa [#allocation4], 1
    %s4914 = scalar_lea.sflag [#allocation4], 1
    %4915 = vsyncpa %s4914, 1

</llo_original>
